<compile_context>
chip_gen: v6e
topology: v6e:2x2x1
jax: 0.10.0
libtpu: 0.0.40
codegen_flags: <defaults>
</compile_context>

<pallas_src>
import functools

import jax
import jax.numpy as jnp
from jax import lax
from jax.experimental import pallas as pl
from jax.experimental.pallas import tpu as pltpu

EPS = 1e-5
LANE = 128
VMEM_LIMIT = 32 * 1024 * 1024  # safe on v5e/v6e (128 MiB) and v7x (64 MiB)


def _rup(x, m):
    return ((x + m - 1) // m) * m


def _compiler_params(sem):
    return pltpu.CompilerParams(dimension_semantics=sem,
                                vmem_limit_bytes=VMEM_LIMIT)


# ----------------------------- Pallas kernels -------------------------------

def _conv1_s1_kernel(H, W, cdt,
                     xw_ref, w_ref, s_in_ref, b_in_ref, s_out_ref, b_out_ref,
                     o_ref, acc_ref):
    """relu(bn2(conv3x3_s1(relu(bn1(x))))) for one image / out-channel tile.

    grid = (N, J, 3); axis 2 (kernel-row tap) is the reduction axis.
    xw_ref: (H+2, W+2, Cin_p) padded raw input rows, w_ref: (3, Cin_p, TN)."""
    t = pl.program_id(2)

    @pl.when(t == 0)
    def _init():
        acc_ref[...] = jnp.zeros_like(acc_ref)

    # Rows of the padded input needed by kernel-row tap `t`.
    row = xw_ref[pl.ds(t, H), :, :]                         # (H, W+2, Cin_p)
    # Fused BN1 (eval affine) + ReLU prologue (f32 math).
    row = jnp.maximum(row * s_in_ref[...] + b_in_ref[...], 0.0)

    cin_p = row.shape[-1]
    ii = lax.broadcasted_iota(jnp.int32, (H, W, cin_p), 0) + t
    acc = acc_ref[...]
    for dw in range(3):                                     # static tap columns
        a = row[:, dw:dw + W, :]                            # (H, W, Cin_p)
        jj = lax.broadcasted_iota(jnp.int32, (H, W, cin_p), 1) + dw
        # conv1 zero-pads AFTER bn1+relu, so re-zero the spatial-pad positions.
        valid = (ii >= 1) & (ii <= H) & (jj >= 1) & (jj <= W)
        a = jnp.where(valid, a, 0.0).reshape(H * W, cin_p).astype(cdt)
        acc = acc + jnp.dot(a, w_ref[dw], preferred_element_type=jnp.float32)
    acc_ref[...] = acc

    @pl.when(t == 2)
    def _finalize():
        # Fused BN2 + ReLU epilogue -> act2 tile.
        y = acc_ref[...] * s_out_ref[...] + b_out_ref[...]
        o_ref[...] = jnp.maximum(y, 0.0).astype(o_ref.dtype)


def _conv1_s2_kernel(H, W, Ho, Wo, cdt,
                     p00_ref, p01_ref, p10_ref, p11_ref, w_ref,
                     s_in_ref, b_in_ref, s_out_ref, b_out_ref, o_ref):
    """Stride-2 variant of the fused conv1 using even/odd spatial phases.

    grid = (N, J).  Each phase ref: (Ho+1, Wo+1, Cin_p); w_ref: (3,3,Cin_p,TN)."""
    phases = ((p00_ref, p01_ref), (p10_ref, p11_ref))
    cin_p = p00_ref.shape[-1]
    tn = w_ref.shape[-1]
    ii = lax.broadcasted_iota(jnp.int32, (Ho, Wo, cin_p), 0)
    jj = lax.broadcasted_iota(jnp.int32, (Ho, Wo, cin_p), 1)
    acc = jnp.zeros((Ho * Wo, tn), jnp.float32)
    for dh in range(3):
        for dw in range(3):
            ph = phases[dh % 2][dw % 2]
            a = ph[dh // 2:dh // 2 + Ho, dw // 2:dw // 2 + Wo, :]
            a = jnp.maximum(a * s_in_ref[...] + b_in_ref[...], 0.0)
            valid = ((2 * ii + dh >= 1) & (2 * ii + dh <= H) &
                     (2 * jj + dw >= 1) & (2 * jj + dw <= W))
            a = jnp.where(valid, a, 0.0).reshape(Ho * Wo, cin_p).astype(cdt)
            acc = acc + jnp.dot(a, w_ref[dh, dw],
                                preferred_element_type=jnp.float32)
    y = acc * s_out_ref[...] + b_out_ref[...]
    o_ref[...] = jnp.maximum(y, 0.0).astype(o_ref.dtype)


def _conv2_kernel(H, W, cdt, shortcut, *refs):
    """out = conv3x3_s1(act2) + residual, residual fused in the epilogue.

    grid = (N, J, 3); axis 2 is the kernel-row reduction axis."""
    if shortcut:
        xw_ref, w_ref, res_ref, rs_ref, rb_ref, ws_ref, o_ref, acc_ref = refs
    else:
        xw_ref, w_ref, res_ref, o_ref, acc_ref = refs
    t = pl.program_id(2)

    @pl.when(t == 0)
    def _init():
        acc_ref[...] = jnp.zeros_like(acc_ref)

    row = xw_ref[pl.ds(t, H), :, :]                 # (H, W+2, Cc) act2 rows
    cc = row.shape[-1]
    acc = acc_ref[...]
    for dw in range(3):
        a = row[:, dw:dw + W, :].reshape(H * W, cc).astype(cdt)
        acc = acc + jnp.dot(a, w_ref[dw], preferred_element_type=jnp.float32)
    acc_ref[...] = acc

    @pl.when(t == 2)
    def _finalize():
        if shortcut:
            # Fused 1x1 downsample shortcut: relu(bn1(x_strided)) @ ws.
            r = jnp.maximum(res_ref[...] * rs_ref[...] + rb_ref[...], 0.0)
            res = jnp.dot(r.astype(cdt), ws_ref[...],
                          preferred_element_type=jnp.float32)
        else:
            res = res_ref[...]                      # identity shortcut (raw x)
        o_ref[...] = (acc_ref[...] + res).astype(o_ref.dtype)


# --------------------------- pallas_call wrappers ----------------------------

def conv3x3_s1_bn_act(x_nhwc, w4, s_in, b_in, s_out, b_out, cdt):
    """Fused relu(bn2(conv3x3_s1(relu(bn1(x))))).  Returns (N*H*W, Cout_p) f32."""
    N, H, W, cin_p = x_nhwc.shape
    cout_p = w4.shape[-1]
    TN = LANE
    J = cout_p // TN
    xw = jnp.pad(x_nhwc, ((0, 0), (1, 1), (1, 1), (0, 0)))
    M = N * H * W
    kernel = functools.partial(_conv1_s1_kernel, H, W, cdt)
    flops = 2 * M * 9 * cin_p * cout_p
    bytes_acc = int(4 * (xw.size + M * cout_p) + w4.size * w4.dtype.itemsize)
    return pl.pallas_call(
        kernel,
        out_shape=jax.ShapeDtypeStruct((M, cout_p), jnp.float32),
        grid_spec=pltpu.PrefetchScalarGridSpec(
            num_scalar_prefetch=0,
            grid=(N, J, 3),
            in_specs=[
                pl.BlockSpec((None, H + 2, W + 2, cin_p),
                             lambda n, j, t: (n, 0, 0, 0)),
                pl.BlockSpec((None, 3, cin_p, TN), lambda n, j, t: (t, 0, 0, j)),
                pl.BlockSpec((1, cin_p), lambda n, j, t: (0, 0)),
                pl.BlockSpec((1, cin_p), lambda n, j, t: (0, 0)),
                pl.BlockSpec((1, TN), lambda n, j, t: (0, j)),
                pl.BlockSpec((1, TN), lambda n, j, t: (0, j)),
            ],
            out_specs=pl.BlockSpec((H * W, TN), lambda n, j, t: (n, j)),
            scratch_shapes=[pltpu.VMEM((H * W, TN), jnp.float32)],
        ),
        compiler_params=_compiler_params(("parallel", "parallel", "arbitrary")),
        cost_estimate=pl.CostEstimate(flops=flops, transcendentals=0,
                                      bytes_accessed=bytes_acc),
    )(xw, w4, s_in, b_in, s_out, b_out)


def conv3x3_s2_bn_act(x_nhwc, w4, s_in, b_in, s_out, b_out, cdt):
    """Stride-2 fused conv1 via space-to-phase split (no im2col)."""
    N, H, W, cin_p = x_nhwc.shape
    assert H % 2 == 0 and W % 2 == 0
    Ho, Wo = H // 2, W // 2
    cout_p = w4.shape[-1]
    TN = LANE
    J = cout_p // TN
    xp = jnp.pad(x_nhwc, ((0, 0), (1, 1), (1, 1), (0, 0)))
    # Even/odd row/column phases: one cheap reorganizing pass, no duplication.
    p00 = xp[:, 0::2, 0::2, :]
    p01 = xp[:, 0::2, 1::2, :]
    p10 = xp[:, 1::2, 0::2, :]
    p11 = xp[:, 1::2, 1::2, :]
    M = N * Ho * Wo
    kernel = functools.partial(_conv1_s2_kernel, H, W, Ho, Wo, cdt)
    phase_spec = pl.BlockSpec((None, Ho + 1, Wo + 1, cin_p),
                              lambda n, j: (n, 0, 0, 0))
    flops = 2 * M * 9 * cin_p * cout_p
    bytes_acc = int(4 * (xp.size + M * cout_p) + w4.size * w4.dtype.itemsize)
    return pl.pallas_call(
        kernel,
        out_shape=jax.ShapeDtypeStruct((M, cout_p), jnp.float32),
        grid_spec=pltpu.PrefetchScalarGridSpec(
            num_scalar_prefetch=0,
            grid=(N, J),
            in_specs=[
                phase_spec, phase_spec, phase_spec, phase_spec,
                pl.BlockSpec((3, 3, cin_p, TN), lambda n, j: (0, 0, 0, j)),
                pl.BlockSpec((1, cin_p), lambda n, j: (0, 0)),
                pl.BlockSpec((1, cin_p), lambda n, j: (0, 0)),
                pl.BlockSpec((1, TN), lambda n, j: (0, j)),
                pl.BlockSpec((1, TN), lambda n, j: (0, j)),
            ],
            out_specs=pl.BlockSpec((Ho * Wo, TN), lambda n, j: (n, j)),
        ),
        compiler_params=_compiler_params(("parallel", "parallel")),
        cost_estimate=pl.CostEstimate(flops=flops, transcendentals=0,
                                      bytes_accessed=bytes_acc),
    )(p00, p01, p10, p11, w4, s_in, b_in, s_out, b_out)


def conv3x3_s1_add_residual(act2_nhwc, w4, res_src, cdt,
                            shortcut=False, rs=None, rb=None, ws=None):
    """out = conv3x3_s1(act2) + residual (identity or fused 1x1 shortcut)."""
    N, H, W, cc = act2_nhwc.shape
    cout_p = w4.shape[-1]
    TN = LANE
    J = cout_p // TN
    xw = jnp.pad(act2_nhwc, ((0, 0), (1, 1), (1, 1), (0, 0)))
    M = N * H * W
    kernel = functools.partial(_conv2_kernel, H, W, cdt, shortcut)

    in_specs = [
        pl.BlockSpec((None, H + 2, W + 2, cc), lambda n, j, t: (n, 0, 0, 0)),
        pl.BlockSpec((None, 3, cc, TN), lambda n, j, t: (t, 0, 0, j)),
    ]
    args = [xw, w4]
    flops = 2 * M * 9 * cc * cout_p
    if shortcut:
        cin_p = res_src.shape[-1]
        in_specs += [
            pl.BlockSpec((H * W, cin_p), lambda n, j, t: (n, 0)),
            pl.BlockSpec((1, cin_p), lambda n, j, t: (0, 0)),
            pl.BlockSpec((1, cin_p), lambda n, j, t: (0, 0)),
            pl.BlockSpec((cin_p, TN), lambda n, j, t: (0, j)),
        ]
        args += [res_src, rs, rb, ws]
        flops += 2 * M * cin_p * cout_p
    else:
        in_specs.append(pl.BlockSpec((H * W, TN), lambda n, j, t: (n, j)))
        args.append(res_src)

    bytes_acc = int(4 * (xw.size + res_src.size + M * cout_p)
                    + w4.size * w4.dtype.itemsize)
    return pl.pallas_call(
        kernel,
        out_shape=jax.ShapeDtypeStruct((M, cout_p), jnp.float32),
        grid_spec=pltpu.PrefetchScalarGridSpec(
            num_scalar_prefetch=0,
            grid=(N, J, 3),
            in_specs=in_specs,
            out_specs=pl.BlockSpec((H * W, TN), lambda n, j, t: (n, j)),
            scratch_shapes=[pltpu.VMEM((H * W, TN), jnp.float32)],
        ),
        compiler_params=_compiler_params(("parallel", "parallel", "arbitrary")),
        cost_estimate=pl.CostEstimate(flops=flops, transcendentals=0,
                                      bytes_accessed=bytes_acc),
    )(*args)


# ------------------------------ JAX glue -------------------------------------

def _fold_bn(g, b, m, v, cp):
    scale = g / jnp.sqrt(v + EPS)
    shift = b - m * scale
    scale = jnp.pad(scale, (0, cp - scale.shape[0]))
    shift = jnp.pad(shift, (0, cp - shift.shape[0]))
    return scale.reshape(1, cp), shift.reshape(1, cp)


def _w3x3(w_oihw, cin_p, cout_p, dt):
    """(Cout, Cin, 3, 3) -> channel-padded (3, 3, Cin_p, Cout_p)."""
    cout, cin = w_oihw.shape[0], w_oihw.shape[1]
    w = jnp.transpose(w_oihw, (2, 3, 1, 0))
    w = jnp.pad(w, ((0, 0), (0, 0), (0, cin_p - cin), (0, cout_p - cout)))
    return w.astype(dt)


def basic_block_forward(x_nchw, p, in_planes, out_planes, stride,
                        drop_rate=0.0, compute_dtype=jnp.float32):
    """Pallas implementation of BasicBlock.forward (BatchNorm in eval mode)."""
    equal = in_planes == out_planes
    if equal:
        assert stride == 1, "identity shortcut requires stride == 1"
    assert stride in (1, 2)
    assert drop_rate == 0.0  # TODO(synk): drop_rate > 0 needs an in-kernel
    # dropout mask on act2 via pltpu.prng_seed / pltpu.prng_random_bits.

    cdt = compute_dtype
    N, cin, H, W = x_nchw.shape
    cin_p = _rup(cin, LANE)
    cout_p = _rup(out_planes, LANE)
    Ho, Wo = H // stride, W // stride

    # NHWC + lane-dense channel padding (entry conversion only; a full network
    # should stay NHWC/padded between blocks).
    x = jnp.transpose(x_nchw, (0, 2, 3, 1)).astype(jnp.float32)
    x = jnp.pad(x, ((0, 0), (0, 0), (0, 0), (0, cin_p - cin)))

    s1, b1 = _fold_bn(p["g1"], p["b1"], p["m1"], p["v1"], cin_p)
    s2, b2 = _fold_bn(p["g2"], p["b2"], p["m2"], p["v2"], cout_p)
    w1 = _w3x3(p["w1"], cin_p, cout_p, cdt)
    w2 = _w3x3(p["w2"], cout_p, cout_p, cdt)

    # Fused kernel 1: act2 = relu(bn2(conv1(relu(bn1(x))))).
    if stride == 1:
        act2 = conv3x3_s1_bn_act(x, w1, s1, b1, s2, b2, cdt)
    else:
        act2 = conv3x3_s2_bn_act(x, w1, s1, b1, s2, b2, cdt)
    act2 = act2.reshape(N, Ho, Wo, cout_p)

    # Fused kernel 2: out = conv2(act2) + shortcut.
    if equal:
        res_src = x.reshape(N * H * W, cin_p)
        out = conv3x3_s1_add_residual(act2, w2, res_src, cdt, shortcut=False)
    else:
        ws = jnp.transpose(p["ws"][:, :, 0, 0], (1, 0))
        ws = jnp.pad(ws, ((0, cin_p - cin), (0, cout_p - out_planes))).astype(cdt)
        res_src = x[:, 0:stride * Ho:stride, 0:stride * Wo:stride, :]
        res_src = res_src.reshape(N * Ho * Wo, cin_p)
        out = conv3x3_s1_add_residual(act2, w2, res_src, cdt, shortcut=True,
                                      rs=s1, rb=b1, ws=ws)

    # TODO(synk): for large spatial sizes, row-tile the per-image window and
    # tile Cin on the reduction axis; per-image windows assume CIFAR scale.
    out = out.reshape(N, Ho, Wo, cout_p)[:, :, :, :out_planes]
    return jnp.transpose(out, (0, 3, 1, 2))  # exit conversion back to NCHW


# ----------------------------- reference (pure JAX) ---------------------------

def reference_forward(x, p, in_planes, out_planes, stride):
    equal = in_planes == out_planes

    def bn(x, g, b, m, v):
        s = (g / jnp.sqrt(v + EPS))[None, :, None, None]
        return (x - m[None, :, None, None]) * s + b[None, :, None, None]

    def conv(x, w, s, pad):
        return jax.lax.conv_general_dilated(
            x, w, window_strides=(s, s), padding=[(pad, pad), (pad, pad)],
            dimension_numbers=("NCHW", "OIHW", "NCHW"))

    a = jnp.maximum(bn(x, p["g1"], p["b1"], p["m1"], p["v1"]), 0.0)
    residual = x if equal else conv(a, p["ws"], stride, 0)
    out = conv(a, p["w1"], stride, 1)
    out = jnp.maximum(bn(out, p["g2"], p["b2"], p["m2"], p["v2"]), 0.0)
    out = conv(out, p["w2"], 1, 1)
    return residual + out


# ----------------------------------- main -------------------------------------

def make_params(key, in_planes, out_planes, equal):
    ks = jax.random.split(key, 10)
    p = {
        "g1": 1.0 + 0.1 * jax.random.normal(ks[0], (in_planes,), jnp.float32),
        "b1": 0.1 * jax.random.normal(ks[1], (in_planes,), jnp.float32),
        "m1": 0.1 * jax.random.normal(ks[2], (in_planes,), jnp.float32),
        "v1": 0.5 + jax.random.uniform(ks[3], (in_planes,), jnp.float32),
        "g2": 1.0 + 0.1 * jax.random.normal(ks[4], (out_planes,), jnp.float32),
        "b2": 0.1 * jax.random.normal(ks[5], (out_planes,), jnp.float32),
        "m2": 0.1 * jax.random.normal(ks[6], (out_planes,), jnp.float32),
        "v2": 0.5 + jax.random.uniform(ks[7], (out_planes,), jnp.float32),
        "w1": 0.2 * jax.random.normal(ks[8], (out_planes, in_planes, 3, 3), jnp.float32),
        "w2": 0.2 * jax.random.normal(ks[9], (out_planes, out_planes, 3, 3), jnp.float32),
    }
    if not equal:
        p["ws"] = 0.2 * jax.random.normal(
            jax.random.fold_in(key, 99), (out_planes, in_planes, 1, 1), jnp.float32)
    return p


if __name__ == "__main__":
    key = jax.random.PRNGKey(0)
    kx, kp1, kp2 = jax.random.split(key, 3)

    x = jax.random.normal(kx, (2, 4, 16, 16), jnp.float32)

    # Case 1: in_planes != out_planes, stride 2 (fused 1x1-shortcut path).
    params = make_params(kp1, 4, 8, equal=False)
    y = jax.block_until_ready(basic_block_forward(x, params, 4, 8, 2))
    y_ref = reference_forward(x, params, 4, 8, 2)
    assert y.shape == (2, 8, 8, 8)
    assert jnp.allclose(y, y_ref, rtol=1e-4, atol=1e-4), "mismatch (shortcut path)"

    # Case 2: in_planes == out_planes, stride 1 (identity shortcut path).
    params2 = make_params(kp2, 4, 4, equal=True)
    y2 = jax.block_until_ready(basic_block_forward(x, params2, 4, 4, 1))
    y2_ref = reference_forward(x, params2, 4, 4, 1)
    assert y2.shape == (2, 4, 16, 16)
    assert jnp.allclose(y2, y2_ref, rtol=1e-4, atol=1e-4), "mismatch (identity path)"

    # bf16 MXU operands (f32 accumulation / f32 BN math): looser tolerance.
    yb = jax.block_until_ready(
        basic_block_forward(x, params, 4, 8, 2, compute_dtype=jnp.bfloat16))
    rel = jnp.max(jnp.abs(yb - y_ref)) / (jnp.max(jnp.abs(y_ref)) + 1e-6)
    assert rel < 5e-2, f"mismatch (bf16 path), rel={rel}"

    print("KERNEL_OK")
</pallas_src>

<mosaic_0001>
module attributes {stable_mosaic.version = 11 : i64} {
  func.func @_conv1_s2_kernel(%arg0: i32, %arg1: i32, %arg2: memref<1x9x9x128xf32, #tpu.memory_space<vmem>>, %arg3: memref<1x9x9x128xf32, #tpu.memory_space<vmem>>, %arg4: memref<1x9x9x128xf32, #tpu.memory_space<vmem>>, %arg5: memref<1x9x9x128xf32, #tpu.memory_space<vmem>>, %arg6: memref<3x3x128x128xf32, #tpu.memory_space<vmem>>, %arg7: memref<1x128xf32, #tpu.memory_space<vmem>>, %arg8: memref<1x128xf32, #tpu.memory_space<vmem>>, %arg9: memref<1x128xf32, #tpu.memory_space<vmem>>, %arg10: memref<1x128xf32, #tpu.memory_space<vmem>>, %arg11: memref<64x128xf32, #tpu.memory_space<vmem>>) attributes {dimension_semantics = [#tpu.dimension_semantics<parallel>, #tpu.dimension_semantics<parallel>], iteration_bounds = array<i64: 2, 1>, scalar_prefetch = 0 : i64, scratch_operands = 0 : i64, tpu.core_type = #tpu.core_type<tc>, window_params = [{transform_indices = @transform_0, window_bounds = array<i64: 1, 9, 9, 128>}, {transform_indices = @transform_1, window_bounds = array<i64: 1, 9, 9, 128>}, {transform_indices = @transform_2, window_bounds = array<i64: 1, 9, 9, 128>}, {transform_indices = @transform_3, window_bounds = array<i64: 1, 9, 9, 128>}, {transform_indices = @transform_4, window_bounds = array<i64: 3, 3, 128, 128>}, {pipeline_mode = #tpu.pipeline_mode<synchronous>, transform_indices = @transform_5, window_bounds = array<i64: 1, 128>}, {pipeline_mode = #tpu.pipeline_mode<synchronous>, transform_indices = @transform_6, window_bounds = array<i64: 1, 128>}, {transform_indices = @transform_7, window_bounds = array<i64: 1, 128>}, {transform_indices = @transform_8, window_bounds = array<i64: 1, 128>}, {transform_indices = @transform_9, window_bounds = array<i64: 64, 128>}]} {
    %0 = tpu.iota {dimensions = array<i32: 0>} : vector<8x8x128xi32>
    %1 = tpu.iota {dimensions = array<i32: 1>} : vector<8x8x128xi32>
    %cst = arith.constant 0.000000e+00 : f32
    %2 = vector.broadcast %cst : f32 to vector<64x128xf32>
    %c0 = arith.constant 0 : index
    %c0_0 = arith.constant 0 : index
    %c0_1 = arith.constant 0 : index
    %c0_2 = arith.constant 0 : index
    %3 = vector.load %arg2[%c0, %c0_0, %c0_1, %c0_2] : memref<1x9x9x128xf32, #tpu.memory_space<vmem>>, vector<1x8x8x128xf32>
    %4 = vector.shape_cast %3 : vector<1x8x8x128xf32> to vector<8x8x128xf32>
    %c0_3 = arith.constant 0 : index
    %c0_4 = arith.constant 0 : index
    %5 = vector.load %arg7[%c0_3, %c0_4] : memref<1x128xf32, #tpu.memory_space<vmem>>, vector<1x128xf32>
    %6 = vector.shape_cast %5 : vector<1x128xf32> to vector<1x1x128xf32>
    %7 = vector.broadcast %6 : vector<1x1x128xf32> to vector<8x8x128xf32>
    %8 = arith.mulf %4, %7 : vector<8x8x128xf32>
    %c0_5 = arith.constant 0 : index
    %c0_6 = arith.constant 0 : index
    %9 = vector.load %arg8[%c0_5, %c0_6] : memref<1x128xf32, #tpu.memory_space<vmem>>, vector<1x128xf32>
    %10 = vector.shape_cast %9 : vector<1x128xf32> to vector<1x1x128xf32>
    %11 = vector.broadcast %10 : vector<1x1x128xf32> to vector<8x8x128xf32>
    %12 = arith.addf %8, %11 : vector<8x8x128xf32>
    %cst_7 = arith.constant 0.000000e+00 : f32
    %13 = vector.broadcast %cst_7 : f32 to vector<8x8x128xf32>
    %14 = arith.maximumf %12, %13 : vector<8x8x128xf32>
    %c2_i32 = arith.constant 2 : i32
    %15 = vector.broadcast %c2_i32 : i32 to vector<8x8x128xi32>
    %16 = arith.muli %15, %0 : vector<8x8x128xi32>
    %c0_i32 = arith.constant 0 : i32
    %17 = vector.broadcast %c0_i32 : i32 to vector<8x8x128xi32>
    %18 = arith.addi %16, %17 : vector<8x8x128xi32>
    %c1_i32 = arith.constant 1 : i32
    %19 = vector.broadcast %c1_i32 : i32 to vector<8x8x128xi32>
    %20 = arith.cmpi sge, %18, %19 : vector<8x8x128xi32>
    %c2_i32_8 = arith.constant 2 : i32
    %21 = vector.broadcast %c2_i32_8 : i32 to vector<8x8x128xi32>
    %22 = arith.muli %21, %0 : vector<8x8x128xi32>
    %c0_i32_9 = arith.constant 0 : i32
    %23 = vector.broadcast %c0_i32_9 : i32 to vector<8x8x128xi32>
    %24 = arith.addi %22, %23 : vector<8x8x128xi32>
    %c16_i32 = arith.constant 16 : i32
    %25 = vector.broadcast %c16_i32 : i32 to vector<8x8x128xi32>
    %26 = arith.cmpi sle, %24, %25 : vector<8x8x128xi32>
    %27 = arith.andi %20, %26 : vector<8x8x128xi1>
    %c2_i32_10 = arith.constant 2 : i32
    %28 = vector.broadcast %c2_i32_10 : i32 to vector<8x8x128xi32>
    %29 = arith.muli %28, %1 : vector<8x8x128xi32>
    %c0_i32_11 = arith.constant 0 : i32
    %30 = vector.broadcast %c0_i32_11 : i32 to vector<8x8x128xi32>
    %31 = arith.addi %29, %30 : vector<8x8x128xi32>
    %c1_i32_12 = arith.constant 1 : i32
    %32 = vector.broadcast %c1_i32_12 : i32 to vector<8x8x128xi32>
    %33 = arith.cmpi sge, %31, %32 : vector<8x8x128xi32>
    %34 = arith.andi %27, %33 : vector<8x8x128xi1>
    %c2_i32_13 = arith.constant 2 : i32
    %35 = vector.broadcast %c2_i32_13 : i32 to vector<8x8x128xi32>
    %36 = arith.muli %35, %1 : vector<8x8x128xi32>
    %c0_i32_14 = arith.constant 0 : i32
    %37 = vector.broadcast %c0_i32_14 : i32 to vector<8x8x128xi32>
    %38 = arith.addi %36, %37 : vector<8x8x128xi32>
    %c16_i32_15 = arith.constant 16 : i32
    %39 = vector.broadcast %c16_i32_15 : i32 to vector<8x8x128xi32>
    %40 = arith.cmpi sle, %38, %39 : vector<8x8x128xi32>
    %41 = arith.andi %34, %40 : vector<8x8x128xi1>
    %cst_16 = arith.constant 0.000000e+00 : f32
    %42 = vector.broadcast %cst_16 : f32 to vector<8x8x128xf32>
    %43 = arith.select %41, %14, %42 : vector<8x8x128xi1>, vector<8x8x128xf32>
    %44 = vector.shape_cast %43 : vector<8x8x128xf32> to vector<64x128xf32>
    %c0_17 = arith.constant 0 : index
    %c0_18 = arith.constant 0 : index
    %c0_19 = arith.constant 0 : index
    %c0_20 = arith.constant 0 : index
    %45 = vector.load %arg6[%c0_17, %c0_18, %c0_19, %c0_20] : memref<3x3x128x128xf32, #tpu.memory_space<vmem>>, vector<1x1x128x128xf32>
    %46 = vector.shape_cast %45 : vector<1x1x128x128xf32> to vector<128x128xf32>
    %cst_21 = arith.constant dense<0.000000e+00> : vector<64x128xf32>
    %47 = tpu.matmul %44, %46, %cst_21 {dimension_numbers = #tpu.dot_dimension_numbers<[1], [0], [0], [1], [0, 0, 1, 1], [], []>} : vector<64x128xf32>, vector<128x128xf32>, vector<64x128xf32> -> vector<64x128xf32>
    %48 = arith.addf %2, %47 : vector<64x128xf32>
    %c0_22 = arith.constant 0 : index
    %c0_23 = arith.constant 0 : index
    %c0_24 = arith.constant 0 : index
    %c0_25 = arith.constant 0 : index
    %49 = vector.load %arg3[%c0_22, %c0_23, %c0_24, %c0_25] : memref<1x9x9x128xf32, #tpu.memory_space<vmem>>, vector<1x8x8x128xf32>
    %50 = vector.shape_cast %49 : vector<1x8x8x128xf32> to vector<8x8x128xf32>
    %c0_26 = arith.constant 0 : index
    %c0_27 = arith.constant 0 : index
    %51 = vector.load %arg7[%c0_26, %c0_27] : memref<1x128xf32, #tpu.memory_space<vmem>>, vector<1x128xf32>
    %52 = vector.shape_cast %51 : vector<1x128xf32> to vector<1x1x128xf32>
    %53 = vector.broadcast %52 : vector<1x1x128xf32> to vector<8x8x128xf32>
    %54 = arith.mulf %50, %53 : vector<8x8x128xf32>
    %c0_28 = arith.constant 0 : index
    %c0_29 = arith.constant 0 : index
    %55 = vector.load %arg8[%c0_28, %c0_29] : memref<1x128xf32, #tpu.memory_space<vmem>>, vector<1x128xf32>
    %56 = vector.shape_cast %55 : vector<1x128xf32> to vector<1x1x128xf32>
    %57 = vector.broadcast %56 : vector<1x1x128xf32> to vector<8x8x128xf32>
    %58 = arith.addf %54, %57 : vector<8x8x128xf32>
    %cst_30 = arith.constant 0.000000e+00 : f32
    %59 = vector.broadcast %cst_30 : f32 to vector<8x8x128xf32>
    %60 = arith.maximumf %58, %59 : vector<8x8x128xf32>
    %c2_i32_31 = arith.constant 2 : i32
    %61 = vector.broadcast %c2_i32_31 : i32 to vector<8x8x128xi32>
    %62 = arith.muli %61, %0 : vector<8x8x128xi32>
    %c0_i32_32 = arith.constant 0 : i32
    %63 = vector.broadcast %c0_i32_32 : i32 to vector<8x8x128xi32>
    %64 = arith.addi %62, %63 : vector<8x8x128xi32>
    %c1_i32_33 = arith.constant 1 : i32
    %65 = vector.broadcast %c1_i32_33 : i32 to vector<8x8x128xi32>
    %66 = arith.cmpi sge, %64, %65 : vector<8x8x128xi32>
    %c2_i32_34 = arith.constant 2 : i32
    %67 = vector.broadcast %c2_i32_34 : i32 to vector<8x8x128xi32>
    %68 = arith.muli %67, %0 : vector<8x8x128xi32>
    %c0_i32_35 = arith.constant 0 : i32
    %69 = vector.broadcast %c0_i32_35 : i32 to vector<8x8x128xi32>
    %70 = arith.addi %68, %69 : vector<8x8x128xi32>
    %c16_i32_36 = arith.constant 16 : i32
    %71 = vector.broadcast %c16_i32_36 : i32 to vector<8x8x128xi32>
    %72 = arith.cmpi sle, %70, %71 : vector<8x8x128xi32>
    %73 = arith.andi %66, %72 : vector<8x8x128xi1>
    %c2_i32_37 = arith.constant 2 : i32
    %74 = vector.broadcast %c2_i32_37 : i32 to vector<8x8x128xi32>
    %75 = arith.muli %74, %1 : vector<8x8x128xi32>
    %c1_i32_38 = arith.constant 1 : i32
    %76 = vector.broadcast %c1_i32_38 : i32 to vector<8x8x128xi32>
    %77 = arith.addi %75, %76 : vector<8x8x128xi32>
    %c1_i32_39 = arith.constant 1 : i32
    %78 = vector.broadcast %c1_i32_39 : i32 to vector<8x8x128xi32>
    %79 = arith.cmpi sge, %77, %78 : vector<8x8x128xi32>
    %80 = arith.andi %73, %79 : vector<8x8x128xi1>
    %c2_i32_40 = arith.constant 2 : i32
    %81 = vector.broadcast %c2_i32_40 : i32 to vector<8x8x128xi32>
    %82 = arith.muli %81, %1 : vector<8x8x128xi32>
    %c1_i32_41 = arith.constant 1 : i32
    %83 = vector.broadcast %c1_i32_41 : i32 to vector<8x8x128xi32>
    %84 = arith.addi %82, %83 : vector<8x8x128xi32>
    %c16_i32_42 = arith.constant 16 : i32
    %85 = vector.broadcast %c16_i32_42 : i32 to vector<8x8x128xi32>
    %86 = arith.cmpi sle, %84, %85 : vector<8x8x128xi32>
    %87 = arith.andi %80, %86 : vector<8x8x128xi1>
    %cst_43 = arith.constant 0.000000e+00 : f32
    %88 = vector.broadcast %cst_43 : f32 to vector<8x8x128xf32>
    %89 = arith.select %87, %60, %88 : vector<8x8x128xi1>, vector<8x8x128xf32>
    %90 = vector.shape_cast %89 : vector<8x8x128xf32> to vector<64x128xf32>
    %c0_44 = arith.constant 0 : index
    %c1 = arith.constant 1 : index
    %c0_45 = arith.constant 0 : index
    %c0_46 = arith.constant 0 : index
    %91 = vector.load %arg6[%c0_44, %c1, %c0_45, %c0_46] : memref<3x3x128x128xf32, #tpu.memory_space<vmem>>, vector<1x1x128x128xf32>
    %92 = vector.shape_cast %91 : vector<1x1x128x128xf32> to vector<128x128xf32>
    %cst_47 = arith.constant dense<0.000000e+00> : vector<64x128xf32>
    %93 = tpu.matmul %90, %92, %cst_47 {dimension_numbers = #tpu.dot_dimension_numbers<[1], [0], [0], [1], [0, 0, 1, 1], [], []>} : vector<64x128xf32>, vector<128x128xf32>, vector<64x128xf32> -> vector<64x128xf32>
    %94 = arith.addf %48, %93 : vector<64x128xf32>
    %c0_48 = arith.constant 0 : index
    %c0_49 = arith.constant 0 : index
    %c1_50 = arith.constant 1 : index
    %c0_51 = arith.constant 0 : index
    %95 = vector.load %arg2[%c0_48, %c0_49, %c1_50, %c0_51] : memref<1x9x9x128xf32, #tpu.memory_space<vmem>>, vector<1x8x8x128xf32>
    %96 = vector.shape_cast %95 : vector<1x8x8x128xf32> to vector<8x8x128xf32>
    %c0_52 = arith.constant 0 : index
    %c0_53 = arith.constant 0 : index
    %97 = vector.load %arg7[%c0_52, %c0_53] : memref<1x128xf32, #tpu.memory_space<vmem>>, vector<1x128xf32>
    %98 = vector.shape_cast %97 : vector<1x128xf32> to vector<1x1x128xf32>
    %99 = vector.broadcast %98 : vector<1x1x128xf32> to vector<8x8x128xf32>
    %100 = arith.mulf %96, %99 : vector<8x8x128xf32>
    %c0_54 = arith.constant 0 : index
    %c0_55 = arith.constant 0 : index
    %101 = vector.load %arg8[%c0_54, %c0_55] : memref<1x128xf32, #tpu.memory_space<vmem>>, vector<1x128xf32>
    %102 = vector.shape_cast %101 : vector<1x128xf32> to vector<1x1x128xf32>
    %103 = vector.broadcast %102 : vector<1x1x128xf32> to vector<8x8x128xf32>
    %104 = arith.addf %100, %103 : vector<8x8x128xf32>
    %cst_56 = arith.constant 0.000000e+00 : f32
    %105 = vector.broadcast %cst_56 : f32 to vector<8x8x128xf32>
    %106 = arith.maximumf %104, %105 : vector<8x8x128xf32>
    %c2_i32_57 = arith.constant 2 : i32
    %107 = vector.broadcast %c2_i32_57 : i32 to vector<8x8x128xi32>
    %108 = arith.muli %107, %0 : vector<8x8x128xi32>
    %c0_i32_58 = arith.constant 0 : i32
    %109 = vector.broadcast %c0_i32_58 : i32 to vector<8x8x128xi32>
    %110 = arith.addi %108, %109 : vector<8x8x128xi32>
    %c1_i32_59 = arith.constant 1 : i32
    %111 = vector.broadcast %c1_i32_59 : i32 to vector<8x8x128xi32>
    %112 = arith.cmpi sge, %110, %111 : vector<8x8x128xi32>
    %c2_i32_60 = arith.constant 2 : i32
    %113 = vector.broadcast %c2_i32_60 : i32 to vector<8x8x128xi32>
    %114 = arith.muli %113, %0 : vector<8x8x128xi32>
    %c0_i32_61 = arith.constant 0 : i32
    %115 = vector.broadcast %c0_i32_61 : i32 to vector<8x8x128xi32>
    %116 = arith.addi %114, %115 : vector<8x8x128xi32>
    %c16_i32_62 = arith.constant 16 : i32
    %117 = vector.broadcast %c16_i32_62 : i32 to vector<8x8x128xi32>
    %118 = arith.cmpi sle, %116, %117 : vector<8x8x128xi32>
    %119 = arith.andi %112, %118 : vector<8x8x128xi1>
    %c2_i32_63 = arith.constant 2 : i32
    %120 = vector.broadcast %c2_i32_63 : i32 to vector<8x8x128xi32>
    %121 = arith.muli %120, %1 : vector<8x8x128xi32>
    %c2_i32_64 = arith.constant 2 : i32
    %122 = vector.broadcast %c2_i32_64 : i32 to vector<8x8x128xi32>
    %123 = arith.addi %121, %122 : vector<8x8x128xi32>
    %c1_i32_65 = arith.constant 1 : i32
    %124 = vector.broadcast %c1_i32_65 : i32 to vector<8x8x128xi32>
    %125 = arith.cmpi sge, %123, %124 : vector<8x8x128xi32>
    %126 = arith.andi %119, %125 : vector<8x8x128xi1>
    %c2_i32_66 = arith.constant 2 : i32
    %127 = vector.broadcast %c2_i32_66 : i32 to vector<8x8x128xi32>
    %128 = arith.muli %127, %1 : vector<8x8x128xi32>
    %c2_i32_67 = arith.constant 2 : i32
    %129 = vector.broadcast %c2_i32_67 : i32 to vector<8x8x128xi32>
    %130 = arith.addi %128, %129 : vector<8x8x128xi32>
    %c16_i32_68 = arith.constant 16 : i32
    %131 = vector.broadcast %c16_i32_68 : i32 to vector<8x8x128xi32>
    %132 = arith.cmpi sle, %130, %131 : vector<8x8x128xi32>
    %133 = arith.andi %126, %132 : vector<8x8x128xi1>
    %cst_69 = arith.constant 0.000000e+00 : f32
    %134 = vector.broadcast %cst_69 : f32 to vector<8x8x128xf32>
    %135 = arith.select %133, %106, %134 : vector<8x8x128xi1>, vector<8x8x128xf32>
    %136 = vector.shape_cast %135 : vector<8x8x128xf32> to vector<64x128xf32>
    %c0_70 = arith.constant 0 : index
    %c2 = arith.constant 2 : index
    %c0_71 = arith.constant 0 : index
    %c0_72 = arith.constant 0 : index
    %137 = vector.load %arg6[%c0_70, %c2, %c0_71, %c0_72] : memref<3x3x128x128xf32, #tpu.memory_space<vmem>>, vector<1x1x128x128xf32>
    %138 = vector.shape_cast %137 : vector<1x1x128x128xf32> to vector<128x128xf32>
    %cst_73 = arith.constant dense<0.000000e+00> : vector<64x128xf32>
    %139 = tpu.matmul %136, %138, %cst_73 {dimension_numbers = #tpu.dot_dimension_numbers<[1], [0], [0], [1], [0, 0, 1, 1], [], []>} : vector<64x128xf32>, vector<128x128xf32>, vector<64x128xf32> -> vector<64x128xf32>
    %140 = arith.addf %94, %139 : vector<64x128xf32>
    %c0_74 = arith.constant 0 : index
    %c0_75 = arith.constant 0 : index
    %c0_76 = arith.constant 0 : index
    %c0_77 = arith.constant 0 : index
    %141 = vector.load %arg4[%c0_74, %c0_75, %c0_76, %c0_77] : memref<1x9x9x128xf32, #tpu.memory_space<vmem>>, vector<1x8x8x128xf32>
    %142 = vector.shape_cast %141 : vector<1x8x8x128xf32> to vector<8x8x128xf32>
    %c0_78 = arith.constant 0 : index
    %c0_79 = arith.constant 0 : index
    %143 = vector.load %arg7[%c0_78, %c0_79] : memref<1x128xf32, #tpu.memory_space<vmem>>, vector<1x128xf32>
    %144 = vector.shape_cast %143 : vector<1x128xf32> to vector<1x1x128xf32>
    %145 = vector.broadcast %144 : vector<1x1x128xf32> to vector<8x8x128xf32>
    %146 = arith.mulf %142, %145 : vector<8x8x128xf32>
    %c0_80 = arith.constant 0 : index
    %c0_81 = arith.constant 0 : index
    %147 = vector.load %arg8[%c0_80, %c0_81] : memref<1x128xf32, #tpu.memory_space<vmem>>, vector<1x128xf32>
    %148 = vector.shape_cast %147 : vector<1x128xf32> to vector<1x1x128xf32>
    %149 = vector.broadcast %148 : vector<1x1x128xf32> to vector<8x8x128xf32>
    %150 = arith.addf %146, %149 : vector<8x8x128xf32>
    %cst_82 = arith.constant 0.000000e+00 : f32
    %151 = vector.broadcast %cst_82 : f32 to vector<8x8x128xf32>
    %152 = arith.maximumf %150, %151 : vector<8x8x128xf32>
    %c2_i32_83 = arith.constant 2 : i32
    %153 = vector.broadcast %c2_i32_83 : i32 to vector<8x8x128xi32>
    %154 = arith.muli %153, %0 : vector<8x8x128xi32>
    %c1_i32_84 = arith.constant 1 : i32
    %155 = vector.broadcast %c1_i32_84 : i32 to vector<8x8x128xi32>
    %156 = arith.addi %154, %155 : vector<8x8x128xi32>
    %c1_i32_85 = arith.constant 1 : i32
    %157 = vector.broadcast %c1_i32_85 : i32 to vector<8x8x128xi32>
    %158 = arith.cmpi sge, %156, %157 : vector<8x8x128xi32>
    %c2_i32_86 = arith.constant 2 : i32
    %159 = vector.broadcast %c2_i32_86 : i32 to vector<8x8x128xi32>
    %160 = arith.muli %159, %0 : vector<8x8x128xi32>
    %c1_i32_87 = arith.constant 1 : i32
    %161 = vector.broadcast %c1_i32_87 : i32 to vector<8x8x128xi32>
    %162 = arith.addi %160, %161 : vector<8x8x128xi32>
    %c16_i32_88 = arith.constant 16 : i32
    %163 = vector.broadcast %c16_i32_88 : i32 to vector<8x8x128xi32>
    %164 = arith.cmpi sle, %162, %163 : vector<8x8x128xi32>
    %165 = arith.andi %158, %164 : vector<8x8x128xi1>
    %c2_i32_89 = arith.constant 2 : i32
    %166 = vector.broadcast %c2_i32_89 : i32 to vector<8x8x128xi32>
    %167 = arith.muli %166, %1 : vector<8x8x128xi32>
    %c0_i32_90 = arith.constant 0 : i32
    %168 = vector.broadcast %c0_i32_90 : i32 to vector<8x8x128xi32>
    %169 = arith.addi %167, %168 : vector<8x8x128xi32>
    %c1_i32_91 = arith.constant 1 : i32
    %170 = vector.broadcast %c1_i32_91 : i32 to vector<8x8x128xi32>
    %171 = arith.cmpi sge, %169, %170 : vector<8x8x128xi32>
    %172 = arith.andi %165, %171 : vector<8x8x128xi1>
    %c2_i32_92 = arith.constant 2 : i32
    %173 = vector.broadcast %c2_i32_92 : i32 to vector<8x8x128xi32>
    %174 = arith.muli %173, %1 : vector<8x8x128xi32>
    %c0_i32_93 = arith.constant 0 : i32
    %175 = vector.broadcast %c0_i32_93 : i32 to vector<8x8x128xi32>
    %176 = arith.addi %174, %175 : vector<8x8x128xi32>
    %c16_i32_94 = arith.constant 16 : i32
    %177 = vector.broadcast %c16_i32_94 : i32 to vector<8x8x128xi32>
    %178 = arith.cmpi sle, %176, %177 : vector<8x8x128xi32>
    %179 = arith.andi %172, %178 : vector<8x8x128xi1>
    %cst_95 = arith.constant 0.000000e+00 : f32
    %180 = vector.broadcast %cst_95 : f32 to vector<8x8x128xf32>
    %181 = arith.select %179, %152, %180 : vector<8x8x128xi1>, vector<8x8x128xf32>
    %182 = vector.shape_cast %181 : vector<8x8x128xf32> to vector<64x128xf32>
    %c1_96 = arith.constant 1 : index
    %c0_97 = arith.constant 0 : index
    %c0_98 = arith.constant 0 : index
    %c0_99 = arith.constant 0 : index
    %183 = vector.load %arg6[%c1_96, %c0_97, %c0_98, %c0_99] : memref<3x3x128x128xf32, #tpu.memory_space<vmem>>, vector<1x1x128x128xf32>
    %184 = vector.shape_cast %183 : vector<1x1x128x128xf32> to vector<128x128xf32>
    %cst_100 = arith.constant dense<0.000000e+00> : vector<64x128xf32>
    %185 = tpu.matmul %182, %184, %cst_100 {dimension_numbers = #tpu.dot_dimension_numbers<[1], [0], [0], [1], [0, 0, 1, 1], [], []>} : vector<64x128xf32>, vector<128x128xf32>, vector<64x128xf32> -> vector<64x128xf32>
    %186 = arith.addf %140, %185 : vector<64x128xf32>
    %c0_101 = arith.constant 0 : index
    %c0_102 = arith.constant 0 : index
    %c0_103 = arith.constant 0 : index
    %c0_104 = arith.constant 0 : index
    %187 = vector.load %arg5[%c0_101, %c0_102, %c0_103, %c0_104] : memref<1x9x9x128xf32, #tpu.memory_space<vmem>>, vector<1x8x8x128xf32>
    %188 = vector.shape_cast %187 : vector<1x8x8x128xf32> to vector<8x8x128xf32>
    %c0_105 = arith.constant 0 : index
    %c0_106 = arith.constant 0 : index
    %189 = vector.load %arg7[%c0_105, %c0_106] : memref<1x128xf32, #tpu.memory_space<vmem>>, vector<1x128xf32>
    %190 = vector.shape_cast %189 : vector<1x128xf32> to vector<1x1x128xf32>
    %191 = vector.broadcast %190 : vector<1x1x128xf32> to vector<8x8x128xf32>
    %192 = arith.mulf %188, %191 : vector<8x8x128xf32>
    %c0_107 = arith.constant 0 : index
    %c0_108 = arith.constant 0 : index
    %193 = vector.load %arg8[%c0_107, %c0_108] : memref<1x128xf32, #tpu.memory_space<vmem>>, vector<1x128xf32>
    %194 = vector.shape_cast %193 : vector<1x128xf32> to vector<1x1x128xf32>
    %195 = vector.broadcast %194 : vector<1x1x128xf32> to vector<8x8x128xf32>
    %196 = arith.addf %192, %195 : vector<8x8x128xf32>
    %cst_109 = arith.constant 0.000000e+00 : f32
    %197 = vector.broadcast %cst_109 : f32 to vector<8x8x128xf32>
    %198 = arith.maximumf %196, %197 : vector<8x8x128xf32>
    %c2_i32_110 = arith.constant 2 : i32
    %199 = vector.broadcast %c2_i32_110 : i32 to vector<8x8x128xi32>
    %200 = arith.muli %199, %0 : vector<8x8x128xi32>
    %c1_i32_111 = arith.constant 1 : i32
    %201 = vector.broadcast %c1_i32_111 : i32 to vector<8x8x128xi32>
    %202 = arith.addi %200, %201 : vector<8x8x128xi32>
    %c1_i32_112 = arith.constant 1 : i32
    %203 = vector.broadcast %c1_i32_112 : i32 to vector<8x8x128xi32>
    %204 = arith.cmpi sge, %202, %203 : vector<8x8x128xi32>
    %c2_i32_113 = arith.constant 2 : i32
    %205 = vector.broadcast %c2_i32_113 : i32 to vector<8x8x128xi32>
    %206 = arith.muli %205, %0 : vector<8x8x128xi32>
    %c1_i32_114 = arith.constant 1 : i32
    %207 = vector.broadcast %c1_i32_114 : i32 to vector<8x8x128xi32>
    %208 = arith.addi %206, %207 : vector<8x8x128xi32>
    %c16_i32_115 = arith.constant 16 : i32
    %209 = vector.broadcast %c16_i32_115 : i32 to vector<8x8x128xi32>
    %210 = arith.cmpi sle, %208, %209 : vector<8x8x128xi32>
    %211 = arith.andi %204, %210 : vector<8x8x128xi1>
    %c2_i32_116 = arith.constant 2 : i32
    %212 = vector.broadcast %c2_i32_116 : i32 to vector<8x8x128xi32>
    %213 = arith.muli %212, %1 : vector<8x8x128xi32>
    %c1_i32_117 = arith.constant 1 : i32
    %214 = vector.broadcast %c1_i32_117 : i32 to vector<8x8x128xi32>
    %215 = arith.addi %213, %214 : vector<8x8x128xi32>
    %c1_i32_118 = arith.constant 1 : i32
    %216 = vector.broadcast %c1_i32_118 : i32 to vector<8x8x128xi32>
    %217 = arith.cmpi sge, %215, %216 : vector<8x8x128xi32>
    %218 = arith.andi %211, %217 : vector<8x8x128xi1>
    %c2_i32_119 = arith.constant 2 : i32
    %219 = vector.broadcast %c2_i32_119 : i32 to vector<8x8x128xi32>
    %220 = arith.muli %219, %1 : vector<8x8x128xi32>
    %c1_i32_120 = arith.constant 1 : i32
    %221 = vector.broadcast %c1_i32_120 : i32 to vector<8x8x128xi32>
    %222 = arith.addi %220, %221 : vector<8x8x128xi32>
    %c16_i32_121 = arith.constant 16 : i32
    %223 = vector.broadcast %c16_i32_121 : i32 to vector<8x8x128xi32>
    %224 = arith.cmpi sle, %222, %223 : vector<8x8x128xi32>
    %225 = arith.andi %218, %224 : vector<8x8x128xi1>
    %cst_122 = arith.constant 0.000000e+00 : f32
    %226 = vector.broadcast %cst_122 : f32 to vector<8x8x128xf32>
    %227 = arith.select %225, %198, %226 : vector<8x8x128xi1>, vector<8x8x128xf32>
    %228 = vector.shape_cast %227 : vector<8x8x128xf32> to vector<64x128xf32>
    %c1_123 = arith.constant 1 : index
    %c1_124 = arith.constant 1 : index
    %c0_125 = arith.constant 0 : index
    %c0_126 = arith.constant 0 : index
    %229 = vector.load %arg6[%c1_123, %c1_124, %c0_125, %c0_126] : memref<3x3x128x128xf32, #tpu.memory_space<vmem>>, vector<1x1x128x128xf32>
    %230 = vector.shape_cast %229 : vector<1x1x128x128xf32> to vector<128x128xf32>
    %cst_127 = arith.constant dense<0.000000e+00> : vector<64x128xf32>
    %231 = tpu.matmul %228, %230, %cst_127 {dimension_numbers = #tpu.dot_dimension_numbers<[1], [0], [0], [1], [0, 0, 1, 1], [], []>} : vector<64x128xf32>, vector<128x128xf32>, vector<64x128xf32> -> vector<64x128xf32>
    %232 = arith.addf %186, %231 : vector<64x128xf32>
    %c0_128 = arith.constant 0 : index
    %c0_129 = arith.constant 0 : index
    %c1_130 = arith.constant 1 : index
    %c0_131 = arith.constant 0 : index
    %233 = vector.load %arg4[%c0_128, %c0_129, %c1_130, %c0_131] : memref<1x9x9x128xf32, #tpu.memory_space<vmem>>, vector<1x8x8x128xf32>
    %234 = vector.shape_cast %233 : vector<1x8x8x128xf32> to vector<8x8x128xf32>
    %c0_132 = arith.constant 0 : index
    %c0_133 = arith.constant 0 : index
    %235 = vector.load %arg7[%c0_132, %c0_133] : memref<1x128xf32, #tpu.memory_space<vmem>>, vector<1x128xf32>
    %236 = vector.shape_cast %235 : vector<1x128xf32> to vector<1x1x128xf32>
    %237 = vector.broadcast %236 : vector<1x1x128xf32> to vector<8x8x128xf32>
    %238 = arith.mulf %234, %237 : vector<8x8x128xf32>
    %c0_134 = arith.constant 0 : index
    %c0_135 = arith.constant 0 : index
    %239 = vector.load %arg8[%c0_134, %c0_135] : memref<1x128xf32, #tpu.memory_space<vmem>>, vector<1x128xf32>
    %240 = vector.shape_cast %239 : vector<1x128xf32> to vector<1x1x128xf32>
    %241 = vector.broadcast %240 : vector<1x1x128xf32> to vector<8x8x128xf32>
    %242 = arith.addf %238, %241 : vector<8x8x128xf32>
    %cst_136 = arith.constant 0.000000e+00 : f32
    %243 = vector.broadcast %cst_136 : f32 to vector<8x8x128xf32>
    %244 = arith.maximumf %242, %243 : vector<8x8x128xf32>
    %c2_i32_137 = arith.constant 2 : i32
    %245 = vector.broadcast %c2_i32_137 : i32 to vector<8x8x128xi32>
    %246 = arith.muli %245, %0 : vector<8x8x128xi32>
    %c1_i32_138 = arith.constant 1 : i32
    %247 = vector.broadcast %c1_i32_138 : i32 to vector<8x8x128xi32>
    %248 = arith.addi %246, %247 : vector<8x8x128xi32>
    %c1_i32_139 = arith.constant 1 : i32
    %249 = vector.broadcast %c1_i32_139 : i32 to vector<8x8x128xi32>
    %250 = arith.cmpi sge, %248, %249 : vector<8x8x128xi32>
    %c2_i32_140 = arith.constant 2 : i32
    %251 = vector.broadcast %c2_i32_140 : i32 to vector<8x8x128xi32>
    %252 = arith.muli %251, %0 : vector<8x8x128xi32>
    %c1_i32_141 = arith.constant 1 : i32
    %253 = vector.broadcast %c1_i32_141 : i32 to vector<8x8x128xi32>
    %254 = arith.addi %252, %253 : vector<8x8x128xi32>
    %c16_i32_142 = arith.constant 16 : i32
    %255 = vector.broadcast %c16_i32_142 : i32 to vector<8x8x128xi32>
    %256 = arith.cmpi sle, %254, %255 : vector<8x8x128xi32>
    %257 = arith.andi %250, %256 : vector<8x8x128xi1>
    %c2_i32_143 = arith.constant 2 : i32
    %258 = vector.broadcast %c2_i32_143 : i32 to vector<8x8x128xi32>
    %259 = arith.muli %258, %1 : vector<8x8x128xi32>
    %c2_i32_144 = arith.constant 2 : i32
    %260 = vector.broadcast %c2_i32_144 : i32 to vector<8x8x128xi32>
    %261 = arith.addi %259, %260 : vector<8x8x128xi32>
    %c1_i32_145 = arith.constant 1 : i32
    %262 = vector.broadcast %c1_i32_145 : i32 to vector<8x8x128xi32>
    %263 = arith.cmpi sge, %261, %262 : vector<8x8x128xi32>
    %264 = arith.andi %257, %263 : vector<8x8x128xi1>
    %c2_i32_146 = arith.constant 2 : i32
    %265 = vector.broadcast %c2_i32_146 : i32 to vector<8x8x128xi32>
    %266 = arith.muli %265, %1 : vector<8x8x128xi32>
    %c2_i32_147 = arith.constant 2 : i32
    %267 = vector.broadcast %c2_i32_147 : i32 to vector<8x8x128xi32>
    %268 = arith.addi %266, %267 : vector<8x8x128xi32>
    %c16_i32_148 = arith.constant 16 : i32
    %269 = vector.broadcast %c16_i32_148 : i32 to vector<8x8x128xi32>
    %270 = arith.cmpi sle, %268, %269 : vector<8x8x128xi32>
    %271 = arith.andi %264, %270 : vector<8x8x128xi1>
    %cst_149 = arith.constant 0.000000e+00 : f32
    %272 = vector.broadcast %cst_149 : f32 to vector<8x8x128xf32>
    %273 = arith.select %271, %244, %272 : vector<8x8x128xi1>, vector<8x8x128xf32>
    %274 = vector.shape_cast %273 : vector<8x8x128xf32> to vector<64x128xf32>
    %c1_150 = arith.constant 1 : index
    %c2_151 = arith.constant 2 : index
    %c0_152 = arith.constant 0 : index
    %c0_153 = arith.constant 0 : index
    %275 = vector.load %arg6[%c1_150, %c2_151, %c0_152, %c0_153] : memref<3x3x128x128xf32, #tpu.memory_space<vmem>>, vector<1x1x128x128xf32>
    %276 = vector.shape_cast %275 : vector<1x1x128x128xf32> to vector<128x128xf32>
    %cst_154 = arith.constant dense<0.000000e+00> : vector<64x128xf32>
    %277 = tpu.matmul %274, %276, %cst_154 {dimension_numbers = #tpu.dot_dimension_numbers<[1], [0], [0], [1], [0, 0, 1, 1], [], []>} : vector<64x128xf32>, vector<128x128xf32>, vector<64x128xf32> -> vector<64x128xf32>
    %278 = arith.addf %232, %277 : vector<64x128xf32>
    %c0_155 = arith.constant 0 : index
    %c1_156 = arith.constant 1 : index
    %c0_157 = arith.constant 0 : index
    %c0_158 = arith.constant 0 : index
    %279 = vector.load %arg2[%c0_155, %c1_156, %c0_157, %c0_158] : memref<1x9x9x128xf32, #tpu.memory_space<vmem>>, vector<1x8x8x128xf32>
    %280 = vector.shape_cast %279 : vector<1x8x8x128xf32> to vector<8x8x128xf32>
    %c0_159 = arith.constant 0 : index
    %c0_160 = arith.constant 0 : index
    %281 = vector.load %arg7[%c0_159, %c0_160] : memref<1x128xf32, #tpu.memory_space<vmem>>, vector<1x128xf32>
    %282 = vector.shape_cast %281 : vector<1x128xf32> to vector<1x1x128xf32>
    %283 = vector.broadcast %282 : vector<1x1x128xf32> to vector<8x8x128xf32>
    %284 = arith.mulf %280, %283 : vector<8x8x128xf32>
    %c0_161 = arith.constant 0 : index
    %c0_162 = arith.constant 0 : index
    %285 = vector.load %arg8[%c0_161, %c0_162] : memref<1x128xf32, #tpu.memory_space<vmem>>, vector<1x128xf32>
    %286 = vector.shape_cast %285 : vector<1x128xf32> to vector<1x1x128xf32>
    %287 = vector.broadcast %286 : vector<1x1x128xf32> to vector<8x8x128xf32>
    %288 = arith.addf %284, %287 : vector<8x8x128xf32>
    %cst_163 = arith.constant 0.000000e+00 : f32
    %289 = vector.broadcast %cst_163 : f32 to vector<8x8x128xf32>
    %290 = arith.maximumf %288, %289 : vector<8x8x128xf32>
    %c2_i32_164 = arith.constant 2 : i32
    %291 = vector.broadcast %c2_i32_164 : i32 to vector<8x8x128xi32>
    %292 = arith.muli %291, %0 : vector<8x8x128xi32>
    %c2_i32_165 = arith.constant 2 : i32
    %293 = vector.broadcast %c2_i32_165 : i32 to vector<8x8x128xi32>
    %294 = arith.addi %292, %293 : vector<8x8x128xi32>
    %c1_i32_166 = arith.constant 1 : i32
    %295 = vector.broadcast %c1_i32_166 : i32 to vector<8x8x128xi32>
    %296 = arith.cmpi sge, %294, %295 : vector<8x8x128xi32>
    %c2_i32_167 = arith.constant 2 : i32
    %297 = vector.broadcast %c2_i32_167 : i32 to vector<8x8x128xi32>
    %298 = arith.muli %297, %0 : vector<8x8x128xi32>
    %c2_i32_168 = arith.constant 2 : i32
    %299 = vector.broadcast %c2_i32_168 : i32 to vector<8x8x128xi32>
    %300 = arith.addi %298, %299 : vector<8x8x128xi32>
    %c16_i32_169 = arith.constant 16 : i32
    %301 = vector.broadcast %c16_i32_169 : i32 to vector<8x8x128xi32>
    %302 = arith.cmpi sle, %300, %301 : vector<8x8x128xi32>
    %303 = arith.andi %296, %302 : vector<8x8x128xi1>
    %c2_i32_170 = arith.constant 2 : i32
    %304 = vector.broadcast %c2_i32_170 : i32 to vector<8x8x128xi32>
    %305 = arith.muli %304, %1 : vector<8x8x128xi32>
    %c0_i32_171 = arith.constant 0 : i32
    %306 = vector.broadcast %c0_i32_171 : i32 to vector<8x8x128xi32>
    %307 = arith.addi %305, %306 : vector<8x8x128xi32>
    %c1_i32_172 = arith.constant 1 : i32
    %308 = vector.broadcast %c1_i32_172 : i32 to vector<8x8x128xi32>
    %309 = arith.cmpi sge, %307, %308 : vector<8x8x128xi32>
    %310 = arith.andi %303, %309 : vector<8x8x128xi1>
    %c2_i32_173 = arith.constant 2 : i32
    %311 = vector.broadcast %c2_i32_173 : i32 to vector<8x8x128xi32>
    %312 = arith.muli %311, %1 : vector<8x8x128xi32>
    %c0_i32_174 = arith.constant 0 : i32
    %313 = vector.broadcast %c0_i32_174 : i32 to vector<8x8x128xi32>
    %314 = arith.addi %312, %313 : vector<8x8x128xi32>
    %c16_i32_175 = arith.constant 16 : i32
    %315 = vector.broadcast %c16_i32_175 : i32 to vector<8x8x128xi32>
    %316 = arith.cmpi sle, %314, %315 : vector<8x8x128xi32>
    %317 = arith.andi %310, %316 : vector<8x8x128xi1>
    %cst_176 = arith.constant 0.000000e+00 : f32
    %318 = vector.broadcast %cst_176 : f32 to vector<8x8x128xf32>
    %319 = arith.select %317, %290, %318 : vector<8x8x128xi1>, vector<8x8x128xf32>
    %320 = vector.shape_cast %319 : vector<8x8x128xf32> to vector<64x128xf32>
    %c2_177 = arith.constant 2 : index
    %c0_178 = arith.constant 0 : index
    %c0_179 = arith.constant 0 : index
    %c0_180 = arith.constant 0 : index
    %321 = vector.load %arg6[%c2_177, %c0_178, %c0_179, %c0_180] : memref<3x3x128x128xf32, #tpu.memory_space<vmem>>, vector<1x1x128x128xf32>
    %322 = vector.shape_cast %321 : vector<1x1x128x128xf32> to vector<128x128xf32>
    %cst_181 = arith.constant dense<0.000000e+00> : vector<64x128xf32>
    %323 = tpu.matmul %320, %322, %cst_181 {dimension_numbers = #tpu.dot_dimension_numbers<[1], [0], [0], [1], [0, 0, 1, 1], [], []>} : vector<64x128xf32>, vector<128x128xf32>, vector<64x128xf32> -> vector<64x128xf32>
    %324 = arith.addf %278, %323 : vector<64x128xf32>
    %c0_182 = arith.constant 0 : index
    %c1_183 = arith.constant 1 : index
    %c0_184 = arith.constant 0 : index
    %c0_185 = arith.constant 0 : index
    %325 = vector.load %arg3[%c0_182, %c1_183, %c0_184, %c0_185] : memref<1x9x9x128xf32, #tpu.memory_space<vmem>>, vector<1x8x8x128xf32>
    %326 = vector.shape_cast %325 : vector<1x8x8x128xf32> to vector<8x8x128xf32>
    %c0_186 = arith.constant 0 : index
    %c0_187 = arith.constant 0 : index
    %327 = vector.load %arg7[%c0_186, %c0_187] : memref<1x128xf32, #tpu.memory_space<vmem>>, vector<1x128xf32>
    %328 = vector.shape_cast %327 : vector<1x128xf32> to vector<1x1x128xf32>
    %329 = vector.broadcast %328 : vector<1x1x128xf32> to vector<8x8x128xf32>
    %330 = arith.mulf %326, %329 : vector<8x8x128xf32>
    %c0_188 = arith.constant 0 : index
    %c0_189 = arith.constant 0 : index
    %331 = vector.load %arg8[%c0_188, %c0_189] : memref<1x128xf32, #tpu.memory_space<vmem>>, vector<1x128xf32>
    %332 = vector.shape_cast %331 : vector<1x128xf32> to vector<1x1x128xf32>
    %333 = vector.broadcast %332 : vector<1x1x128xf32> to vector<8x8x128xf32>
    %334 = arith.addf %330, %333 : vector<8x8x128xf32>
    %cst_190 = arith.constant 0.000000e+00 : f32
    %335 = vector.broadcast %cst_190 : f32 to vector<8x8x128xf32>
    %336 = arith.maximumf %334, %335 : vector<8x8x128xf32>
    %c2_i32_191 = arith.constant 2 : i32
    %337 = vector.broadcast %c2_i32_191 : i32 to vector<8x8x128xi32>
    %338 = arith.muli %337, %0 : vector<8x8x128xi32>
    %c2_i32_192 = arith.constant 2 : i32
    %339 = vector.broadcast %c2_i32_192 : i32 to vector<8x8x128xi32>
    %340 = arith.addi %338, %339 : vector<8x8x128xi32>
    %c1_i32_193 = arith.constant 1 : i32
    %341 = vector.broadcast %c1_i32_193 : i32 to vector<8x8x128xi32>
    %342 = arith.cmpi sge, %340, %341 : vector<8x8x128xi32>
    %c2_i32_194 = arith.constant 2 : i32
    %343 = vector.broadcast %c2_i32_194 : i32 to vector<8x8x128xi32>
    %344 = arith.muli %343, %0 : vector<8x8x128xi32>
    %c2_i32_195 = arith.constant 2 : i32
    %345 = vector.broadcast %c2_i32_195 : i32 to vector<8x8x128xi32>
    %346 = arith.addi %344, %345 : vector<8x8x128xi32>
    %c16_i32_196 = arith.constant 16 : i32
    %347 = vector.broadcast %c16_i32_196 : i32 to vector<8x8x128xi32>
    %348 = arith.cmpi sle, %346, %347 : vector<8x8x128xi32>
    %349 = arith.andi %342, %348 : vector<8x8x128xi1>
    %c2_i32_197 = arith.constant 2 : i32
    %350 = vector.broadcast %c2_i32_197 : i32 to vector<8x8x128xi32>
    %351 = arith.muli %350, %1 : vector<8x8x128xi32>
    %c1_i32_198 = arith.constant 1 : i32
    %352 = vector.broadcast %c1_i32_198 : i32 to vector<8x8x128xi32>
    %353 = arith.addi %351, %352 : vector<8x8x128xi32>
    %c1_i32_199 = arith.constant 1 : i32
    %354 = vector.broadcast %c1_i32_199 : i32 to vector<8x8x128xi32>
    %355 = arith.cmpi sge, %353, %354 : vector<8x8x128xi32>
    %356 = arith.andi %349, %355 : vector<8x8x128xi1>
    %c2_i32_200 = arith.constant 2 : i32
    %357 = vector.broadcast %c2_i32_200 : i32 to vector<8x8x128xi32>
    %358 = arith.muli %357, %1 : vector<8x8x128xi32>
    %c1_i32_201 = arith.constant 1 : i32
    %359 = vector.broadcast %c1_i32_201 : i32 to vector<8x8x128xi32>
    %360 = arith.addi %358, %359 : vector<8x8x128xi32>
    %c16_i32_202 = arith.constant 16 : i32
    %361 = vector.broadcast %c16_i32_202 : i32 to vector<8x8x128xi32>
    %362 = arith.cmpi sle, %360, %361 : vector<8x8x128xi32>
    %363 = arith.andi %356, %362 : vector<8x8x128xi1>
    %cst_203 = arith.constant 0.000000e+00 : f32
    %364 = vector.broadcast %cst_203 : f32 to vector<8x8x128xf32>
    %365 = arith.select %363, %336, %364 : vector<8x8x128xi1>, vector<8x8x128xf32>
    %366 = vector.shape_cast %365 : vector<8x8x128xf32> to vector<64x128xf32>
    %c2_204 = arith.constant 2 : index
    %c1_205 = arith.constant 1 : index
    %c0_206 = arith.constant 0 : index
    %c0_207 = arith.constant 0 : index
    %367 = vector.load %arg6[%c2_204, %c1_205, %c0_206, %c0_207] : memref<3x3x128x128xf32, #tpu.memory_space<vmem>>, vector<1x1x128x128xf32>
    %368 = vector.shape_cast %367 : vector<1x1x128x128xf32> to vector<128x128xf32>
    %cst_208 = arith.constant dense<0.000000e+00> : vector<64x128xf32>
    %369 = tpu.matmul %366, %368, %cst_208 {dimension_numbers = #tpu.dot_dimension_numbers<[1], [0], [0], [1], [0, 0, 1, 1], [], []>} : vector<64x128xf32>, vector<128x128xf32>, vector<64x128xf32> -> vector<64x128xf32>
    %370 = arith.addf %324, %369 : vector<64x128xf32>
    %c0_209 = arith.constant 0 : index
    %c1_210 = arith.constant 1 : index
    %c1_211 = arith.constant 1 : index
    %c0_212 = arith.constant 0 : index
    %371 = vector.load %arg2[%c0_209, %c1_210, %c1_211, %c0_212] : memref<1x9x9x128xf32, #tpu.memory_space<vmem>>, vector<1x8x8x128xf32>
    %372 = vector.shape_cast %371 : vector<1x8x8x128xf32> to vector<8x8x128xf32>
    %c0_213 = arith.constant 0 : index
    %c0_214 = arith.constant 0 : index
    %373 = vector.load %arg7[%c0_213, %c0_214] : memref<1x128xf32, #tpu.memory_space<vmem>>, vector<1x128xf32>
    %374 = vector.shape_cast %373 : vector<1x128xf32> to vector<1x1x128xf32>
    %375 = vector.broadcast %374 : vector<1x1x128xf32> to vector<8x8x128xf32>
    %376 = arith.mulf %372, %375 : vector<8x8x128xf32>
    %c0_215 = arith.constant 0 : index
    %c0_216 = arith.constant 0 : index
    %377 = vector.load %arg8[%c0_215, %c0_216] : memref<1x128xf32, #tpu.memory_space<vmem>>, vector<1x128xf32>
    %378 = vector.shape_cast %377 : vector<1x128xf32> to vector<1x1x128xf32>
    %379 = vector.broadcast %378 : vector<1x1x128xf32> to vector<8x8x128xf32>
    %380 = arith.addf %376, %379 : vector<8x8x128xf32>
    %cst_217 = arith.constant 0.000000e+00 : f32
    %381 = vector.broadcast %cst_217 : f32 to vector<8x8x128xf32>
    %382 = arith.maximumf %380, %381 : vector<8x8x128xf32>
    %c2_i32_218 = arith.constant 2 : i32
    %383 = vector.broadcast %c2_i32_218 : i32 to vector<8x8x128xi32>
    %384 = arith.muli %383, %0 : vector<8x8x128xi32>
    %c2_i32_219 = arith.constant 2 : i32
    %385 = vector.broadcast %c2_i32_219 : i32 to vector<8x8x128xi32>
    %386 = arith.addi %384, %385 : vector<8x8x128xi32>
    %c1_i32_220 = arith.constant 1 : i32
    %387 = vector.broadcast %c1_i32_220 : i32 to vector<8x8x128xi32>
    %388 = arith.cmpi sge, %386, %387 : vector<8x8x128xi32>
    %c2_i32_221 = arith.constant 2 : i32
    %389 = vector.broadcast %c2_i32_221 : i32 to vector<8x8x128xi32>
    %390 = arith.muli %389, %0 : vector<8x8x128xi32>
    %c2_i32_222 = arith.constant 2 : i32
    %391 = vector.broadcast %c2_i32_222 : i32 to vector<8x8x128xi32>
    %392 = arith.addi %390, %391 : vector<8x8x128xi32>
    %c16_i32_223 = arith.constant 16 : i32
    %393 = vector.broadcast %c16_i32_223 : i32 to vector<8x8x128xi32>
    %394 = arith.cmpi sle, %392, %393 : vector<8x8x128xi32>
    %395 = arith.andi %388, %394 : vector<8x8x128xi1>
    %c2_i32_224 = arith.constant 2 : i32
    %396 = vector.broadcast %c2_i32_224 : i32 to vector<8x8x128xi32>
    %397 = arith.muli %396, %1 : vector<8x8x128xi32>
    %c2_i32_225 = arith.constant 2 : i32
    %398 = vector.broadcast %c2_i32_225 : i32 to vector<8x8x128xi32>
    %399 = arith.addi %397, %398 : vector<8x8x128xi32>
    %c1_i32_226 = arith.constant 1 : i32
    %400 = vector.broadcast %c1_i32_226 : i32 to vector<8x8x128xi32>
    %401 = arith.cmpi sge, %399, %400 : vector<8x8x128xi32>
    %402 = arith.andi %395, %401 : vector<8x8x128xi1>
    %c2_i32_227 = arith.constant 2 : i32
    %403 = vector.broadcast %c2_i32_227 : i32 to vector<8x8x128xi32>
    %404 = arith.muli %403, %1 : vector<8x8x128xi32>
    %c2_i32_228 = arith.constant 2 : i32
    %405 = vector.broadcast %c2_i32_228 : i32 to vector<8x8x128xi32>
    %406 = arith.addi %404, %405 : vector<8x8x128xi32>
    %c16_i32_229 = arith.constant 16 : i32
    %407 = vector.broadcast %c16_i32_229 : i32 to vector<8x8x128xi32>
    %408 = arith.cmpi sle, %406, %407 : vector<8x8x128xi32>
    %409 = arith.andi %402, %408 : vector<8x8x128xi1>
    %cst_230 = arith.constant 0.000000e+00 : f32
    %410 = vector.broadcast %cst_230 : f32 to vector<8x8x128xf32>
    %411 = arith.select %409, %382, %410 : vector<8x8x128xi1>, vector<8x8x128xf32>
    %412 = vector.shape_cast %411 : vector<8x8x128xf32> to vector<64x128xf32>
    %c2_231 = arith.constant 2 : index
    %c2_232 = arith.constant 2 : index
    %c0_233 = arith.constant 0 : index
    %c0_234 = arith.constant 0 : index
    %413 = vector.load %arg6[%c2_231, %c2_232, %c0_233, %c0_234] : memref<3x3x128x128xf32, #tpu.memory_space<vmem>>, vector<1x1x128x128xf32>
    %414 = vector.shape_cast %413 : vector<1x1x128x128xf32> to vector<128x128xf32>
    %cst_235 = arith.constant dense<0.000000e+00> : vector<64x128xf32>
    %415 = tpu.matmul %412, %414, %cst_235 {dimension_numbers = #tpu.dot_dimension_numbers<[1], [0], [0], [1], [0, 0, 1, 1], [], []>} : vector<64x128xf32>, vector<128x128xf32>, vector<64x128xf32> -> vector<64x128xf32>
    %416 = arith.addf %370, %415 : vector<64x128xf32>
    %c0_236 = arith.constant 0 : index
    %c0_237 = arith.constant 0 : index
    %417 = vector.load %arg9[%c0_236, %c0_237] : memref<1x128xf32, #tpu.memory_space<vmem>>, vector<1x128xf32>
    %418 = vector.broadcast %417 : vector<1x128xf32> to vector<64x128xf32>
    %419 = arith.mulf %416, %418 : vector<64x128xf32>
    %c0_238 = arith.constant 0 : index
    %c0_239 = arith.constant 0 : index
    %420 = vector.load %arg10[%c0_238, %c0_239] : memref<1x128xf32, #tpu.memory_space<vmem>>, vector<1x128xf32>
    %421 = vector.broadcast %420 : vector<1x128xf32> to vector<64x128xf32>
    %422 = arith.addf %419, %421 : vector<64x128xf32>
    %cst_240 = arith.constant 0.000000e+00 : f32
    %423 = vector.broadcast %cst_240 : f32 to vector<64x128xf32>
    %424 = arith.maximumf %422, %423 : vector<64x128xf32>
    %c0_241 = arith.constant 0 : index
    %c0_242 = arith.constant 0 : index
    %425 = vector.load %arg11[%c0_241, %c0_242] : memref<64x128xf32, #tpu.memory_space<vmem>>, vector<64x128xf32>
    tpu.vector_store %arg11[%c0_241, %c0_242], %424 {strides = array<i32>} : memref<64x128xf32, #tpu.memory_space<vmem>>, vector<64x128xf32>,
    return
  }
  func.func @transform_0(%arg0: i32, %arg1: i32) -> (i32, i32, i32, i32) {
    %c0_i32 = arith.constant 0 : i32
    %c0_i32_0 = arith.constant 0 : i32
    %c0_i32_1 = arith.constant 0 : i32
    %c0_i32_2 = arith.constant 0 : i32
    return %arg0, %c0_i32, %c0_i32_0, %c0_i32_1 : i32, i32, i32, i32
  }
  func.func @transform_1(%arg0: i32, %arg1: i32) -> (i32, i32, i32, i32) {
    %c0_i32 = arith.constant 0 : i32
    %c0_i32_0 = arith.constant 0 : i32
    %c0_i32_1 = arith.constant 0 : i32
    %c0_i32_2 = arith.constant 0 : i32
    return %arg0, %c0_i32, %c0_i32_0, %c0_i32_1 : i32, i32, i32, i32
  }
  func.func @transform_2(%arg0: i32, %arg1: i32) -> (i32, i32, i32, i32) {
    %c0_i32 = arith.constant 0 : i32
    %c0_i32_0 = arith.constant 0 : i32
    %c0_i32_1 = arith.constant 0 : i32
    %c0_i32_2 = arith.constant 0 : i32
    return %arg0, %c0_i32, %c0_i32_0, %c0_i32_1 : i32, i32, i32, i32
  }
  func.func @transform_3(%arg0: i32, %arg1: i32) -> (i32, i32, i32, i32) {
    %c0_i32 = arith.constant 0 : i32
    %c0_i32_0 = arith.constant 0 : i32
    %c0_i32_1 = arith.constant 0 : i32
    %c0_i32_2 = arith.constant 0 : i32
    return %arg0, %c0_i32, %c0_i32_0, %c0_i32_1 : i32, i32, i32, i32
  }
  func.func @transform_4(%arg0: i32, %arg1: i32) -> (i32, i32, i32, i32) {
    %c0_i32 = arith.constant 0 : i32
    %c0_i32_0 = arith.constant 0 : i32
    %c0_i32_1 = arith.constant 0 : i32
    %c0_i32_2 = arith.constant 0 : i32
    return %c0_i32, %c0_i32_0, %c0_i32_1, %arg1 : i32, i32, i32, i32
  }
  func.func @transform_5(%arg0: i32, %arg1: i32) -> (i32, i32) {
    %c0_i32 = arith.constant 0 : i32
    %c0_i32_0 = arith.constant 0 : i32
    %c0_i32_1 = arith.constant 0 : i32
    return %c0_i32, %c0_i32_0 : i32, i32
  }
  func.func @transform_6(%arg0: i32, %arg1: i32) -> (i32, i32) {
    %c0_i32 = arith.constant 0 : i32
    %c0_i32_0 = arith.constant 0 : i32
    %c0_i32_1 = arith.constant 0 : i32
    return %c0_i32, %c0_i32_0 : i32, i32
  }
  func.func @transform_7(%arg0: i32, %arg1: i32) -> (i32, i32) {
    %c0_i32 = arith.constant 0 : i32
    %c0_i32_0 = arith.constant 0 : i32
    return %c0_i32, %arg1 : i32, i32
  }
  func.func @transform_8(%arg0: i32, %arg1: i32) -> (i32, i32) {
    %c0_i32 = arith.constant 0 : i32
    %c0_i32_0 = arith.constant 0 : i32
    return %c0_i32, %arg1 : i32, i32
  }
  func.func @transform_9(%arg0: i32, %arg1: i32) -> (i32, i32) {
    %c0_i32 = arith.constant 0 : i32
    return %arg0, %arg1 : i32, i32
  }
}

</mosaic_0001>

<llo_original>
// kernel: tpu_custom_call.1
$region0: #{tpu_custom_call.1}
  #allocation0 [shape = 'u32[]', space=smem, size = 0x4, offset = 0x4, fixed_abs, tag = 'smem constant byte address 0x4 - core index']
  #allocation1 [shape = 'u32[144,128]{1,0:T(1,128)}', space=vmem, size = 0x12000, scoped, tag = 'internal scratch']
  %s0 = inlined_call_operand.vmem [shape: f32[2,9,9,128], index: 0, kind: input, shape index: {}]
  %s1 = inlined_call_operand.vmem [shape: f32[2,9,9,128], index: 1, kind: input, shape index: {}]
  %s2 = inlined_call_operand.vmem [shape: f32[2,9,9,128], index: 2, kind: input, shape index: {}]
  %s3 = inlined_call_operand.vmem [shape: f32[2,9,9,128], index: 3, kind: input, shape index: {}]
  %s4 = inlined_call_operand.vmem [shape: f32[3,3,128,128], index: 4, kind: input, shape index: {}]
  %s5 = inlined_call_operand.vmem [shape: f32[1,128], index: 5, kind: input, shape index: {}]
  %s6 = inlined_call_operand.vmem [shape: f32[1,128], index: 6, kind: input, shape index: {}]
  %s7 = inlined_call_operand.vmem [shape: f32[1,128], index: 7, kind: input, shape index: {}]
  %s8 = inlined_call_operand.vmem [shape: f32[1,128], index: 8, kind: input, shape index: {}]
  %s9 = inlined_call_operand.hbm [shape: f32[128,128], index: 9, kind: output, shape index: {}]
  %s10 = sld [smem:[#allocation0]]
  $region69: #{tpu_custom_call.1} parent=0
    _
  %s12 = ssub.s32 1, %s10
  %s13 = scalar_select 0, %s12, %s10
  $region1: #{tpu_custom_call.1} parent=0
    #allocation2 [shape = 'u8[65536]{0}', space=vmem, size = 0x10000, scoped, tag = 'output window, operand 0']
    #allocation3 [shape = 's32[2]{0}', space=sflag, size = 0x8, scoped, tag = 'scoped memory for tpu_custom_call.1']
    %14 = vsyncpa [#allocation3], 0
    %s15 = scalar_lea.sflag [#allocation3], 1
    %16 = vsyncpa %s15, 0
    loop: start=0, step=1, limit=4
    $region2: #{tpu_custom_call.1} parent=1 // loop_pre_header
      _
    $region3: #{tpu_custom_call.1} parent=1 // loop_header
      %s18 = sphi 0, %s22
      %p19 = scmp.ge.s32.totalorder %s18, 4
      %s25 = sphi 0, %s37
      %s26 = sphi 0, %s33
      %s27 = sphi 0, %s25
      %s28 = sphi 0, %s26
      %s29 = sphi 0, %s27
      %s30 = sphi 0, %s28
      %s40 = sphi 0, %s42
      %s43 = sphi 0, %s40
      %s44 = sphi 0, %s43
      %s60 = sphi 0, %s44
      %s66 = sphi 0, %s68
      %s69 = sphi 0, %s66
      %s70 = sphi 0, %s69
      %s86 = sphi 0, %s70
      %s92 = sphi 0, %s94
      %s95 = sphi 0, %s92
      %s96 = sphi 0, %s95
      %s112 = sphi 0, %s96
      %s118 = sphi 0, %s120
      %s121 = sphi 0, %s118
      %s122 = sphi 0, %s121
      %s138 = sphi 0, %s122
      %s144 = sphi 0, %s146
      %s147 = sphi 0, %s144
      %s148 = sphi 0, %s147
      %s164 = sphi 0, %s148
      %s168 = sphi 0, %s168
      %s170 = sphi 0, %s168
      %s171 = sphi 0, %s170
      %s185 = sphi 0, %s171
      %s189 = sphi 0, %s189
      %s191 = sphi 0, %s189
      %s192 = sphi 0, %s191
      %s206 = sphi 0, %s192
      %s212 = sphi 0, %s214
      %s215 = sphi 0, %s212
      %s216 = sphi 0, %s215
      %s232 = sphi 0, %s216
      %s238 = sphi 0, %s240
      %s241 = sphi 0, %s238
      %s242 = sphi 0, %s241
      %s258 = sphi 0, %s242
      %s266 = sphi 0, %s268
      %s269 = sphi 0, %s266
      %s270 = sphi 0, %s269
      %s286 = sphi 0, %s270
    $region4: #{tpu_custom_call.1} parent=1 // loop_header_branch
      %21 = sbr.rel (%p19) target = $region8
    $region5: #{tpu_custom_call.1} parent=1 // loop_body
      %s23 = ssub.s32 %s18, 1
      %s24 = ssub.s32 %s18, 2
      %s31 = sadd.s32 1, %s26
      %p32 = scmp.ge.s32.totalorder %s31, 1
      %s33 = scalar_select %p32, 0, %s31
      %s34 = sadd.s32 1, %s25
      %s35 = scalar_select %p32, %s34, %s25
      %p36 = scmp.ge.s32.totalorder %s35, 2
      %s37 = scalar_select %p36, 0, %s35
      %s38 = ssub.s32 %s25, %s37
      %p39 = scmp.eq.s32.totalorder %s38, 0
      %s41 = sadd.s32 %s40, 1
      %s42 = scalar_select %p39, %s40, %s41
      %p45 = pneg %p39
      %p46 = scmp.eq.s32.totalorder %s18, 1
      %p47 = por %p45, %p46
      %p48 = scmp.ne.s32.totalorder %s40, %s43
      %p49 = scmp.eq.s32.totalorder %s18, 0
      %p50 = por %p48, %p49
      %p51 = scmp.ne.s32.totalorder %s40, %s43
      %p52 = scmp.eq.s32.totalorder %s23, 1
      %p53 = por %p51, %p52
      %p54 = scmp.ne.s32.totalorder %s43, %s44
      %p55 = scmp.eq.s32.totalorder %s23, 0
      %p56 = por %p54, %p55
      %p57 = scmp.ne.s32.totalorder %s43, %s44
      %p58 = scmp.eq.s32.totalorder %s24, 1
      %p59 = por %p57, %p58
      %p61 = scmp.ne.s32.totalorder %s44, %s60
      %p62 = scmp.eq.s32.totalorder %s24, 0
      %p63 = por %p61, %p62
      %s64 = ssub.s32 %s25, %s37
      %p65 = scmp.eq.s32.totalorder %s64, 0
      %s67 = sadd.s32 %s66, 1
      %s68 = scalar_select %p65, %s66, %s67
      %p71 = pneg %p65
      %p72 = scmp.eq.s32.totalorder %s18, 1
      %p73 = por %p71, %p72
      %p74 = scmp.ne.s32.totalorder %s66, %s69
      %p75 = scmp.eq.s32.totalorder %s18, 0
      %p76 = por %p74, %p75
      %p77 = scmp.ne.s32.totalorder %s66, %s69
      %p78 = scmp.eq.s32.totalorder %s23, 1
      %p79 = por %p77, %p78
      %p80 = scmp.ne.s32.totalorder %s69, %s70
      %p81 = scmp.eq.s32.totalorder %s23, 0
      %p82 = por %p80, %p81
      %p83 = scmp.ne.s32.totalorder %s69, %s70
      %p84 = scmp.eq.s32.totalorder %s24, 1
      %p85 = por %p83, %p84
      %p87 = scmp.ne.s32.totalorder %s70, %s86
      %p88 = scmp.eq.s32.totalorder %s24, 0
      %p89 = por %p87, %p88
      %s90 = ssub.s32 %s25, %s37
      %p91 = scmp.eq.s32.totalorder %s90, 0
      %s93 = sadd.s32 %s92, 1
      %s94 = scalar_select %p91, %s92, %s93
      %p97 = pneg %p91
      %p98 = scmp.eq.s32.totalorder %s18, 1
      %p99 = por %p97, %p98
      %p100 = scmp.ne.s32.totalorder %s92, %s95
      %p101 = scmp.eq.s32.totalorder %s18, 0
      %p102 = por %p100, %p101
      %p103 = scmp.ne.s32.totalorder %s92, %s95
      %p104 = scmp.eq.s32.totalorder %s23, 1
      %p105 = por %p103, %p104
      %p106 = scmp.ne.s32.totalorder %s95, %s96
      %p107 = scmp.eq.s32.totalorder %s23, 0
      %p108 = por %p106, %p107
      %p109 = scmp.ne.s32.totalorder %s95, %s96
      %p110 = scmp.eq.s32.totalorder %s24, 1
      %p111 = por %p109, %p110
      %p113 = scmp.ne.s32.totalorder %s96, %s112
      %p114 = scmp.eq.s32.totalorder %s24, 0
      %p115 = por %p113, %p114
      %s116 = ssub.s32 %s25, %s37
      %p117 = scmp.eq.s32.totalorder %s116, 0
      %s119 = sadd.s32 %s118, 1
      %s120 = scalar_select %p117, %s118, %s119
      %p123 = pneg %p117
      %p124 = scmp.eq.s32.totalorder %s18, 1
      %p125 = por %p123, %p124
      %p126 = scmp.ne.s32.totalorder %s118, %s121
      %p127 = scmp.eq.s32.totalorder %s18, 0
      %p128 = por %p126, %p127
      %p129 = scmp.ne.s32.totalorder %s118, %s121
      %p130 = scmp.eq.s32.totalorder %s23, 1
      %p131 = por %p129, %p130
      %p132 = scmp.ne.s32.totalorder %s121, %s122
      %p133 = scmp.eq.s32.totalorder %s23, 0
      %p134 = por %p132, %p133
      %p135 = scmp.ne.s32.totalorder %s121, %s122
      %p136 = scmp.eq.s32.totalorder %s24, 1
      %p137 = por %p135, %p136
      %p139 = scmp.ne.s32.totalorder %s122, %s138
      %p140 = scmp.eq.s32.totalorder %s24, 0
      %p141 = por %p139, %p140
      %s142 = ssub.s32 %s26, %s33
      %p143 = scmp.eq.s32.totalorder %s142, 0
      %s145 = sadd.s32 %s144, 1
      %s146 = scalar_select %p143, %s144, %s145
      %p149 = pneg %p143
      %p150 = scmp.eq.s32.totalorder %s18, 1
      %p151 = por %p149, %p150
      %p152 = scmp.ne.s32.totalorder %s144, %s147
      %p153 = scmp.eq.s32.totalorder %s18, 0
      %p154 = por %p152, %p153
      %p155 = scmp.ne.s32.totalorder %s144, %s147
      %p156 = scmp.eq.s32.totalorder %s23, 1
      %p157 = por %p155, %p156
      %p158 = scmp.ne.s32.totalorder %s147, %s148
      %p159 = scmp.eq.s32.totalorder %s23, 0
      %p160 = por %p158, %p159
      %p161 = scmp.ne.s32.totalorder %s147, %s148
      %p162 = scmp.eq.s32.totalorder %s24, 1
      %p163 = por %p161, %p162
      %p165 = scmp.ne.s32.totalorder %s148, %s164
      %p166 = scmp.eq.s32.totalorder %s24, 0
      %p167 = por %p165, %p166
      %s169 = sadd.s32 %s168, 1
      %p172 = scmp.eq.s32.totalorder %s18, 1
      %p173 = scmp.ne.s32.totalorder %s168, %s170
      %p174 = scmp.eq.s32.totalorder %s18, 0
      %p175 = por %p173, %p174
      %p176 = scmp.ne.s32.totalorder %s168, %s170
      %p177 = scmp.eq.s32.totalorder %s23, 1
      %p178 = por %p176, %p177
      %p179 = scmp.ne.s32.totalorder %s170, %s171
      %p180 = scmp.eq.s32.totalorder %s23, 0
      %p181 = por %p179, %p180
      %p182 = scmp.ne.s32.totalorder %s170, %s171
      %p183 = scmp.eq.s32.totalorder %s24, 1
      %p184 = por %p182, %p183
      %p186 = scmp.ne.s32.totalorder %s171, %s185
      %p187 = scmp.eq.s32.totalorder %s24, 0
      %p188 = por %p186, %p187
      %s190 = sadd.s32 %s189, 1
      %p193 = scmp.eq.s32.totalorder %s18, 1
      %p194 = scmp.ne.s32.totalorder %s189, %s191
      %p195 = scmp.eq.s32.totalorder %s18, 0
      %p196 = por %p194, %p195
      %p197 = scmp.ne.s32.totalorder %s189, %s191
      %p198 = scmp.eq.s32.totalorder %s23, 1
      %p199 = por %p197, %p198
      %p200 = scmp.ne.s32.totalorder %s191, %s192
      %p201 = scmp.eq.s32.totalorder %s23, 0
      %p202 = por %p200, %p201
      %p203 = scmp.ne.s32.totalorder %s191, %s192
      %p204 = scmp.eq.s32.totalorder %s24, 1
      %p205 = por %p203, %p204
      %p207 = scmp.ne.s32.totalorder %s192, %s206
      %p208 = scmp.eq.s32.totalorder %s24, 0
      %p209 = por %p207, %p208
      %s210 = ssub.s32 %s26, %s33
      %p211 = scmp.eq.s32.totalorder %s210, 0
      %s213 = sadd.s32 %s212, 1
      %s214 = scalar_select %p211, %s212, %s213
      %p217 = pneg %p211
      %p218 = scmp.eq.s32.totalorder %s18, 1
      %p219 = por %p217, %p218
      %p220 = scmp.ne.s32.totalorder %s212, %s215
      %p221 = scmp.eq.s32.totalorder %s18, 0
      %p222 = por %p220, %p221
      %p223 = scmp.ne.s32.totalorder %s212, %s215
      %p224 = scmp.eq.s32.totalorder %s23, 1
      %p225 = por %p223, %p224
      %p226 = scmp.ne.s32.totalorder %s215, %s216
      %p227 = scmp.eq.s32.totalorder %s23, 0
      %p228 = por %p226, %p227
      %p229 = scmp.ne.s32.totalorder %s215, %s216
      %p230 = scmp.eq.s32.totalorder %s24, 1
      %p231 = por %p229, %p230
      %p233 = scmp.ne.s32.totalorder %s216, %s232
      %p234 = scmp.eq.s32.totalorder %s24, 0
      %p235 = por %p233, %p234
      %s236 = ssub.s32 %s26, %s33
      %p237 = scmp.eq.s32.totalorder %s236, 0
      %s239 = sadd.s32 %s238, 1
      %s240 = scalar_select %p237, %s238, %s239
      %p243 = pneg %p237
      %p244 = scmp.eq.s32.totalorder %s18, 1
      %p245 = por %p243, %p244
      %p246 = scmp.ne.s32.totalorder %s238, %s241
      %p247 = scmp.eq.s32.totalorder %s18, 0
      %p248 = por %p246, %p247
      %p249 = scmp.ne.s32.totalorder %s238, %s241
      %p250 = scmp.eq.s32.totalorder %s23, 1
      %p251 = por %p249, %p250
      %p252 = scmp.ne.s32.totalorder %s241, %s242
      %p253 = scmp.eq.s32.totalorder %s23, 0
      %p254 = por %p252, %p253
      %p255 = scmp.ne.s32.totalorder %s241, %s242
      %p256 = scmp.eq.s32.totalorder %s24, 1
      %p257 = por %p255, %p256
      %p259 = scmp.ne.s32.totalorder %s242, %s258
      %p260 = scmp.eq.s32.totalorder %s24, 0
      %p261 = por %p259, %p260
      %s262 = ssub.s32 %s25, %s37
      %s263 = ssub.s32 %s26, %s33
      %s264 = sor.u32 %s262, %s263
      %p265 = scmp.eq.s32.totalorder %s264, 0
      %s267 = sadd.s32 %s266, 1
      %s268 = scalar_select %p265, %s266, %s267
      %p271 = pneg %p265
      %p272 = scmp.eq.s32.totalorder %s18, 1
      %p273 = por %p271, %p272
      %p274 = scmp.ne.s32.totalorder %s266, %s269
      %p275 = scmp.eq.s32.totalorder %s18, 0
      %p276 = por %p274, %p275
      %p277 = scmp.ne.s32.totalorder %s266, %s269
      %p278 = scmp.eq.s32.totalorder %s23, 1
      %p279 = por %p277, %p278
      %p280 = scmp.ne.s32.totalorder %s269, %s270
      %p281 = scmp.eq.s32.totalorder %s23, 0
      %p282 = por %p280, %p281
      %p283 = scmp.ne.s32.totalorder %s269, %s270
      %p284 = scmp.eq.s32.totalorder %s24, 1
      %p285 = por %p283, %p284
      %p287 = scmp.ne.s32.totalorder %s270, %s286
      %p288 = scmp.eq.s32.totalorder %s24, 0
      %p289 = por %p287, %p288
      %p290 = scmp.le.s32.totalorder 1, %s18
      %p291 = scmp.lt.s32.totalorder %s18, 3
      %p292 = pnand %p290, %p291
      %p293 = pneg %p292
      // Predicated region
      $region9: #{tpu_custom_call.1} parent=5 // pred_check
        _
      $region10: #{tpu_custom_call.1} parent=5 // pred_check_branch
        %295 = sbr.rel (%p292) target = $region12
      $region11: #{tpu_custom_call.1} parent=5 // pred_region
        %s296 = ssub.s32 %s18, 1
        // Predicated region
        $region13: #{tpu_custom_call.1} parent=11 // pred_check
          %p297 = pneg %p160
        $region14: #{tpu_custom_call.1} parent=11 // pred_check_branch
          %299 = sbr.rel (%p297) target = $region16
        $region15: #{tpu_custom_call.1} parent=11 // pred_region
          %p300 = scmp.lt.s32.totalorder %s28, 0
          %s301 = scalar_select %p300, %s28, 0
          %s302 = smul.addr %s301, 8
          %s303 = scalar_lea.vmem %s4, %s302
        $region16: #{tpu_custom_call.1} parent=11 // pred_fallthru
          _
        // Predicated region
        $region17: #{tpu_custom_call.1} parent=11 // pred_check
          %p304 = pneg %p181
        $region18: #{tpu_custom_call.1} parent=11 // pred_check_branch
          %306 = sbr.rel (%p304) target = $region20
        $region19: #{tpu_custom_call.1} parent=11 // pred_region
          _
        $region20: #{tpu_custom_call.1} parent=11 // pred_fallthru
          _
        // Predicated region
        $region21: #{tpu_custom_call.1} parent=11 // pred_check
          %p307 = pneg %p202
        $region22: #{tpu_custom_call.1} parent=11 // pred_check_branch
          %309 = sbr.rel (%p307) target = $region24
        $region23: #{tpu_custom_call.1} parent=11 // pred_region
          _
        $region24: #{tpu_custom_call.1} parent=11 // pred_fallthru
          _
        // Predicated region
        $region25: #{tpu_custom_call.1} parent=11 // pred_check
          %p310 = pneg %p228
        $region26: #{tpu_custom_call.1} parent=11 // pred_check_branch
          %312 = sbr.rel (%p310) target = $region28
        $region27: #{tpu_custom_call.1} parent=11 // pred_region
          %p313 = scmp.lt.s32.totalorder %s28, 0
          %s314 = scalar_select %p313, %s28, 0
          %s315 = scalar_lea.vmem %s7, %s314
        $region28: #{tpu_custom_call.1} parent=11 // pred_fallthru
          _
        // Predicated region
        $region29: #{tpu_custom_call.1} parent=11 // pred_check
          %p316 = pneg %p254
        $region30: #{tpu_custom_call.1} parent=11 // pred_check_branch
          %318 = sbr.rel (%p316) target = $region32
        $region31: #{tpu_custom_call.1} parent=11 // pred_region
          %p319 = scmp.lt.s32.totalorder %s28, 0
          %s320 = scalar_select %p319, %s28, 0
          %s321 = scalar_lea.vmem %s8, %s320
        $region32: #{tpu_custom_call.1} parent=11 // pred_fallthru
          _
      $region12: #{tpu_custom_call.1} parent=5 // pred_fallthru
        _
      %p322 = scmp.lt.s32.totalorder %s18, 2
      // Predicated region
      $region33: #{tpu_custom_call.1} parent=5 // pred_check
        %p323 = pneg %p322
      $region34: #{tpu_custom_call.1} parent=5 // pred_check_branch
        %325 = sbr.rel (%p323) target = $region36
      $region35: #{tpu_custom_call.1} parent=5 // pred_region
        // Predicated region
        $region37: #{tpu_custom_call.1} parent=35 // pred_check
          %p326 = pneg %p50
        $region38: #{tpu_custom_call.1} parent=35 // pred_check_branch
          %328 = sbr.rel (%p326) target = $region40
        $region39: #{tpu_custom_call.1} parent=35 // pred_region
          %p329 = scmp.lt.s32.totalorder %s25, 1
          %s330 = scalar_select %p329, %s25, 1
          %s331 = smul.addr %s330, 18
          %s332 = smul.addr %s331, 8
          %s333 = scalar_lea.vmem %s0, %s332
        $region40: #{tpu_custom_call.1} parent=35 // pred_fallthru
          _
        // Predicated region
        $region41: #{tpu_custom_call.1} parent=35 // pred_check
          %p334 = pneg %p76
        $region42: #{tpu_custom_call.1} parent=35 // pred_check_branch
          %336 = sbr.rel (%p334) target = $region44
        $region43: #{tpu_custom_call.1} parent=35 // pred_region
          %p337 = scmp.lt.s32.totalorder %s25, 1
          %s338 = scalar_select %p337, %s25, 1
          %s339 = smul.addr %s338, 18
          %s340 = smul.addr %s339, 8
          %s341 = scalar_lea.vmem %s1, %s340
        $region44: #{tpu_custom_call.1} parent=35 // pred_fallthru
          _
        // Predicated region
        $region45: #{tpu_custom_call.1} parent=35 // pred_check
          %p342 = pneg %p102
        $region46: #{tpu_custom_call.1} parent=35 // pred_check_branch
          %344 = sbr.rel (%p342) target = $region48
        $region47: #{tpu_custom_call.1} parent=35 // pred_region
          %p345 = scmp.lt.s32.totalorder %s25, 1
          %s346 = scalar_select %p345, %s25, 1
          %s347 = smul.addr %s346, 18
          %s348 = smul.addr %s347, 8
          %s349 = scalar_lea.vmem %s2, %s348
        $region48: #{tpu_custom_call.1} parent=35 // pred_fallthru
          _
        // Predicated region
        $region49: #{tpu_custom_call.1} parent=35 // pred_check
          %p350 = pneg %p128
        $region50: #{tpu_custom_call.1} parent=35 // pred_check_branch
          %352 = sbr.rel (%p350) target = $region52
        $region51: #{tpu_custom_call.1} parent=35 // pred_region
          %p353 = scmp.lt.s32.totalorder %s25, 1
          %s354 = scalar_select %p353, %s25, 1
          %s355 = smul.addr %s354, 18
          %s356 = smul.addr %s355, 8
          %s357 = scalar_lea.vmem %s3, %s356
        $region52: #{tpu_custom_call.1} parent=35 // pred_fallthru
          _
      $region36: #{tpu_custom_call.1} parent=5 // pred_fallthru
        _
      %p358 = scmp.le.s32.totalorder 1, %s18
      %p359 = scmp.lt.s32.totalorder %s18, 3
      %p360 = pnand %p358, %p359
      %p361 = pneg %p360
      // Predicated region
      $region53: #{tpu_custom_call.1} parent=5 // pred_check
        _
      $region54: #{tpu_custom_call.1} parent=5 // pred_check_branch
        %363 = sbr.rel (%p360) target = $region56
      $region55: #{tpu_custom_call.1} parent=5 // pred_region
        %s364 = ssub.s32 %s18, 1
        %p365 = scmp.lt.s32.totalorder %s27, 1
        %s366 = scalar_select %p365, %s27, 1
        %s367 = smul.addr %s366, 18
        %s368 = smul.addr %s367, 8
        %s369 = scalar_lea.vmem %s0, %s368
        %p370 = pneg %p56
        %p371 = pneg %p53
        %p372 = scmp.lt.s32.totalorder %s27, 1
        %s373 = scalar_select %p372, %s27, 1
        %s374 = smul.addr %s373, 18
        %s375 = smul.addr %s374, 8
        %s376 = scalar_lea.vmem %s1, %s375
        %p377 = pneg %p82
        %p378 = pneg %p79
        %p379 = scmp.lt.s32.totalorder %s27, 1
        %s380 = scalar_select %p379, %s27, 1
        %s381 = smul.addr %s380, 18
        %s382 = smul.addr %s381, 8
        %s383 = scalar_lea.vmem %s2, %s382
        %p384 = pneg %p108
        %p385 = pneg %p105
        %p386 = scmp.lt.s32.totalorder %s27, 1
        %s387 = scalar_select %p386, %s27, 1
        %s388 = smul.addr %s387, 18
        %s389 = smul.addr %s388, 8
        %s390 = scalar_lea.vmem %s3, %s389
        %p391 = pneg %p134
        %p392 = pneg %p131
        %p393 = scmp.lt.s32.totalorder %s28, 0
        %s394 = scalar_select %p393, %s28, 0
        %s395 = smul.addr %s394, 8
        %s396 = scalar_lea.vmem %s4, %s395
        %p397 = pneg %p160
        %p398 = pneg %p157
        %p399 = pneg %p181
        %p400 = pneg %p178
        %p401 = pneg %p202
        %p402 = pneg %p199
        %p403 = scmp.lt.s32.totalorder %s28, 0
        %s404 = scalar_select %p403, %s28, 0
        %s405 = scalar_lea.vmem %s7, %s404
        %p406 = pneg %p228
        %p407 = pneg %p225
        %p408 = scmp.lt.s32.totalorder %s28, 0
        %s409 = scalar_select %p408, %s28, 0
        %s410 = scalar_lea.vmem %s8, %s409
        %p411 = pneg %p254
        %p412 = pneg %p251
        %p413 = pneg %p282
        %p414 = pneg %p279
        %s415 = sand.u32 %s269, 1
        %s416 = scalar_lea.sflag [#allocation3], %s415
        %s417 = sand.u32 %s269, 1
        %s418 = smul.addr %s417, 64
        %s419 = scalar_lea.vmem [#allocation2], %s418
        %p420 = scmp.lt.s32.totalorder %s27, 1
        %s421 = scalar_select %p420, %s27, 1
        %s422 = smul.addr %s421, 18
        %s423 = smul.addr %s422, 8
        %s424 = scalar_lea.vmem %s0, %s423
        %p425 = scmp.lt.s32.totalorder %s27, 1
        %s426 = scalar_select %p425, %s27, 1
        %s427 = smul.addr %s426, 18
        %s428 = smul.addr %s427, 8
        %s429 = scalar_lea.vmem %s1, %s428
        %p430 = scmp.lt.s32.totalorder %s27, 1
        %s431 = scalar_select %p430, %s27, 1
        %s432 = smul.addr %s431, 18
        %s433 = smul.addr %s432, 8
        %s434 = scalar_lea.vmem %s2, %s433
        %p435 = scmp.lt.s32.totalorder %s27, 1
        %s436 = scalar_select %p435, %s27, 1
        %s437 = smul.addr %s436, 18
        %s438 = smul.addr %s437, 8
        %s439 = scalar_lea.vmem %s3, %s438
        %p440 = scmp.lt.s32.totalorder %s28, 0
        %s441 = scalar_select %p440, %s28, 0
        %s442 = smul.addr %s441, 8
        %s443 = scalar_lea.vmem %s4, %s442
        %p444 = scmp.lt.s32.totalorder %s28, 0
        %s445 = scalar_select %p444, %s28, 0
        %s446 = scalar_lea.vmem %s7, %s445
        %p447 = scmp.lt.s32.totalorder %s28, 0
        %s448 = scalar_select %p447, %s28, 0
        %s449 = scalar_lea.vmem %s8, %s448
        %s450 = smul.u32 8, %s27
        %v451 = vlaneseq
        %v452 = vshrl.u32 %v451, 7
        %v453 = vld [vmem:[%s424] sm:$0xff]
        %v454 = vld [vmem:[%s424 + $0x10] sm:$0xff]
        %v455 = vld [vmem:[%s424 + $0x20] sm:$0xff]
        %v456 = vld [vmem:[%s424 + $0x30] sm:$0xff]
        %v457 = vld [vmem:[%s424 + $0x40] sm:$0xff]
        %v458 = vld [vmem:[%s424 + $0x50] sm:$0xff]
        %v459 = vld [vmem:[%s424 + $0x60] sm:$0xff]
        %v460 = vld [vmem:[%s424 + $0x70] sm:$0xff]
        %v461 = vld [vmem:[%s5] sm:$0x1]
        %v463 = vlaneseq
        %v464 = vshrl.u32 %v463, 7
        %v465 = vsub.s32 0, %v464
        %v466 = vrot.slane %v461, %v465
        %v468 = vmul.f32 %v453, %v466
        %v469 = vmul.f32 %v454, %v466
        %v470 = vmul.f32 %v455, %v466
        %v471 = vmul.f32 %v456, %v466
        %v472 = vmul.f32 %v457, %v466
        %v473 = vmul.f32 %v458, %v466
        %v474 = vmul.f32 %v459, %v466
        %v475 = vmul.f32 %v460, %v466
        %v476 = vld [vmem:[%s6] sm:$0x1]
        %v478 = vlaneseq
        %v479 = vshrl.u32 %v478, 7
        %v480 = vsub.s32 0, %v479
        %v481 = vrot.slane %v476, %v480
        %v483 = vadd.f32 %v468, %v481
        %v484 = vadd.f32 %v469, %v481
        %v485 = vadd.f32 %v470, %v481
        %v486 = vadd.f32 %v471, %v481
        %v487 = vadd.f32 %v472, %v481
        %v488 = vadd.f32 %v473, %v481
        %v489 = vadd.f32 %v474, %v481
        %v490 = vadd.f32 %v475, %v481
        %v491 = vmax.f32 %v483, 0.0
        %v492 = vmax.f32 %v484, 0.0
        %v493 = vmax.f32 %v485, 0.0
        %v494 = vmax.f32 %v486, 0.0
        %v495 = vmax.f32 %v487, 0.0
        %v496 = vmax.f32 %v488, 0.0
        %v497 = vmax.f32 %v489, 0.0
        %v498 = vmax.f32 %v490, 0.0
        %v499 = vmul.u32 %v452, 2
        %vm500 = vcmp.ge.s32.totalorder %v499, 1
        %vm501 = vmand 0, %vm500
        %vm502 = vmand 1, %vm500
        %vm503 = vcmp.le.s32.totalorder %v499, 16
        %vm504 = vmand %vm501, %vm503
        %vm505 = vmand %vm502, %vm503
        %v506 = vsel %vm504, %v491, 0.0
        %v507 = vsel %vm505, %v492, 0.0
        %v508 = vsel %vm505, %v493, 0.0
        %v509 = vsel %vm505, %v494, 0.0
        %v510 = vsel %vm505, %v495, 0.0
        %v511 = vsel %vm505, %v496, 0.0
        %v512 = vsel %vm505, %v497, 0.0
        %v513 = vsel %vm505, %v498, 0.0
        %v514 = vld [vmem:[%s443] sm:$0xff]
        %v515 = vld [vmem:[%s443 + $0x8] sm:$0xff]
        %v516 = vld [vmem:[%s443 + $0x10] sm:$0xff]
        %v517 = vld [vmem:[%s443 + $0x18] sm:$0xff]
        %v518 = vld [vmem:[%s443 + $0x20] sm:$0xff]
        %v519 = vld [vmem:[%s443 + $0x28] sm:$0xff]
        %v520 = vld [vmem:[%s443 + $0x30] sm:$0xff]
        %v521 = vld [vmem:[%s443 + $0x38] sm:$0xff]
        %v522 = vld [vmem:[%s443 + $0x40] sm:$0xff]
        %v523 = vld [vmem:[%s443 + $0x48] sm:$0xff]
        %v524 = vld [vmem:[%s443 + $0x50] sm:$0xff]
        %v525 = vld [vmem:[%s443 + $0x58] sm:$0xff]
        %v526 = vld [vmem:[%s443 + $0x60] sm:$0xff]
        %v527 = vld [vmem:[%s443 + $0x68] sm:$0xff]
        %v528 = vld [vmem:[%s443 + $0x70] sm:$0xff]
        %v529 = vld [vmem:[%s443 + $0x78] sm:$0xff]
        %v530 = vld [vmem:[%s429] sm:$0xff]
        %v531 = vld [vmem:[%s429 + $0x10] sm:$0xff]
        %v532 = vld [vmem:[%s429 + $0x20] sm:$0xff]
        %v533 = vld [vmem:[%s429 + $0x30] sm:$0xff]
        %v534 = vld [vmem:[%s429 + $0x40] sm:$0xff]
        %v535 = vld [vmem:[%s429 + $0x50] sm:$0xff]
        %v536 = vld [vmem:[%s429 + $0x60] sm:$0xff]
        %v537 = vld [vmem:[%s429 + $0x70] sm:$0xff]
        %v538 = vmul.f32 %v530, %v466
        %v539 = vmul.f32 %v531, %v466
        %v540 = vmul.f32 %v532, %v466
        %v541 = vmul.f32 %v533, %v466
        %v542 = vmul.f32 %v534, %v466
        %v543 = vmul.f32 %v535, %v466
        %v544 = vmul.f32 %v536, %v466
        %v545 = vmul.f32 %v537, %v466
        %v546 = vadd.f32 %v538, %v481
        %v547 = vadd.f32 %v539, %v481
        %v548 = vadd.f32 %v540, %v481
        %v549 = vadd.f32 %v541, %v481
        %v550 = vadd.f32 %v542, %v481
        %v551 = vadd.f32 %v543, %v481
        %v552 = vadd.f32 %v544, %v481
        %v553 = vadd.f32 %v545, %v481
        %v554 = vmax.f32 %v546, 0.0
        %v555 = vmax.f32 %v547, 0.0
        %v556 = vmax.f32 %v548, 0.0
        %v557 = vmax.f32 %v549, 0.0
        %v558 = vmax.f32 %v550, 0.0
        %v559 = vmax.f32 %v551, 0.0
        %v560 = vmax.f32 %v552, 0.0
        %v561 = vmax.f32 %v553, 0.0
        %v562 = vadd.s32 %v499, 1
        %vm563 = vcmp.ge.s32.totalorder %v562, 1
        %vm564 = vmand 0, %vm563
        %vm565 = vmand 1, %vm563
        %vm566 = vcmp.le.s32.totalorder %v562, 16
        %vm567 = vmand %vm564, %vm566
        %vm568 = vmand %vm565, %vm566
        %v569 = vsel %vm567, %v554, 0.0
        %v570 = vsel %vm568, %v555, 0.0
        %v571 = vsel %vm568, %v556, 0.0
        %v572 = vsel %vm568, %v557, 0.0
        %v573 = vsel %vm568, %v558, 0.0
        %v574 = vsel %vm568, %v559, 0.0
        %v575 = vsel %vm568, %v560, 0.0
        %v576 = vsel %vm568, %v561, 0.0
        %s577 = scalar_lea.vmem %s443, 128
        %v578 = vld [vmem:[%s577] sm:$0xff]
        %v579 = vld [vmem:[%s577 + $0x8] sm:$0xff]
        %v580 = vld [vmem:[%s577 + $0x10] sm:$0xff]
        %v581 = vld [vmem:[%s577 + $0x18] sm:$0xff]
        %v582 = vld [vmem:[%s577 + $0x20] sm:$0xff]
        %v583 = vld [vmem:[%s577 + $0x28] sm:$0xff]
        %v584 = vld [vmem:[%s577 + $0x30] sm:$0xff]
        %v585 = vld [vmem:[%s577 + $0x38] sm:$0xff]
        %v586 = vld [vmem:[%s577 + $0x40] sm:$0xff]
        %v587 = vld [vmem:[%s577 + $0x48] sm:$0xff]
        %v588 = vld [vmem:[%s577 + $0x50] sm:$0xff]
        %v589 = vld [vmem:[%s577 + $0x58] sm:$0xff]
        %v590 = vld [vmem:[%s577 + $0x60] sm:$0xff]
        %v591 = vld [vmem:[%s577 + $0x68] sm:$0xff]
        %v592 = vld [vmem:[%s577 + $0x70] sm:$0xff]
        %v593 = vld [vmem:[%s577 + $0x78] sm:$0xff]
        %594 = vmatprep.subr.mxu0 0.0
        %595 = vmatpush1.msra.mxu0 %v593
        %596 = vmatprep.subr.mxu0 0.0
        %597 = vmatpush1.msra.mxu0 %v592
        %598 = vmatprep.subr.mxu0 0.0
        %599 = vmatpush1.msra.mxu0 %v591
        %600 = vmatprep.subr.mxu0 0.0
        %601 = vmatpush1.msra.mxu0 %v590
        %602 = vmatprep.subr.mxu0 0.0
        %603 = vmatpush1.msra.mxu0 %v589
        %604 = vmatprep.subr.mxu0 0.0
        %605 = vmatpush1.msra.mxu0 %v588
        %606 = vmatprep.subr.mxu0 0.0
        %607 = vmatpush1.msra.mxu0 %v587
        %608 = vmatprep.subr.mxu0 0.0
        %609 = vmatpush1.msra.mxu0 %v586
        %610 = vmatprep.subr.mxu0 0.0
        %611 = vmatpush1.msra.mxu0 %v585
        %612 = vmatprep.subr.mxu0 0.0
        %613 = vmatpush1.msra.mxu0 %v584
        %614 = vmatprep.subr.mxu0 0.0
        %615 = vmatpush1.msra.mxu0 %v583
        %616 = vmatprep.subr.mxu0 0.0
        %617 = vmatpush1.msra.mxu0 %v582
        %618 = vmatprep.subr.mxu0 0.0
        %619 = vmatpush1.msra.mxu0 %v581
        %620 = vmatprep.subr.mxu0 0.0
        %621 = vmatpush1.msra.mxu0 %v580
        %622 = vmatprep.subr.mxu0 0.0
        %623 = vmatpush1.msra.mxu0 %v579
        %624 = vmatprep.subr.mxu0 0.0
        %625 = vmatpush1.msra.mxu0 %v578
        %626 = vmatprep.subr.mxu0 0.0
        %627 = vmatpush2.msra.mxu0 0.0
        %628 = vmatprep.subr.mxu0 0.0
        %629 = vmatpush2.msra.mxu0 0.0
        %630 = vmatprep.subr.mxu0 0.0
        %631 = vmatpush2.msra.mxu0 0.0
        %632 = vmatprep.subr.mxu0 0.0
        %633 = vmatpush2.msra.mxu0 0.0
        %634 = vmatprep.subr.mxu0 0.0
        %635 = vmatpush2.msra.mxu0 0.0
        %636 = vmatprep.subr.mxu0 0.0
        %637 = vmatpush2.msra.mxu0 0.0
        %638 = vmatprep.subr.mxu0 0.0
        %639 = vmatpush2.msra.mxu0 0.0
        %640 = vmatprep.subr.mxu0 0.0
        %641 = vmatpush2.msra.mxu0 0.0
        %642 = vmatprep.subr.mxu0 0.0
        %643 = vmatpush2.msra.mxu0 0.0
        %644 = vmatprep.subr.mxu0 0.0
        %645 = vmatpush2.msra.mxu0 0.0
        %646 = vmatprep.subr.mxu0 0.0
        %647 = vmatpush2.msra.mxu0 0.0
        %648 = vmatprep.subr.mxu0 0.0
        %649 = vmatpush2.msra.mxu0 0.0
        %650 = vmatprep.subr.mxu0 0.0
        %651 = vmatpush2.msra.mxu0 0.0
        %652 = vmatprep.subr.mxu0 0.0
        %653 = vmatpush2.msra.mxu0 0.0
        %654 = vmatprep.subr.mxu0 0.0
        %655 = vmatpush2.msra.mxu0 0.0
        %656 = vmatprep.subr.mxu0 0.0
        %657 = vmatpush2.msra.mxu0 0.0
        %658 = vmatprep.mubr.f32.mxu0 0.0
        %659 = vmatmul.mubr.f32.gmra.mxu0 %v569
        %v660 = vpop.f32.mrf.mxu0
        %v661 = vadd.f32 0.0, %v660
        %v662 = vpop.f32.mrf.mxu0
        %663 = vmatprep.mubr.f32.mxu0 0.0
        %664 = vmatmul.mubr.f32.gmra.mxu0 %v570
        %v665 = vpop.f32.mrf.mxu0
        %v666 = vadd.f32 0.0, %v665
        %v667 = vpop.f32.mrf.mxu0
        %668 = vmatprep.mubr.f32.mxu0 0.0
        %669 = vmatmul.mubr.f32.gmra.mxu0 %v571
        %v670 = vpop.f32.mrf.mxu0
        %v671 = vadd.f32 0.0, %v670
        %v672 = vpop.f32.mrf.mxu0
        %673 = vmatprep.mubr.f32.mxu0 0.0
        %674 = vmatmul.mubr.f32.gmra.mxu0 %v572
        %v675 = vpop.f32.mrf.mxu0
        %v676 = vadd.f32 0.0, %v675
        %v677 = vpop.f32.mrf.mxu0
        %678 = vmatprep.mubr.f32.mxu0 0.0
        %679 = vmatmul.mubr.f32.gmra.mxu0 %v573
        %v680 = vpop.f32.mrf.mxu0
        %v681 = vadd.f32 0.0, %v680
        %v682 = vpop.f32.mrf.mxu0
        %683 = vmatprep.mubr.f32.mxu0 0.0
        %684 = vmatmul.mubr.f32.gmra.mxu0 %v574
        %v685 = vpop.f32.mrf.mxu0
        %v686 = vadd.f32 0.0, %v685
        %v687 = vpop.f32.mrf.mxu0
        %688 = vmatprep.mubr.f32.mxu0 0.0
        %689 = vmatmul.mubr.f32.gmra.mxu0 %v575
        %v690 = vpop.f32.mrf.mxu0
        %v691 = vadd.f32 0.0, %v690
        %v692 = vpop.f32.mrf.mxu0
        %693 = vmatprep.mubr.f32.mxu0 0.0
        %694 = vmatmul.mubr.f32.gmra.mxu0 %v576
        %v695 = vpop.f32.mrf.mxu0
        %v696 = vadd.f32 0.0, %v695
        %v697 = vpop.f32.mrf.mxu0
        %698 = vdwg.mxu0
        %699 = vmatprep.subr.mxu0 0.0
        %700 = vmatpush1.msra.mxu0 %v529
        %701 = vmatprep.subr.mxu0 0.0
        %702 = vmatpush1.msra.mxu0 %v528
        %703 = vmatprep.subr.mxu0 0.0
        %704 = vmatpush1.msra.mxu0 %v527
        %705 = vmatprep.subr.mxu0 0.0
        %706 = vmatpush1.msra.mxu0 %v526
        %707 = vmatprep.subr.mxu0 0.0
        %708 = vmatpush1.msra.mxu0 %v525
        %709 = vmatprep.subr.mxu0 0.0
        %710 = vmatpush1.msra.mxu0 %v524
        %711 = vmatprep.subr.mxu0 0.0
        %712 = vmatpush1.msra.mxu0 %v523
        %713 = vmatprep.subr.mxu0 0.0
        %714 = vmatpush1.msra.mxu0 %v522
        %715 = vmatprep.subr.mxu0 0.0
        %716 = vmatpush1.msra.mxu0 %v521
        %717 = vmatprep.subr.mxu0 0.0
        %718 = vmatpush1.msra.mxu0 %v520
        %719 = vmatprep.subr.mxu0 0.0
        %720 = vmatpush1.msra.mxu0 %v519
        %721 = vmatprep.subr.mxu0 0.0
        %722 = vmatpush1.msra.mxu0 %v518
        %723 = vmatprep.subr.mxu0 0.0
        %724 = vmatpush1.msra.mxu0 %v517
        %725 = vmatprep.subr.mxu0 0.0
        %726 = vmatpush1.msra.mxu0 %v516
        %727 = vmatprep.subr.mxu0 0.0
        %728 = vmatpush1.msra.mxu0 %v515
        %729 = vmatprep.subr.mxu0 0.0
        %730 = vmatpush1.msra.mxu0 %v514
        %731 = vmatprep.subr.mxu0 0.0
        %732 = vmatpush2.msra.mxu0 0.0
        %733 = vmatprep.subr.mxu0 0.0
        %734 = vmatpush2.msra.mxu0 0.0
        %735 = vmatprep.subr.mxu0 0.0
        %736 = vmatpush2.msra.mxu0 0.0
        %737 = vmatprep.subr.mxu0 0.0
        %738 = vmatpush2.msra.mxu0 0.0
        %739 = vmatprep.subr.mxu0 0.0
        %740 = vmatpush2.msra.mxu0 0.0
        %741 = vmatprep.subr.mxu0 0.0
        %742 = vmatpush2.msra.mxu0 0.0
        %743 = vmatprep.subr.mxu0 0.0
        %744 = vmatpush2.msra.mxu0 0.0
        %745 = vmatprep.subr.mxu0 0.0
        %746 = vmatpush2.msra.mxu0 0.0
        %747 = vmatprep.subr.mxu0 0.0
        %748 = vmatpush2.msra.mxu0 0.0
        %749 = vmatprep.subr.mxu0 0.0
        %750 = vmatpush2.msra.mxu0 0.0
        %751 = vmatprep.subr.mxu0 0.0
        %752 = vmatpush2.msra.mxu0 0.0
        %753 = vmatprep.subr.mxu0 0.0
        %754 = vmatpush2.msra.mxu0 0.0
        %755 = vmatprep.subr.mxu0 0.0
        %756 = vmatpush2.msra.mxu0 0.0
        %757 = vmatprep.subr.mxu0 0.0
        %758 = vmatpush2.msra.mxu0 0.0
        %759 = vmatprep.subr.mxu0 0.0
        %760 = vmatpush2.msra.mxu0 0.0
        %761 = vmatprep.subr.mxu0 0.0
        %762 = vmatpush2.msra.mxu0 0.0
        %763 = vmatprep.mubr.f32.mxu0 0.0
        %764 = vmatmul.mubr.f32.gmra.mxu0 %v506
        %v765 = vpop.f32.mrf.mxu0
        %v766 = vadd.f32 %v661, %v765
        %v767 = vpop.f32.mrf.mxu0
        %768 = vmatprep.mubr.f32.mxu0 0.0
        %769 = vmatmul.mubr.f32.gmra.mxu0 %v507
        %v770 = vpop.f32.mrf.mxu0
        %v771 = vadd.f32 %v666, %v770
        %v772 = vpop.f32.mrf.mxu0
        %773 = vmatprep.mubr.f32.mxu0 0.0
        %774 = vmatmul.mubr.f32.gmra.mxu0 %v508
        %v775 = vpop.f32.mrf.mxu0
        %v776 = vadd.f32 %v671, %v775
        %v777 = vpop.f32.mrf.mxu0
        %778 = vmatprep.mubr.f32.mxu0 0.0
        %779 = vmatmul.mubr.f32.gmra.mxu0 %v509
        %v780 = vpop.f32.mrf.mxu0
        %v781 = vadd.f32 %v676, %v780
        %v782 = vpop.f32.mrf.mxu0
        %783 = vmatprep.mubr.f32.mxu0 0.0
        %784 = vmatmul.mubr.f32.gmra.mxu0 %v510
        %v785 = vpop.f32.mrf.mxu0
        %v786 = vadd.f32 %v681, %v785
        %v787 = vpop.f32.mrf.mxu0
        %788 = vmatprep.mubr.f32.mxu0 0.0
        %789 = vmatmul.mubr.f32.gmra.mxu0 %v511
        %v790 = vpop.f32.mrf.mxu0
        %v791 = vadd.f32 %v686, %v790
        %v792 = vpop.f32.mrf.mxu0
        %793 = vmatprep.mubr.f32.mxu0 0.0
        %794 = vmatmul.mubr.f32.gmra.mxu0 %v512
        %v795 = vpop.f32.mrf.mxu0
        %v796 = vadd.f32 %v691, %v795
        %v797 = vpop.f32.mrf.mxu0
        %798 = vmatprep.mubr.f32.mxu0 0.0
        %799 = vmatmul.mubr.f32.gmra.mxu0 %v513
        %v800 = vpop.f32.mrf.mxu0
        %v801 = vadd.f32 %v696, %v800
        %v802 = vpop.f32.mrf.mxu0
        %803 = vdwg.mxu0
        %v804 = vld [vmem:[%s424 + $0x1] sm:$0xff]
        %v805 = vld [vmem:[%s424 + $0x11] sm:$0xff]
        %v806 = vld [vmem:[%s424 + $0x21] sm:$0xff]
        %v807 = vld [vmem:[%s424 + $0x31] sm:$0xff]
        %v808 = vld [vmem:[%s424 + $0x41] sm:$0xff]
        %v809 = vld [vmem:[%s424 + $0x51] sm:$0xff]
        %v810 = vld [vmem:[%s424 + $0x61] sm:$0xff]
        %v811 = vld [vmem:[%s424 + $0x71] sm:$0xff]
        %v812 = vmul.f32 %v804, %v466
        %v813 = vmul.f32 %v805, %v466
        %v814 = vmul.f32 %v806, %v466
        %v815 = vmul.f32 %v807, %v466
        %v816 = vmul.f32 %v808, %v466
        %v817 = vmul.f32 %v809, %v466
        %v818 = vmul.f32 %v810, %v466
        %v819 = vmul.f32 %v811, %v466
        %v820 = vadd.f32 %v812, %v481
        %v821 = vadd.f32 %v813, %v481
        %v822 = vadd.f32 %v814, %v481
        %v823 = vadd.f32 %v815, %v481
        %v824 = vadd.f32 %v816, %v481
        %v825 = vadd.f32 %v817, %v481
        %v826 = vadd.f32 %v818, %v481
        %v827 = vadd.f32 %v819, %v481
        %v828 = vmax.f32 %v820, 0.0
        %v829 = vmax.f32 %v821, 0.0
        %v830 = vmax.f32 %v822, 0.0
        %v831 = vmax.f32 %v823, 0.0
        %v832 = vmax.f32 %v824, 0.0
        %v833 = vmax.f32 %v825, 0.0
        %v834 = vmax.f32 %v826, 0.0
        %v835 = vmax.f32 %v827, 0.0
        %v836 = vadd.s32 %v499, 2
        %vm837 = vcmp.ge.s32.totalorder %v836, 1
        %vm838 = vmand 0, %vm837
        %vm839 = vmand 1, %vm837
        %vm840 = vcmp.le.s32.totalorder %v836, 16
        %vm841 = vmand %vm838, %vm840
        %vm842 = vmand %vm839, %vm840
        %v843 = vsel %vm841, %v828, 0.0
        %v844 = vsel %vm842, %v829, 0.0
        %v845 = vsel %vm842, %v830, 0.0
        %v846 = vsel %vm842, %v831, 0.0
        %v847 = vsel %vm842, %v832, 0.0
        %v848 = vsel %vm842, %v833, 0.0
        %v849 = vsel %vm842, %v834, 0.0
        %v850 = vsel %vm842, %v835, 0.0
        %s851 = scalar_lea.vmem %s443, 256
        %v852 = vld [vmem:[%s851] sm:$0xff]
        %v853 = vld [vmem:[%s851 + $0x8] sm:$0xff]
        %v854 = vld [vmem:[%s851 + $0x10] sm:$0xff]
        %v855 = vld [vmem:[%s851 + $0x18] sm:$0xff]
        %v856 = vld [vmem:[%s851 + $0x20] sm:$0xff]
        %v857 = vld [vmem:[%s851 + $0x28] sm:$0xff]
        %v858 = vld [vmem:[%s851 + $0x30] sm:$0xff]
        %v859 = vld [vmem:[%s851 + $0x38] sm:$0xff]
        %v860 = vld [vmem:[%s851 + $0x40] sm:$0xff]
        %v861 = vld [vmem:[%s851 + $0x48] sm:$0xff]
        %v862 = vld [vmem:[%s851 + $0x50] sm:$0xff]
        %v863 = vld [vmem:[%s851 + $0x58] sm:$0xff]
        %v864 = vld [vmem:[%s851 + $0x60] sm:$0xff]
        %v865 = vld [vmem:[%s851 + $0x68] sm:$0xff]
        %v866 = vld [vmem:[%s851 + $0x70] sm:$0xff]
        %v867 = vld [vmem:[%s851 + $0x78] sm:$0xff]
        %868 = vmatprep.subr.mxu0 0.0
        %869 = vmatpush1.msra.mxu0 %v867
        %870 = vmatprep.subr.mxu0 0.0
        %871 = vmatpush1.msra.mxu0 %v866
        %872 = vmatprep.subr.mxu0 0.0
        %873 = vmatpush1.msra.mxu0 %v865
        %874 = vmatprep.subr.mxu0 0.0
        %875 = vmatpush1.msra.mxu0 %v864
        %876 = vmatprep.subr.mxu0 0.0
        %877 = vmatpush1.msra.mxu0 %v863
        %878 = vmatprep.subr.mxu0 0.0
        %879 = vmatpush1.msra.mxu0 %v862
        %880 = vmatprep.subr.mxu0 0.0
        %881 = vmatpush1.msra.mxu0 %v861
        %882 = vmatprep.subr.mxu0 0.0
        %883 = vmatpush1.msra.mxu0 %v860
        %884 = vmatprep.subr.mxu0 0.0
        %885 = vmatpush1.msra.mxu0 %v859
        %886 = vmatprep.subr.mxu0 0.0
        %887 = vmatpush1.msra.mxu0 %v858
        %888 = vmatprep.subr.mxu0 0.0
        %889 = vmatpush1.msra.mxu0 %v857
        %890 = vmatprep.subr.mxu0 0.0
        %891 = vmatpush1.msra.mxu0 %v856
        %892 = vmatprep.subr.mxu0 0.0
        %893 = vmatpush1.msra.mxu0 %v855
        %894 = vmatprep.subr.mxu0 0.0
        %895 = vmatpush1.msra.mxu0 %v854
        %896 = vmatprep.subr.mxu0 0.0
        %897 = vmatpush1.msra.mxu0 %v853
        %898 = vmatprep.subr.mxu0 0.0
        %899 = vmatpush1.msra.mxu0 %v852
        %900 = vmatprep.subr.mxu0 0.0
        %901 = vmatpush2.msra.mxu0 0.0
        %902 = vmatprep.subr.mxu0 0.0
        %903 = vmatpush2.msra.mxu0 0.0
        %904 = vmatprep.subr.mxu0 0.0
        %905 = vmatpush2.msra.mxu0 0.0
        %906 = vmatprep.subr.mxu0 0.0
        %907 = vmatpush2.msra.mxu0 0.0
        %908 = vmatprep.subr.mxu0 0.0
        %909 = vmatpush2.msra.mxu0 0.0
        %910 = vmatprep.subr.mxu0 0.0
        %911 = vmatpush2.msra.mxu0 0.0
        %912 = vmatprep.subr.mxu0 0.0
        %913 = vmatpush2.msra.mxu0 0.0
        %914 = vmatprep.subr.mxu0 0.0
        %915 = vmatpush2.msra.mxu0 0.0
        %916 = vmatprep.subr.mxu0 0.0
        %917 = vmatpush2.msra.mxu0 0.0
        %918 = vmatprep.subr.mxu0 0.0
        %919 = vmatpush2.msra.mxu0 0.0
        %920 = vmatprep.subr.mxu0 0.0
        %921 = vmatpush2.msra.mxu0 0.0
        %922 = vmatprep.subr.mxu0 0.0
        %923 = vmatpush2.msra.mxu0 0.0
        %924 = vmatprep.subr.mxu0 0.0
        %925 = vmatpush2.msra.mxu0 0.0
        %926 = vmatprep.subr.mxu0 0.0
        %927 = vmatpush2.msra.mxu0 0.0
        %928 = vmatprep.subr.mxu0 0.0
        %929 = vmatpush2.msra.mxu0 0.0
        %930 = vmatprep.subr.mxu0 0.0
        %931 = vmatpush2.msra.mxu0 0.0
        %932 = vmatprep.mubr.f32.mxu0 0.0
        %933 = vmatmul.mubr.f32.gmra.mxu0 %v843
        %v934 = vpop.f32.mrf.mxu0
        %v935 = vadd.f32 0.0, %v934
        %v936 = vpop.f32.mrf.mxu0
        %937 = vmatprep.mubr.f32.mxu0 0.0
        %938 = vmatmul.mubr.f32.gmra.mxu0 %v844
        %v939 = vpop.f32.mrf.mxu0
        %v940 = vadd.f32 0.0, %v939
        %v941 = vpop.f32.mrf.mxu0
        %942 = vmatprep.mubr.f32.mxu0 0.0
        %943 = vmatmul.mubr.f32.gmra.mxu0 %v845
        %v944 = vpop.f32.mrf.mxu0
        %v945 = vadd.f32 0.0, %v944
        %v946 = vpop.f32.mrf.mxu0
        %947 = vmatprep.mubr.f32.mxu0 0.0
        %948 = vmatmul.mubr.f32.gmra.mxu0 %v846
        %v949 = vpop.f32.mrf.mxu0
        %v950 = vadd.f32 0.0, %v949
        %v951 = vpop.f32.mrf.mxu0
        %952 = vmatprep.mubr.f32.mxu0 0.0
        %953 = vmatmul.mubr.f32.gmra.mxu0 %v847
        %v954 = vpop.f32.mrf.mxu0
        %v955 = vadd.f32 0.0, %v954
        %v956 = vpop.f32.mrf.mxu0
        %957 = vmatprep.mubr.f32.mxu0 0.0
        %958 = vmatmul.mubr.f32.gmra.mxu0 %v848
        %v959 = vpop.f32.mrf.mxu0
        %v960 = vadd.f32 0.0, %v959
        %v961 = vpop.f32.mrf.mxu0
        %962 = vmatprep.mubr.f32.mxu0 0.0
        %963 = vmatmul.mubr.f32.gmra.mxu0 %v849
        %v964 = vpop.f32.mrf.mxu0
        %v965 = vadd.f32 0.0, %v964
        %v966 = vpop.f32.mrf.mxu0
        %967 = vmatprep.mubr.f32.mxu0 0.0
        %968 = vmatmul.mubr.f32.gmra.mxu0 %v850
        %v969 = vpop.f32.mrf.mxu0
        %v970 = vadd.f32 0.0, %v969
        %v971 = vpop.f32.mrf.mxu0
        %972 = vdwg.mxu0
        %v973 = vadd.f32 %v766, %v935
        %v974 = vadd.f32 %v771, %v940
        %v975 = vadd.f32 %v776, %v945
        %v976 = vadd.f32 %v781, %v950
        %v977 = vadd.f32 %v786, %v955
        %v978 = vadd.f32 %v791, %v960
        %v979 = vadd.f32 %v796, %v965
        %v980 = vadd.f32 %v801, %v970
        %v981 = vld [vmem:[%s434] sm:$0xff]
        %v982 = vld [vmem:[%s434 + $0x10] sm:$0xff]
        %v983 = vld [vmem:[%s434 + $0x20] sm:$0xff]
        %v984 = vld [vmem:[%s434 + $0x30] sm:$0xff]
        %v985 = vld [vmem:[%s434 + $0x40] sm:$0xff]
        %v986 = vld [vmem:[%s434 + $0x50] sm:$0xff]
        %v987 = vld [vmem:[%s434 + $0x60] sm:$0xff]
        %v988 = vld [vmem:[%s434 + $0x70] sm:$0xff]
        %v989 = vmul.f32 %v981, %v466
        %v990 = vmul.f32 %v982, %v466
        %v991 = vmul.f32 %v983, %v466
        %v992 = vmul.f32 %v984, %v466
        %v993 = vmul.f32 %v985, %v466
        %v994 = vmul.f32 %v986, %v466
        %v995 = vmul.f32 %v987, %v466
        %v996 = vmul.f32 %v988, %v466
        %v997 = vadd.f32 %v989, %v481
        %v998 = vadd.f32 %v990, %v481
        %v999 = vadd.f32 %v991, %v481
        %v1000 = vadd.f32 %v992, %v481
        %v1001 = vadd.f32 %v993, %v481
        %v1002 = vadd.f32 %v994, %v481
        %v1003 = vadd.f32 %v995, %v481
        %v1004 = vadd.f32 %v996, %v481
        %v1005 = vmax.f32 %v997, 0.0
        %v1006 = vmax.f32 %v998, 0.0
        %v1007 = vmax.f32 %v999, 0.0
        %v1008 = vmax.f32 %v1000, 0.0
        %v1009 = vmax.f32 %v1001, 0.0
        %v1010 = vmax.f32 %v1002, 0.0
        %v1011 = vmax.f32 %v1003, 0.0
        %v1012 = vmax.f32 %v1004, 0.0
        %v1013 = vsel %vm505, %v1005, 0.0
        %v1014 = vsel %vm505, %v1006, 0.0
        %v1015 = vsel %vm505, %v1007, 0.0
        %v1016 = vsel %vm505, %v1008, 0.0
        %v1017 = vsel %vm505, %v1009, 0.0
        %v1018 = vsel %vm505, %v1010, 0.0
        %v1019 = vsel %vm505, %v1011, 0.0
        %v1020 = vsel %vm505, %v1012, 0.0
        %s1021 = scalar_lea.vmem %s443, 384
        %v1022 = vld [vmem:[%s1021] sm:$0xff]
        %v1023 = vld [vmem:[%s1021 + $0x8] sm:$0xff]
        %v1024 = vld [vmem:[%s1021 + $0x10] sm:$0xff]
        %v1025 = vld [vmem:[%s1021 + $0x18] sm:$0xff]
        %v1026 = vld [vmem:[%s1021 + $0x20] sm:$0xff]
        %v1027 = vld [vmem:[%s1021 + $0x28] sm:$0xff]
        %v1028 = vld [vmem:[%s1021 + $0x30] sm:$0xff]
        %v1029 = vld [vmem:[%s1021 + $0x38] sm:$0xff]
        %v1030 = vld [vmem:[%s1021 + $0x40] sm:$0xff]
        %v1031 = vld [vmem:[%s1021 + $0x48] sm:$0xff]
        %v1032 = vld [vmem:[%s1021 + $0x50] sm:$0xff]
        %v1033 = vld [vmem:[%s1021 + $0x58] sm:$0xff]
        %v1034 = vld [vmem:[%s1021 + $0x60] sm:$0xff]
        %v1035 = vld [vmem:[%s1021 + $0x68] sm:$0xff]
        %v1036 = vld [vmem:[%s1021 + $0x70] sm:$0xff]
        %v1037 = vld [vmem:[%s1021 + $0x78] sm:$0xff]
        %1038 = vmatprep.subr.mxu0 0.0
        %1039 = vmatpush1.msra.mxu0 %v1037
        %1040 = vmatprep.subr.mxu0 0.0
        %1041 = vmatpush1.msra.mxu0 %v1036
        %1042 = vmatprep.subr.mxu0 0.0
        %1043 = vmatpush1.msra.mxu0 %v1035
        %1044 = vmatprep.subr.mxu0 0.0
        %1045 = vmatpush1.msra.mxu0 %v1034
        %1046 = vmatprep.subr.mxu0 0.0
        %1047 = vmatpush1.msra.mxu0 %v1033
        %1048 = vmatprep.subr.mxu0 0.0
        %1049 = vmatpush1.msra.mxu0 %v1032
        %1050 = vmatprep.subr.mxu0 0.0
        %1051 = vmatpush1.msra.mxu0 %v1031
        %1052 = vmatprep.subr.mxu0 0.0
        %1053 = vmatpush1.msra.mxu0 %v1030
        %1054 = vmatprep.subr.mxu0 0.0
        %1055 = vmatpush1.msra.mxu0 %v1029
        %1056 = vmatprep.subr.mxu0 0.0
        %1057 = vmatpush1.msra.mxu0 %v1028
        %1058 = vmatprep.subr.mxu0 0.0
        %1059 = vmatpush1.msra.mxu0 %v1027
        %1060 = vmatprep.subr.mxu0 0.0
        %1061 = vmatpush1.msra.mxu0 %v1026
        %1062 = vmatprep.subr.mxu0 0.0
        %1063 = vmatpush1.msra.mxu0 %v1025
        %1064 = vmatprep.subr.mxu0 0.0
        %1065 = vmatpush1.msra.mxu0 %v1024
        %1066 = vmatprep.subr.mxu0 0.0
        %1067 = vmatpush1.msra.mxu0 %v1023
        %1068 = vmatprep.subr.mxu0 0.0
        %1069 = vmatpush1.msra.mxu0 %v1022
        %1070 = vmatprep.subr.mxu0 0.0
        %1071 = vmatpush2.msra.mxu0 0.0
        %1072 = vmatprep.subr.mxu0 0.0
        %1073 = vmatpush2.msra.mxu0 0.0
        %1074 = vmatprep.subr.mxu0 0.0
        %1075 = vmatpush2.msra.mxu0 0.0
        %1076 = vmatprep.subr.mxu0 0.0
        %1077 = vmatpush2.msra.mxu0 0.0
        %1078 = vmatprep.subr.mxu0 0.0
        %1079 = vmatpush2.msra.mxu0 0.0
        %1080 = vmatprep.subr.mxu0 0.0
        %1081 = vmatpush2.msra.mxu0 0.0
        %1082 = vmatprep.subr.mxu0 0.0
        %1083 = vmatpush2.msra.mxu0 0.0
        %1084 = vmatprep.subr.mxu0 0.0
        %1085 = vmatpush2.msra.mxu0 0.0
        %1086 = vmatprep.subr.mxu0 0.0
        %1087 = vmatpush2.msra.mxu0 0.0
        %1088 = vmatprep.subr.mxu0 0.0
        %1089 = vmatpush2.msra.mxu0 0.0
        %1090 = vmatprep.subr.mxu0 0.0
        %1091 = vmatpush2.msra.mxu0 0.0
        %1092 = vmatprep.subr.mxu0 0.0
        %1093 = vmatpush2.msra.mxu0 0.0
        %1094 = vmatprep.subr.mxu0 0.0
        %1095 = vmatpush2.msra.mxu0 0.0
        %1096 = vmatprep.subr.mxu0 0.0
        %1097 = vmatpush2.msra.mxu0 0.0
        %1098 = vmatprep.subr.mxu0 0.0
        %1099 = vmatpush2.msra.mxu0 0.0
        %1100 = vmatprep.subr.mxu0 0.0
        %1101 = vmatpush2.msra.mxu0 0.0
        %1102 = vmatprep.mubr.f32.mxu0 0.0
        %1103 = vmatmul.mubr.f32.gmra.mxu0 %v1013
        %v1104 = vpop.f32.mrf.mxu0
        %v1105 = vadd.f32 0.0, %v1104
        %v1106 = vpop.f32.mrf.mxu0
        %1107 = vmatprep.mubr.f32.mxu0 0.0
        %1108 = vmatmul.mubr.f32.gmra.mxu0 %v1014
        %v1109 = vpop.f32.mrf.mxu0
        %v1110 = vadd.f32 0.0, %v1109
        %v1111 = vpop.f32.mrf.mxu0
        %1112 = vmatprep.mubr.f32.mxu0 0.0
        %1113 = vmatmul.mubr.f32.gmra.mxu0 %v1015
        %v1114 = vpop.f32.mrf.mxu0
        %v1115 = vadd.f32 0.0, %v1114
        %v1116 = vpop.f32.mrf.mxu0
        %1117 = vmatprep.mubr.f32.mxu0 0.0
        %1118 = vmatmul.mubr.f32.gmra.mxu0 %v1016
        %v1119 = vpop.f32.mrf.mxu0
        %v1120 = vadd.f32 0.0, %v1119
        %v1121 = vpop.f32.mrf.mxu0
        %1122 = vmatprep.mubr.f32.mxu0 0.0
        %1123 = vmatmul.mubr.f32.gmra.mxu0 %v1017
        %v1124 = vpop.f32.mrf.mxu0
        %v1125 = vadd.f32 0.0, %v1124
        %v1126 = vpop.f32.mrf.mxu0
        %1127 = vmatprep.mubr.f32.mxu0 0.0
        %1128 = vmatmul.mubr.f32.gmra.mxu0 %v1018
        %v1129 = vpop.f32.mrf.mxu0
        %v1130 = vadd.f32 0.0, %v1129
        %v1131 = vpop.f32.mrf.mxu0
        %1132 = vmatprep.mubr.f32.mxu0 0.0
        %1133 = vmatmul.mubr.f32.gmra.mxu0 %v1019
        %v1134 = vpop.f32.mrf.mxu0
        %v1135 = vadd.f32 0.0, %v1134
        %v1136 = vpop.f32.mrf.mxu0
        %1137 = vmatprep.mubr.f32.mxu0 0.0
        %1138 = vmatmul.mubr.f32.gmra.mxu0 %v1020
        %v1139 = vpop.f32.mrf.mxu0
        %v1140 = vadd.f32 0.0, %v1139
        %v1141 = vpop.f32.mrf.mxu0
        %1142 = vdwg.mxu0
        %v1143 = vadd.f32 %v973, %v1105
        %v1144 = vadd.f32 %v974, %v1110
        %v1145 = vadd.f32 %v975, %v1115
        %v1146 = vadd.f32 %v976, %v1120
        %v1147 = vadd.f32 %v977, %v1125
        %v1148 = vadd.f32 %v978, %v1130
        %v1149 = vadd.f32 %v979, %v1135
        %v1150 = vadd.f32 %v980, %v1140
        %v1151 = vld [vmem:[%s439] sm:$0xff]
        %v1152 = vld [vmem:[%s439 + $0x10] sm:$0xff]
        %v1153 = vld [vmem:[%s439 + $0x20] sm:$0xff]
        %v1154 = vld [vmem:[%s439 + $0x30] sm:$0xff]
        %v1155 = vld [vmem:[%s439 + $0x40] sm:$0xff]
        %v1156 = vld [vmem:[%s439 + $0x50] sm:$0xff]
        %v1157 = vld [vmem:[%s439 + $0x60] sm:$0xff]
        %v1158 = vld [vmem:[%s439 + $0x70] sm:$0xff]
        %v1159 = vmul.f32 %v1151, %v466
        %v1160 = vmul.f32 %v1152, %v466
        %v1161 = vmul.f32 %v1153, %v466
        %v1162 = vmul.f32 %v1154, %v466
        %v1163 = vmul.f32 %v1155, %v466
        %v1164 = vmul.f32 %v1156, %v466
        %v1165 = vmul.f32 %v1157, %v466
        %v1166 = vmul.f32 %v1158, %v466
        %v1167 = vadd.f32 %v1159, %v481
        %v1168 = vadd.f32 %v1160, %v481
        %v1169 = vadd.f32 %v1161, %v481
        %v1170 = vadd.f32 %v1162, %v481
        %v1171 = vadd.f32 %v1163, %v481
        %v1172 = vadd.f32 %v1164, %v481
        %v1173 = vadd.f32 %v1165, %v481
        %v1174 = vadd.f32 %v1166, %v481
        %v1175 = vmax.f32 %v1167, 0.0
        %v1176 = vmax.f32 %v1168, 0.0
        %v1177 = vmax.f32 %v1169, 0.0
        %v1178 = vmax.f32 %v1170, 0.0
        %v1179 = vmax.f32 %v1171, 0.0
        %v1180 = vmax.f32 %v1172, 0.0
        %v1181 = vmax.f32 %v1173, 0.0
        %v1182 = vmax.f32 %v1174, 0.0
        %v1183 = vsel %vm568, %v1175, 0.0
        %v1184 = vsel %vm568, %v1176, 0.0
        %v1185 = vsel %vm568, %v1177, 0.0
        %v1186 = vsel %vm568, %v1178, 0.0
        %v1187 = vsel %vm568, %v1179, 0.0
        %v1188 = vsel %vm568, %v1180, 0.0
        %v1189 = vsel %vm568, %v1181, 0.0
        %v1190 = vsel %vm568, %v1182, 0.0
        %s1191 = scalar_lea.vmem %s443, 512
        %v1192 = vld [vmem:[%s1191] sm:$0xff]
        %v1193 = vld [vmem:[%s1191 + $0x8] sm:$0xff]
        %v1194 = vld [vmem:[%s1191 + $0x10] sm:$0xff]
        %v1195 = vld [vmem:[%s1191 + $0x18] sm:$0xff]
        %v1196 = vld [vmem:[%s1191 + $0x20] sm:$0xff]
        %v1197 = vld [vmem:[%s1191 + $0x28] sm:$0xff]
        %v1198 = vld [vmem:[%s1191 + $0x30] sm:$0xff]
        %v1199 = vld [vmem:[%s1191 + $0x38] sm:$0xff]
        %v1200 = vld [vmem:[%s1191 + $0x40] sm:$0xff]
        %v1201 = vld [vmem:[%s1191 + $0x48] sm:$0xff]
        %v1202 = vld [vmem:[%s1191 + $0x50] sm:$0xff]
        %v1203 = vld [vmem:[%s1191 + $0x58] sm:$0xff]
        %v1204 = vld [vmem:[%s1191 + $0x60] sm:$0xff]
        %v1205 = vld [vmem:[%s1191 + $0x68] sm:$0xff]
        %v1206 = vld [vmem:[%s1191 + $0x70] sm:$0xff]
        %v1207 = vld [vmem:[%s1191 + $0x78] sm:$0xff]
        %1208 = vmatprep.subr.mxu0 0.0
        %1209 = vmatpush1.msra.mxu0 %v1207
        %1210 = vmatprep.subr.mxu0 0.0
        %1211 = vmatpush1.msra.mxu0 %v1206
        %1212 = vmatprep.subr.mxu0 0.0
        %1213 = vmatpush1.msra.mxu0 %v1205
        %1214 = vmatprep.subr.mxu0 0.0
        %1215 = vmatpush1.msra.mxu0 %v1204
        %1216 = vmatprep.subr.mxu0 0.0
        %1217 = vmatpush1.msra.mxu0 %v1203
        %1218 = vmatprep.subr.mxu0 0.0
        %1219 = vmatpush1.msra.mxu0 %v1202
        %1220 = vmatprep.subr.mxu0 0.0
        %1221 = vmatpush1.msra.mxu0 %v1201
        %1222 = vmatprep.subr.mxu0 0.0
        %1223 = vmatpush1.msra.mxu0 %v1200
        %1224 = vmatprep.subr.mxu0 0.0
        %1225 = vmatpush1.msra.mxu0 %v1199
        %1226 = vmatprep.subr.mxu0 0.0
        %1227 = vmatpush1.msra.mxu0 %v1198
        %1228 = vmatprep.subr.mxu0 0.0
        %1229 = vmatpush1.msra.mxu0 %v1197
        %1230 = vmatprep.subr.mxu0 0.0
        %1231 = vmatpush1.msra.mxu0 %v1196
        %1232 = vmatprep.subr.mxu0 0.0
        %1233 = vmatpush1.msra.mxu0 %v1195
        %1234 = vmatprep.subr.mxu0 0.0
        %1235 = vmatpush1.msra.mxu0 %v1194
        %1236 = vmatprep.subr.mxu0 0.0
        %1237 = vmatpush1.msra.mxu0 %v1193
        %1238 = vmatprep.subr.mxu0 0.0
        %1239 = vmatpush1.msra.mxu0 %v1192
        %1240 = vmatprep.subr.mxu0 0.0
        %1241 = vmatpush2.msra.mxu0 0.0
        %1242 = vmatprep.subr.mxu0 0.0
        %1243 = vmatpush2.msra.mxu0 0.0
        %1244 = vmatprep.subr.mxu0 0.0
        %1245 = vmatpush2.msra.mxu0 0.0
        %1246 = vmatprep.subr.mxu0 0.0
        %1247 = vmatpush2.msra.mxu0 0.0
        %1248 = vmatprep.subr.mxu0 0.0
        %1249 = vmatpush2.msra.mxu0 0.0
        %1250 = vmatprep.subr.mxu0 0.0
        %1251 = vmatpush2.msra.mxu0 0.0
        %1252 = vmatprep.subr.mxu0 0.0
        %1253 = vmatpush2.msra.mxu0 0.0
        %1254 = vmatprep.subr.mxu0 0.0
        %1255 = vmatpush2.msra.mxu0 0.0
        %1256 = vmatprep.subr.mxu0 0.0
        %1257 = vmatpush2.msra.mxu0 0.0
        %1258 = vmatprep.subr.mxu0 0.0
        %1259 = vmatpush2.msra.mxu0 0.0
        %1260 = vmatprep.subr.mxu0 0.0
        %1261 = vmatpush2.msra.mxu0 0.0
        %1262 = vmatprep.subr.mxu0 0.0
        %1263 = vmatpush2.msra.mxu0 0.0
        %1264 = vmatprep.subr.mxu0 0.0
        %1265 = vmatpush2.msra.mxu0 0.0
        %1266 = vmatprep.subr.mxu0 0.0
        %1267 = vmatpush2.msra.mxu0 0.0
        %1268 = vmatprep.subr.mxu0 0.0
        %1269 = vmatpush2.msra.mxu0 0.0
        %1270 = vmatprep.subr.mxu0 0.0
        %1271 = vmatpush2.msra.mxu0 0.0
        %1272 = vmatprep.mubr.f32.mxu0 0.0
        %1273 = vmatmul.mubr.f32.gmra.mxu0 %v1183
        %v1274 = vpop.f32.mrf.mxu0
        %v1275 = vadd.f32 0.0, %v1274
        %v1276 = vpop.f32.mrf.mxu0
        %1277 = vmatprep.mubr.f32.mxu0 0.0
        %1278 = vmatmul.mubr.f32.gmra.mxu0 %v1184
        %v1279 = vpop.f32.mrf.mxu0
        %v1280 = vadd.f32 0.0, %v1279
        %v1281 = vpop.f32.mrf.mxu0
        %1282 = vmatprep.mubr.f32.mxu0 0.0
        %1283 = vmatmul.mubr.f32.gmra.mxu0 %v1185
        %v1284 = vpop.f32.mrf.mxu0
        %v1285 = vadd.f32 0.0, %v1284
        %v1286 = vpop.f32.mrf.mxu0
        %1287 = vmatprep.mubr.f32.mxu0 0.0
        %1288 = vmatmul.mubr.f32.gmra.mxu0 %v1186
        %v1289 = vpop.f32.mrf.mxu0
        %v1290 = vadd.f32 0.0, %v1289
        %v1291 = vpop.f32.mrf.mxu0
        %1292 = vmatprep.mubr.f32.mxu0 0.0
        %1293 = vmatmul.mubr.f32.gmra.mxu0 %v1187
        %v1294 = vpop.f32.mrf.mxu0
        %v1295 = vadd.f32 0.0, %v1294
        %v1296 = vpop.f32.mrf.mxu0
        %1297 = vmatprep.mubr.f32.mxu0 0.0
        %1298 = vmatmul.mubr.f32.gmra.mxu0 %v1188
        %v1299 = vpop.f32.mrf.mxu0
        %v1300 = vadd.f32 0.0, %v1299
        %v1301 = vpop.f32.mrf.mxu0
        %1302 = vmatprep.mubr.f32.mxu0 0.0
        %1303 = vmatmul.mubr.f32.gmra.mxu0 %v1189
        %v1304 = vpop.f32.mrf.mxu0
        %v1305 = vadd.f32 0.0, %v1304
        %v1306 = vpop.f32.mrf.mxu0
        %1307 = vmatprep.mubr.f32.mxu0 0.0
        %1308 = vmatmul.mubr.f32.gmra.mxu0 %v1190
        %v1309 = vpop.f32.mrf.mxu0
        %v1310 = vadd.f32 0.0, %v1309
        %v1311 = vpop.f32.mrf.mxu0
        %1312 = vdwg.mxu0
        %v1313 = vadd.f32 %v1143, %v1275
        %v1314 = vadd.f32 %v1144, %v1280
        %v1315 = vadd.f32 %v1145, %v1285
        %v1316 = vadd.f32 %v1146, %v1290
        %v1317 = vadd.f32 %v1147, %v1295
        %v1318 = vadd.f32 %v1148, %v1300
        %v1319 = vadd.f32 %v1149, %v1305
        %v1320 = vadd.f32 %v1150, %v1310
        %v1321 = vld [vmem:[%s434 + $0x1] sm:$0xff]
        %v1322 = vld [vmem:[%s434 + $0x11] sm:$0xff]
        %v1323 = vld [vmem:[%s434 + $0x21] sm:$0xff]
        %v1324 = vld [vmem:[%s434 + $0x31] sm:$0xff]
        %v1325 = vld [vmem:[%s434 + $0x41] sm:$0xff]
        %v1326 = vld [vmem:[%s434 + $0x51] sm:$0xff]
        %v1327 = vld [vmem:[%s434 + $0x61] sm:$0xff]
        %v1328 = vld [vmem:[%s434 + $0x71] sm:$0xff]
        %v1329 = vmul.f32 %v1321, %v466
        %v1330 = vmul.f32 %v1322, %v466
        %v1331 = vmul.f32 %v1323, %v466
        %v1332 = vmul.f32 %v1324, %v466
        %v1333 = vmul.f32 %v1325, %v466
        %v1334 = vmul.f32 %v1326, %v466
        %v1335 = vmul.f32 %v1327, %v466
        %v1336 = vmul.f32 %v1328, %v466
        %v1337 = vadd.f32 %v1329, %v481
        %v1338 = vadd.f32 %v1330, %v481
        %v1339 = vadd.f32 %v1331, %v481
        %v1340 = vadd.f32 %v1332, %v481
        %v1341 = vadd.f32 %v1333, %v481
        %v1342 = vadd.f32 %v1334, %v481
        %v1343 = vadd.f32 %v1335, %v481
        %v1344 = vadd.f32 %v1336, %v481
        %v1345 = vmax.f32 %v1337, 0.0
        %v1346 = vmax.f32 %v1338, 0.0
        %v1347 = vmax.f32 %v1339, 0.0
        %v1348 = vmax.f32 %v1340, 0.0
        %v1349 = vmax.f32 %v1341, 0.0
        %v1350 = vmax.f32 %v1342, 0.0
        %v1351 = vmax.f32 %v1343, 0.0
        %v1352 = vmax.f32 %v1344, 0.0
        %v1353 = vsel %vm842, %v1345, 0.0
        %v1354 = vsel %vm842, %v1346, 0.0
        %v1355 = vsel %vm842, %v1347, 0.0
        %v1356 = vsel %vm842, %v1348, 0.0
        %v1357 = vsel %vm842, %v1349, 0.0
        %v1358 = vsel %vm842, %v1350, 0.0
        %v1359 = vsel %vm842, %v1351, 0.0
        %v1360 = vsel %vm842, %v1352, 0.0
        %s1361 = scalar_lea.vmem %s443, 640
        %v1362 = vld [vmem:[%s1361] sm:$0xff]
        %v1363 = vld [vmem:[%s1361 + $0x8] sm:$0xff]
        %v1364 = vld [vmem:[%s1361 + $0x10] sm:$0xff]
        %v1365 = vld [vmem:[%s1361 + $0x18] sm:$0xff]
        %v1366 = vld [vmem:[%s1361 + $0x20] sm:$0xff]
        %v1367 = vld [vmem:[%s1361 + $0x28] sm:$0xff]
        %v1368 = vld [vmem:[%s1361 + $0x30] sm:$0xff]
        %v1369 = vld [vmem:[%s1361 + $0x38] sm:$0xff]
        %v1370 = vld [vmem:[%s1361 + $0x40] sm:$0xff]
        %v1371 = vld [vmem:[%s1361 + $0x48] sm:$0xff]
        %v1372 = vld [vmem:[%s1361 + $0x50] sm:$0xff]
        %v1373 = vld [vmem:[%s1361 + $0x58] sm:$0xff]
        %v1374 = vld [vmem:[%s1361 + $0x60] sm:$0xff]
        %v1375 = vld [vmem:[%s1361 + $0x68] sm:$0xff]
        %v1376 = vld [vmem:[%s1361 + $0x70] sm:$0xff]
        %v1377 = vld [vmem:[%s1361 + $0x78] sm:$0xff]
        %1378 = vmatprep.subr.mxu0 0.0
        %1379 = vmatpush1.msra.mxu0 %v1377
        %1380 = vmatprep.subr.mxu0 0.0
        %1381 = vmatpush1.msra.mxu0 %v1376
        %1382 = vmatprep.subr.mxu0 0.0
        %1383 = vmatpush1.msra.mxu0 %v1375
        %1384 = vmatprep.subr.mxu0 0.0
        %1385 = vmatpush1.msra.mxu0 %v1374
        %1386 = vmatprep.subr.mxu0 0.0
        %1387 = vmatpush1.msra.mxu0 %v1373
        %1388 = vmatprep.subr.mxu0 0.0
        %1389 = vmatpush1.msra.mxu0 %v1372
        %1390 = vmatprep.subr.mxu0 0.0
        %1391 = vmatpush1.msra.mxu0 %v1371
        %1392 = vmatprep.subr.mxu0 0.0
        %1393 = vmatpush1.msra.mxu0 %v1370
        %1394 = vmatprep.subr.mxu0 0.0
        %1395 = vmatpush1.msra.mxu0 %v1369
        %1396 = vmatprep.subr.mxu0 0.0
        %1397 = vmatpush1.msra.mxu0 %v1368
        %1398 = vmatprep.subr.mxu0 0.0
        %1399 = vmatpush1.msra.mxu0 %v1367
        %1400 = vmatprep.subr.mxu0 0.0
        %1401 = vmatpush1.msra.mxu0 %v1366
        %1402 = vmatprep.subr.mxu0 0.0
        %1403 = vmatpush1.msra.mxu0 %v1365
        %1404 = vmatprep.subr.mxu0 0.0
        %1405 = vmatpush1.msra.mxu0 %v1364
        %1406 = vmatprep.subr.mxu0 0.0
        %1407 = vmatpush1.msra.mxu0 %v1363
        %1408 = vmatprep.subr.mxu0 0.0
        %1409 = vmatpush1.msra.mxu0 %v1362
        %1410 = vmatprep.subr.mxu0 0.0
        %1411 = vmatpush2.msra.mxu0 0.0
        %1412 = vmatprep.subr.mxu0 0.0
        %1413 = vmatpush2.msra.mxu0 0.0
        %1414 = vmatprep.subr.mxu0 0.0
        %1415 = vmatpush2.msra.mxu0 0.0
        %1416 = vmatprep.subr.mxu0 0.0
        %1417 = vmatpush2.msra.mxu0 0.0
        %1418 = vmatprep.subr.mxu0 0.0
        %1419 = vmatpush2.msra.mxu0 0.0
        %1420 = vmatprep.subr.mxu0 0.0
        %1421 = vmatpush2.msra.mxu0 0.0
        %1422 = vmatprep.subr.mxu0 0.0
        %1423 = vmatpush2.msra.mxu0 0.0
        %1424 = vmatprep.subr.mxu0 0.0
        %1425 = vmatpush2.msra.mxu0 0.0
        %1426 = vmatprep.subr.mxu0 0.0
        %1427 = vmatpush2.msra.mxu0 0.0
        %1428 = vmatprep.subr.mxu0 0.0
        %1429 = vmatpush2.msra.mxu0 0.0
        %1430 = vmatprep.subr.mxu0 0.0
        %1431 = vmatpush2.msra.mxu0 0.0
        %1432 = vmatprep.subr.mxu0 0.0
        %1433 = vmatpush2.msra.mxu0 0.0
        %1434 = vmatprep.subr.mxu0 0.0
        %1435 = vmatpush2.msra.mxu0 0.0
        %1436 = vmatprep.subr.mxu0 0.0
        %1437 = vmatpush2.msra.mxu0 0.0
        %1438 = vmatprep.subr.mxu0 0.0
        %1439 = vmatpush2.msra.mxu0 0.0
        %1440 = vmatprep.subr.mxu0 0.0
        %1441 = vmatpush2.msra.mxu0 0.0
        %1442 = vmatprep.mubr.f32.mxu0 0.0
        %1443 = vmatmul.mubr.f32.gmra.mxu0 %v1353
        %v1444 = vpop.f32.mrf.mxu0
        %v1445 = vadd.f32 0.0, %v1444
        %v1446 = vpop.f32.mrf.mxu0
        %1447 = vmatprep.mubr.f32.mxu0 0.0
        %1448 = vmatmul.mubr.f32.gmra.mxu0 %v1354
        %v1449 = vpop.f32.mrf.mxu0
        %v1450 = vadd.f32 0.0, %v1449
        %v1451 = vpop.f32.mrf.mxu0
        %1452 = vmatprep.mubr.f32.mxu0 0.0
        %1453 = vmatmul.mubr.f32.gmra.mxu0 %v1355
        %v1454 = vpop.f32.mrf.mxu0
        %v1455 = vadd.f32 0.0, %v1454
        %v1456 = vpop.f32.mrf.mxu0
        %1457 = vmatprep.mubr.f32.mxu0 0.0
        %1458 = vmatmul.mubr.f32.gmra.mxu0 %v1356
        %v1459 = vpop.f32.mrf.mxu0
        %v1460 = vadd.f32 0.0, %v1459
        %v1461 = vpop.f32.mrf.mxu0
        %1462 = vmatprep.mubr.f32.mxu0 0.0
        %1463 = vmatmul.mubr.f32.gmra.mxu0 %v1357
        %v1464 = vpop.f32.mrf.mxu0
        %v1465 = vadd.f32 0.0, %v1464
        %v1466 = vpop.f32.mrf.mxu0
        %1467 = vmatprep.mubr.f32.mxu0 0.0
        %1468 = vmatmul.mubr.f32.gmra.mxu0 %v1358
        %v1469 = vpop.f32.mrf.mxu0
        %v1470 = vadd.f32 0.0, %v1469
        %v1471 = vpop.f32.mrf.mxu0
        %1472 = vmatprep.mubr.f32.mxu0 0.0
        %1473 = vmatmul.mubr.f32.gmra.mxu0 %v1359
        %v1474 = vpop.f32.mrf.mxu0
        %v1475 = vadd.f32 0.0, %v1474
        %v1476 = vpop.f32.mrf.mxu0
        %1477 = vmatprep.mubr.f32.mxu0 0.0
        %1478 = vmatmul.mubr.f32.gmra.mxu0 %v1360
        %v1479 = vpop.f32.mrf.mxu0
        %v1480 = vadd.f32 0.0, %v1479
        %v1481 = vpop.f32.mrf.mxu0
        %1482 = vdwg.mxu0
        %v1483 = vadd.f32 %v1313, %v1445
        %v1484 = vadd.f32 %v1314, %v1450
        %v1485 = vadd.f32 %v1315, %v1455
        %v1486 = vadd.f32 %v1316, %v1460
        %v1487 = vadd.f32 %v1317, %v1465
        %v1488 = vadd.f32 %v1318, %v1470
        %v1489 = vadd.f32 %v1319, %v1475
        %v1490 = vadd.f32 %v1320, %v1480
        %s1491 = scalar_lea.vmem %s424, 16
        %v1492 = vld [vmem:[%s1491] sm:$0xff]
        %v1493 = vld [vmem:[%s1491 + $0x10] sm:$0xff]
        %v1494 = vld [vmem:[%s1491 + $0x20] sm:$0xff]
        %v1495 = vld [vmem:[%s1491 + $0x30] sm:$0xff]
        %v1496 = vld [vmem:[%s1491 + $0x40] sm:$0xff]
        %v1497 = vld [vmem:[%s1491 + $0x50] sm:$0xff]
        %v1498 = vld [vmem:[%s1491 + $0x60] sm:$0xff]
        %v1499 = vld [vmem:[%s1491 + $0x70] sm:$0xff]
        %v1500 = vmul.f32 %v1492, %v466
        %v1501 = vmul.f32 %v1493, %v466
        %v1502 = vmul.f32 %v1494, %v466
        %v1503 = vmul.f32 %v1495, %v466
        %v1504 = vmul.f32 %v1496, %v466
        %v1505 = vmul.f32 %v1497, %v466
        %v1506 = vmul.f32 %v1498, %v466
        %v1507 = vmul.f32 %v1499, %v466
        %v1508 = vadd.f32 %v1500, %v481
        %v1509 = vadd.f32 %v1501, %v481
        %v1510 = vadd.f32 %v1502, %v481
        %v1511 = vadd.f32 %v1503, %v481
        %v1512 = vadd.f32 %v1504, %v481
        %v1513 = vadd.f32 %v1505, %v481
        %v1514 = vadd.f32 %v1506, %v481
        %v1515 = vadd.f32 %v1507, %v481
        %v1516 = vmax.f32 %v1508, 0.0
        %v1517 = vmax.f32 %v1509, 0.0
        %v1518 = vmax.f32 %v1510, 0.0
        %v1519 = vmax.f32 %v1511, 0.0
        %v1520 = vmax.f32 %v1512, 0.0
        %v1521 = vmax.f32 %v1513, 0.0
        %v1522 = vmax.f32 %v1514, 0.0
        %v1523 = vmax.f32 %v1515, 0.0
        %v1524 = vsel %vm505, %v1516, 0.0
        %v1525 = vsel %vm505, %v1517, 0.0
        %v1526 = vsel %vm505, %v1518, 0.0
        %v1527 = vsel %vm505, %v1519, 0.0
        %v1528 = vsel %vm505, %v1520, 0.0
        %v1529 = vsel %vm505, %v1521, 0.0
        %v1530 = vsel %vm505, %v1522, 0.0
        %v1531 = vsel %vm505, %v1523, 0.0
        %s1532 = scalar_lea.vmem %s443, 768
        %v1533 = vld [vmem:[%s1532] sm:$0xff]
        %v1534 = vld [vmem:[%s1532 + $0x8] sm:$0xff]
        %v1535 = vld [vmem:[%s1532 + $0x10] sm:$0xff]
        %v1536 = vld [vmem:[%s1532 + $0x18] sm:$0xff]
        %v1537 = vld [vmem:[%s1532 + $0x20] sm:$0xff]
        %v1538 = vld [vmem:[%s1532 + $0x28] sm:$0xff]
        %v1539 = vld [vmem:[%s1532 + $0x30] sm:$0xff]
        %v1540 = vld [vmem:[%s1532 + $0x38] sm:$0xff]
        %v1541 = vld [vmem:[%s1532 + $0x40] sm:$0xff]
        %v1542 = vld [vmem:[%s1532 + $0x48] sm:$0xff]
        %v1543 = vld [vmem:[%s1532 + $0x50] sm:$0xff]
        %v1544 = vld [vmem:[%s1532 + $0x58] sm:$0xff]
        %v1545 = vld [vmem:[%s1532 + $0x60] sm:$0xff]
        %v1546 = vld [vmem:[%s1532 + $0x68] sm:$0xff]
        %v1547 = vld [vmem:[%s1532 + $0x70] sm:$0xff]
        %v1548 = vld [vmem:[%s1532 + $0x78] sm:$0xff]
        %1549 = vmatprep.subr.mxu0 0.0
        %1550 = vmatpush1.msra.mxu0 %v1548
        %1551 = vmatprep.subr.mxu0 0.0
        %1552 = vmatpush1.msra.mxu0 %v1547
        %1553 = vmatprep.subr.mxu0 0.0
        %1554 = vmatpush1.msra.mxu0 %v1546
        %1555 = vmatprep.subr.mxu0 0.0
        %1556 = vmatpush1.msra.mxu0 %v1545
        %1557 = vmatprep.subr.mxu0 0.0
        %1558 = vmatpush1.msra.mxu0 %v1544
        %1559 = vmatprep.subr.mxu0 0.0
        %1560 = vmatpush1.msra.mxu0 %v1543
        %1561 = vmatprep.subr.mxu0 0.0
        %1562 = vmatpush1.msra.mxu0 %v1542
        %1563 = vmatprep.subr.mxu0 0.0
        %1564 = vmatpush1.msra.mxu0 %v1541
        %1565 = vmatprep.subr.mxu0 0.0
        %1566 = vmatpush1.msra.mxu0 %v1540
        %1567 = vmatprep.subr.mxu0 0.0
        %1568 = vmatpush1.msra.mxu0 %v1539
        %1569 = vmatprep.subr.mxu0 0.0
        %1570 = vmatpush1.msra.mxu0 %v1538
        %1571 = vmatprep.subr.mxu0 0.0
        %1572 = vmatpush1.msra.mxu0 %v1537
        %1573 = vmatprep.subr.mxu0 0.0
        %1574 = vmatpush1.msra.mxu0 %v1536
        %1575 = vmatprep.subr.mxu0 0.0
        %1576 = vmatpush1.msra.mxu0 %v1535
        %1577 = vmatprep.subr.mxu0 0.0
        %1578 = vmatpush1.msra.mxu0 %v1534
        %1579 = vmatprep.subr.mxu0 0.0
        %1580 = vmatpush1.msra.mxu0 %v1533
        %1581 = vmatprep.subr.mxu0 0.0
        %1582 = vmatpush2.msra.mxu0 0.0
        %1583 = vmatprep.subr.mxu0 0.0
        %1584 = vmatpush2.msra.mxu0 0.0
        %1585 = vmatprep.subr.mxu0 0.0
        %1586 = vmatpush2.msra.mxu0 0.0
        %1587 = vmatprep.subr.mxu0 0.0
        %1588 = vmatpush2.msra.mxu0 0.0
        %1589 = vmatprep.subr.mxu0 0.0
        %1590 = vmatpush2.msra.mxu0 0.0
        %1591 = vmatprep.subr.mxu0 0.0
        %1592 = vmatpush2.msra.mxu0 0.0
        %1593 = vmatprep.subr.mxu0 0.0
        %1594 = vmatpush2.msra.mxu0 0.0
        %1595 = vmatprep.subr.mxu0 0.0
        %1596 = vmatpush2.msra.mxu0 0.0
        %1597 = vmatprep.subr.mxu0 0.0
        %1598 = vmatpush2.msra.mxu0 0.0
        %1599 = vmatprep.subr.mxu0 0.0
        %1600 = vmatpush2.msra.mxu0 0.0
        %1601 = vmatprep.subr.mxu0 0.0
        %1602 = vmatpush2.msra.mxu0 0.0
        %1603 = vmatprep.subr.mxu0 0.0
        %1604 = vmatpush2.msra.mxu0 0.0
        %1605 = vmatprep.subr.mxu0 0.0
        %1606 = vmatpush2.msra.mxu0 0.0
        %1607 = vmatprep.subr.mxu0 0.0
        %1608 = vmatpush2.msra.mxu0 0.0
        %1609 = vmatprep.subr.mxu0 0.0
        %1610 = vmatpush2.msra.mxu0 0.0
        %1611 = vmatprep.subr.mxu0 0.0
        %1612 = vmatpush2.msra.mxu0 0.0
        %1613 = vmatprep.mubr.f32.mxu0 0.0
        %1614 = vmatmul.mubr.f32.gmra.mxu0 %v1524
        %v1615 = vpop.f32.mrf.mxu0
        %v1616 = vadd.f32 0.0, %v1615
        %v1617 = vpop.f32.mrf.mxu0
        %1618 = vmatprep.mubr.f32.mxu0 0.0
        %1619 = vmatmul.mubr.f32.gmra.mxu0 %v1525
        %v1620 = vpop.f32.mrf.mxu0
        %v1621 = vadd.f32 0.0, %v1620
        %v1622 = vpop.f32.mrf.mxu0
        %1623 = vmatprep.mubr.f32.mxu0 0.0
        %1624 = vmatmul.mubr.f32.gmra.mxu0 %v1526
        %v1625 = vpop.f32.mrf.mxu0
        %v1626 = vadd.f32 0.0, %v1625
        %v1627 = vpop.f32.mrf.mxu0
        %1628 = vmatprep.mubr.f32.mxu0 0.0
        %1629 = vmatmul.mubr.f32.gmra.mxu0 %v1527
        %v1630 = vpop.f32.mrf.mxu0
        %v1631 = vadd.f32 0.0, %v1630
        %v1632 = vpop.f32.mrf.mxu0
        %1633 = vmatprep.mubr.f32.mxu0 0.0
        %1634 = vmatmul.mubr.f32.gmra.mxu0 %v1528
        %v1635 = vpop.f32.mrf.mxu0
        %v1636 = vadd.f32 0.0, %v1635
        %v1637 = vpop.f32.mrf.mxu0
        %1638 = vmatprep.mubr.f32.mxu0 0.0
        %1639 = vmatmul.mubr.f32.gmra.mxu0 %v1529
        %v1640 = vpop.f32.mrf.mxu0
        %v1641 = vadd.f32 0.0, %v1640
        %v1642 = vpop.f32.mrf.mxu0
        %1643 = vmatprep.mubr.f32.mxu0 0.0
        %1644 = vmatmul.mubr.f32.gmra.mxu0 %v1530
        %v1645 = vpop.f32.mrf.mxu0
        %v1646 = vadd.f32 0.0, %v1645
        %v1647 = vpop.f32.mrf.mxu0
        %1648 = vmatprep.mubr.f32.mxu0 0.0
        %1649 = vmatmul.mubr.f32.gmra.mxu0 %v1531
        %v1650 = vpop.f32.mrf.mxu0
        %v1651 = vadd.f32 0.0, %v1650
        %v1652 = vpop.f32.mrf.mxu0
        %1653 = vdwg.mxu0
        %v1654 = vadd.f32 %v1483, %v1616
        %v1655 = vadd.f32 %v1484, %v1621
        %v1656 = vadd.f32 %v1485, %v1626
        %v1657 = vadd.f32 %v1486, %v1631
        %v1658 = vadd.f32 %v1487, %v1636
        %v1659 = vadd.f32 %v1488, %v1641
        %v1660 = vadd.f32 %v1489, %v1646
        %v1661 = vadd.f32 %v1490, %v1651
        %s1662 = scalar_lea.vmem %s429, 16
        %v1663 = vld [vmem:[%s1662] sm:$0xff]
        %v1664 = vld [vmem:[%s1662 + $0x10] sm:$0xff]
        %v1665 = vld [vmem:[%s1662 + $0x20] sm:$0xff]
        %v1666 = vld [vmem:[%s1662 + $0x30] sm:$0xff]
        %v1667 = vld [vmem:[%s1662 + $0x40] sm:$0xff]
        %v1668 = vld [vmem:[%s1662 + $0x50] sm:$0xff]
        %v1669 = vld [vmem:[%s1662 + $0x60] sm:$0xff]
        %v1670 = vld [vmem:[%s1662 + $0x70] sm:$0xff]
        %v1671 = vmul.f32 %v1663, %v466
        %v1672 = vmul.f32 %v1664, %v466
        %v1673 = vmul.f32 %v1665, %v466
        %v1674 = vmul.f32 %v1666, %v466
        %v1675 = vmul.f32 %v1667, %v466
        %v1676 = vmul.f32 %v1668, %v466
        %v1677 = vmul.f32 %v1669, %v466
        %v1678 = vmul.f32 %v1670, %v466
        %v1679 = vadd.f32 %v1671, %v481
        %v1680 = vadd.f32 %v1672, %v481
        %v1681 = vadd.f32 %v1673, %v481
        %v1682 = vadd.f32 %v1674, %v481
        %v1683 = vadd.f32 %v1675, %v481
        %v1684 = vadd.f32 %v1676, %v481
        %v1685 = vadd.f32 %v1677, %v481
        %v1686 = vadd.f32 %v1678, %v481
        %v1687 = vmax.f32 %v1679, 0.0
        %v1688 = vmax.f32 %v1680, 0.0
        %v1689 = vmax.f32 %v1681, 0.0
        %v1690 = vmax.f32 %v1682, 0.0
        %v1691 = vmax.f32 %v1683, 0.0
        %v1692 = vmax.f32 %v1684, 0.0
        %v1693 = vmax.f32 %v1685, 0.0
        %v1694 = vmax.f32 %v1686, 0.0
        %v1695 = vsel %vm568, %v1687, 0.0
        %v1696 = vsel %vm568, %v1688, 0.0
        %v1697 = vsel %vm568, %v1689, 0.0
        %v1698 = vsel %vm568, %v1690, 0.0
        %v1699 = vsel %vm568, %v1691, 0.0
        %v1700 = vsel %vm568, %v1692, 0.0
        %v1701 = vsel %vm568, %v1693, 0.0
        %v1702 = vsel %vm568, %v1694, 0.0
        %s1703 = scalar_lea.vmem %s443, 896
        %v1704 = vld [vmem:[%s1703] sm:$0xff]
        %v1705 = vld [vmem:[%s1703 + $0x8] sm:$0xff]
        %v1706 = vld [vmem:[%s1703 + $0x10] sm:$0xff]
        %v1707 = vld [vmem:[%s1703 + $0x18] sm:$0xff]
        %v1708 = vld [vmem:[%s1703 + $0x20] sm:$0xff]
        %v1709 = vld [vmem:[%s1703 + $0x28] sm:$0xff]
        %v1710 = vld [vmem:[%s1703 + $0x30] sm:$0xff]
        %v1711 = vld [vmem:[%s1703 + $0x38] sm:$0xff]
        %v1712 = vld [vmem:[%s1703 + $0x40] sm:$0xff]
        %v1713 = vld [vmem:[%s1703 + $0x48] sm:$0xff]
        %v1714 = vld [vmem:[%s1703 + $0x50] sm:$0xff]
        %v1715 = vld [vmem:[%s1703 + $0x58] sm:$0xff]
        %v1716 = vld [vmem:[%s1703 + $0x60] sm:$0xff]
        %v1717 = vld [vmem:[%s1703 + $0x68] sm:$0xff]
        %v1718 = vld [vmem:[%s1703 + $0x70] sm:$0xff]
        %v1719 = vld [vmem:[%s1703 + $0x78] sm:$0xff]
        %1720 = vmatprep.subr.mxu0 0.0
        %1721 = vmatpush1.msra.mxu0 %v1719
        %1722 = vmatprep.subr.mxu0 0.0
        %1723 = vmatpush1.msra.mxu0 %v1718
        %1724 = vmatprep.subr.mxu0 0.0
        %1725 = vmatpush1.msra.mxu0 %v1717
        %1726 = vmatprep.subr.mxu0 0.0
        %1727 = vmatpush1.msra.mxu0 %v1716
        %1728 = vmatprep.subr.mxu0 0.0
        %1729 = vmatpush1.msra.mxu0 %v1715
        %1730 = vmatprep.subr.mxu0 0.0
        %1731 = vmatpush1.msra.mxu0 %v1714
        %1732 = vmatprep.subr.mxu0 0.0
        %1733 = vmatpush1.msra.mxu0 %v1713
        %1734 = vmatprep.subr.mxu0 0.0
        %1735 = vmatpush1.msra.mxu0 %v1712
        %1736 = vmatprep.subr.mxu0 0.0
        %1737 = vmatpush1.msra.mxu0 %v1711
        %1738 = vmatprep.subr.mxu0 0.0
        %1739 = vmatpush1.msra.mxu0 %v1710
        %1740 = vmatprep.subr.mxu0 0.0
        %1741 = vmatpush1.msra.mxu0 %v1709
        %1742 = vmatprep.subr.mxu0 0.0
        %1743 = vmatpush1.msra.mxu0 %v1708
        %1744 = vmatprep.subr.mxu0 0.0
        %1745 = vmatpush1.msra.mxu0 %v1707
        %1746 = vmatprep.subr.mxu0 0.0
        %1747 = vmatpush1.msra.mxu0 %v1706
        %1748 = vmatprep.subr.mxu0 0.0
        %1749 = vmatpush1.msra.mxu0 %v1705
        %1750 = vmatprep.subr.mxu0 0.0
        %1751 = vmatpush1.msra.mxu0 %v1704
        %1752 = vmatprep.subr.mxu0 0.0
        %1753 = vmatpush2.msra.mxu0 0.0
        %1754 = vmatprep.subr.mxu0 0.0
        %1755 = vmatpush2.msra.mxu0 0.0
        %1756 = vmatprep.subr.mxu0 0.0
        %1757 = vmatpush2.msra.mxu0 0.0
        %1758 = vmatprep.subr.mxu0 0.0
        %1759 = vmatpush2.msra.mxu0 0.0
        %1760 = vmatprep.subr.mxu0 0.0
        %1761 = vmatpush2.msra.mxu0 0.0
        %1762 = vmatprep.subr.mxu0 0.0
        %1763 = vmatpush2.msra.mxu0 0.0
        %1764 = vmatprep.subr.mxu0 0.0
        %1765 = vmatpush2.msra.mxu0 0.0
        %1766 = vmatprep.subr.mxu0 0.0
        %1767 = vmatpush2.msra.mxu0 0.0
        %1768 = vmatprep.subr.mxu0 0.0
        %1769 = vmatpush2.msra.mxu0 0.0
        %1770 = vmatprep.subr.mxu0 0.0
        %1771 = vmatpush2.msra.mxu0 0.0
        %1772 = vmatprep.subr.mxu0 0.0
        %1773 = vmatpush2.msra.mxu0 0.0
        %1774 = vmatprep.subr.mxu0 0.0
        %1775 = vmatpush2.msra.mxu0 0.0
        %1776 = vmatprep.subr.mxu0 0.0
        %1777 = vmatpush2.msra.mxu0 0.0
        %1778 = vmatprep.subr.mxu0 0.0
        %1779 = vmatpush2.msra.mxu0 0.0
        %1780 = vmatprep.subr.mxu0 0.0
        %1781 = vmatpush2.msra.mxu0 0.0
        %1782 = vmatprep.subr.mxu0 0.0
        %1783 = vmatpush2.msra.mxu0 0.0
        %1784 = vmatprep.mubr.f32.mxu0 0.0
        %1785 = vmatmul.mubr.f32.gmra.mxu0 %v1695
        %v1786 = vpop.f32.mrf.mxu0
        %v1787 = vadd.f32 0.0, %v1786
        %v1788 = vpop.f32.mrf.mxu0
        %1789 = vmatprep.mubr.f32.mxu0 0.0
        %1790 = vmatmul.mubr.f32.gmra.mxu0 %v1696
        %v1791 = vpop.f32.mrf.mxu0
        %v1792 = vadd.f32 0.0, %v1791
        %v1793 = vpop.f32.mrf.mxu0
        %1794 = vmatprep.mubr.f32.mxu0 0.0
        %1795 = vmatmul.mubr.f32.gmra.mxu0 %v1697
        %v1796 = vpop.f32.mrf.mxu0
        %v1797 = vadd.f32 0.0, %v1796
        %v1798 = vpop.f32.mrf.mxu0
        %1799 = vmatprep.mubr.f32.mxu0 0.0
        %1800 = vmatmul.mubr.f32.gmra.mxu0 %v1698
        %v1801 = vpop.f32.mrf.mxu0
        %v1802 = vadd.f32 0.0, %v1801
        %v1803 = vpop.f32.mrf.mxu0
        %1804 = vmatprep.mubr.f32.mxu0 0.0
        %1805 = vmatmul.mubr.f32.gmra.mxu0 %v1699
        %v1806 = vpop.f32.mrf.mxu0
        %v1807 = vadd.f32 0.0, %v1806
        %v1808 = vpop.f32.mrf.mxu0
        %1809 = vmatprep.mubr.f32.mxu0 0.0
        %1810 = vmatmul.mubr.f32.gmra.mxu0 %v1700
        %v1811 = vpop.f32.mrf.mxu0
        %v1812 = vadd.f32 0.0, %v1811
        %v1813 = vpop.f32.mrf.mxu0
        %1814 = vmatprep.mubr.f32.mxu0 0.0
        %1815 = vmatmul.mubr.f32.gmra.mxu0 %v1701
        %v1816 = vpop.f32.mrf.mxu0
        %v1817 = vadd.f32 0.0, %v1816
        %v1818 = vpop.f32.mrf.mxu0
        %1819 = vmatprep.mubr.f32.mxu0 0.0
        %1820 = vmatmul.mubr.f32.gmra.mxu0 %v1702
        %v1821 = vpop.f32.mrf.mxu0
        %v1822 = vadd.f32 0.0, %v1821
        %v1823 = vpop.f32.mrf.mxu0
        %1824 = vdwg.mxu0
        %v1825 = vadd.f32 %v1654, %v1787
        %v1826 = vadd.f32 %v1655, %v1792
        %v1827 = vadd.f32 %v1656, %v1797
        %v1828 = vadd.f32 %v1657, %v1802
        %v1829 = vadd.f32 %v1658, %v1807
        %v1830 = vadd.f32 %v1659, %v1812
        %v1831 = vadd.f32 %v1660, %v1817
        %v1832 = vadd.f32 %v1661, %v1822
        %v1833 = vld [vmem:[%s1491 + $0x1] sm:$0xff]
        %v1834 = vld [vmem:[%s1491 + $0x11] sm:$0xff]
        %v1835 = vld [vmem:[%s1491 + $0x21] sm:$0xff]
        %v1836 = vld [vmem:[%s1491 + $0x31] sm:$0xff]
        %v1837 = vld [vmem:[%s1491 + $0x41] sm:$0xff]
        %v1838 = vld [vmem:[%s1491 + $0x51] sm:$0xff]
        %v1839 = vld [vmem:[%s1491 + $0x61] sm:$0xff]
        %v1840 = vld [vmem:[%s1491 + $0x71] sm:$0xff]
        %v1841 = vmul.f32 %v1833, %v466
        %v1842 = vmul.f32 %v1834, %v466
        %v1843 = vmul.f32 %v1835, %v466
        %v1844 = vmul.f32 %v1836, %v466
        %v1845 = vmul.f32 %v1837, %v466
        %v1846 = vmul.f32 %v1838, %v466
        %v1847 = vmul.f32 %v1839, %v466
        %v1848 = vmul.f32 %v1840, %v466
        %v1849 = vadd.f32 %v1841, %v481
        %v1850 = vadd.f32 %v1842, %v481
        %v1851 = vadd.f32 %v1843, %v481
        %v1852 = vadd.f32 %v1844, %v481
        %v1853 = vadd.f32 %v1845, %v481
        %v1854 = vadd.f32 %v1846, %v481
        %v1855 = vadd.f32 %v1847, %v481
        %v1856 = vadd.f32 %v1848, %v481
        %v1857 = vmax.f32 %v1849, 0.0
        %v1858 = vmax.f32 %v1850, 0.0
        %v1859 = vmax.f32 %v1851, 0.0
        %v1860 = vmax.f32 %v1852, 0.0
        %v1861 = vmax.f32 %v1853, 0.0
        %v1862 = vmax.f32 %v1854, 0.0
        %v1863 = vmax.f32 %v1855, 0.0
        %v1864 = vmax.f32 %v1856, 0.0
        %v1865 = vsel %vm842, %v1857, 0.0
        %v1866 = vsel %vm842, %v1858, 0.0
        %v1867 = vsel %vm842, %v1859, 0.0
        %v1868 = vsel %vm842, %v1860, 0.0
        %v1869 = vsel %vm842, %v1861, 0.0
        %v1870 = vsel %vm842, %v1862, 0.0
        %v1871 = vsel %vm842, %v1863, 0.0
        %v1872 = vsel %vm842, %v1864, 0.0
        %s1873 = scalar_lea.vmem %s443, 1024
        %v1874 = vld [vmem:[%s1873] sm:$0xff]
        %v1875 = vld [vmem:[%s1873 + $0x8] sm:$0xff]
        %v1876 = vld [vmem:[%s1873 + $0x10] sm:$0xff]
        %v1877 = vld [vmem:[%s1873 + $0x18] sm:$0xff]
        %v1878 = vld [vmem:[%s1873 + $0x20] sm:$0xff]
        %v1879 = vld [vmem:[%s1873 + $0x28] sm:$0xff]
        %v1880 = vld [vmem:[%s1873 + $0x30] sm:$0xff]
        %v1881 = vld [vmem:[%s1873 + $0x38] sm:$0xff]
        %v1882 = vld [vmem:[%s1873 + $0x40] sm:$0xff]
        %v1883 = vld [vmem:[%s1873 + $0x48] sm:$0xff]
        %v1884 = vld [vmem:[%s1873 + $0x50] sm:$0xff]
        %v1885 = vld [vmem:[%s1873 + $0x58] sm:$0xff]
        %v1886 = vld [vmem:[%s1873 + $0x60] sm:$0xff]
        %v1887 = vld [vmem:[%s1873 + $0x68] sm:$0xff]
        %v1888 = vld [vmem:[%s1873 + $0x70] sm:$0xff]
        %v1889 = vld [vmem:[%s1873 + $0x78] sm:$0xff]
        %1890 = vmatprep.subr.mxu0 0.0
        %1891 = vmatpush1.msra.mxu0 %v1889
        %1892 = vmatprep.subr.mxu0 0.0
        %1893 = vmatpush1.msra.mxu0 %v1888
        %1894 = vmatprep.subr.mxu0 0.0
        %1895 = vmatpush1.msra.mxu0 %v1887
        %1896 = vmatprep.subr.mxu0 0.0
        %1897 = vmatpush1.msra.mxu0 %v1886
        %1898 = vmatprep.subr.mxu0 0.0
        %1899 = vmatpush1.msra.mxu0 %v1885
        %1900 = vmatprep.subr.mxu0 0.0
        %1901 = vmatpush1.msra.mxu0 %v1884
        %1902 = vmatprep.subr.mxu0 0.0
        %1903 = vmatpush1.msra.mxu0 %v1883
        %1904 = vmatprep.subr.mxu0 0.0
        %1905 = vmatpush1.msra.mxu0 %v1882
        %1906 = vmatprep.subr.mxu0 0.0
        %1907 = vmatpush1.msra.mxu0 %v1881
        %1908 = vmatprep.subr.mxu0 0.0
        %1909 = vmatpush1.msra.mxu0 %v1880
        %1910 = vmatprep.subr.mxu0 0.0
        %1911 = vmatpush1.msra.mxu0 %v1879
        %1912 = vmatprep.subr.mxu0 0.0
        %1913 = vmatpush1.msra.mxu0 %v1878
        %1914 = vmatprep.subr.mxu0 0.0
        %1915 = vmatpush1.msra.mxu0 %v1877
        %1916 = vmatprep.subr.mxu0 0.0
        %1917 = vmatpush1.msra.mxu0 %v1876
        %1918 = vmatprep.subr.mxu0 0.0
        %1919 = vmatpush1.msra.mxu0 %v1875
        %1920 = vmatprep.subr.mxu0 0.0
        %1921 = vmatpush1.msra.mxu0 %v1874
        %1922 = vmatprep.subr.mxu0 0.0
        %1923 = vmatpush2.msra.mxu0 0.0
        %1924 = vmatprep.subr.mxu0 0.0
        %1925 = vmatpush2.msra.mxu0 0.0
        %1926 = vmatprep.subr.mxu0 0.0
        %1927 = vmatpush2.msra.mxu0 0.0
        %1928 = vmatprep.subr.mxu0 0.0
        %1929 = vmatpush2.msra.mxu0 0.0
        %1930 = vmatprep.subr.mxu0 0.0
        %1931 = vmatpush2.msra.mxu0 0.0
        %1932 = vmatprep.subr.mxu0 0.0
        %1933 = vmatpush2.msra.mxu0 0.0
        %1934 = vmatprep.subr.mxu0 0.0
        %1935 = vmatpush2.msra.mxu0 0.0
        %1936 = vmatprep.subr.mxu0 0.0
        %1937 = vmatpush2.msra.mxu0 0.0
        %1938 = vmatprep.subr.mxu0 0.0
        %1939 = vmatpush2.msra.mxu0 0.0
        %1940 = vmatprep.subr.mxu0 0.0
        %1941 = vmatpush2.msra.mxu0 0.0
        %1942 = vmatprep.subr.mxu0 0.0
        %1943 = vmatpush2.msra.mxu0 0.0
        %1944 = vmatprep.subr.mxu0 0.0
        %1945 = vmatpush2.msra.mxu0 0.0
        %1946 = vmatprep.subr.mxu0 0.0
        %1947 = vmatpush2.msra.mxu0 0.0
        %1948 = vmatprep.subr.mxu0 0.0
        %1949 = vmatpush2.msra.mxu0 0.0
        %1950 = vmatprep.subr.mxu0 0.0
        %1951 = vmatpush2.msra.mxu0 0.0
        %1952 = vmatprep.subr.mxu0 0.0
        %1953 = vmatpush2.msra.mxu0 0.0
        %1954 = vmatprep.mubr.f32.mxu0 0.0
        %1955 = vmatmul.mubr.f32.gmra.mxu0 %v1865
        %v1956 = vpop.f32.mrf.mxu0
        %v1957 = vadd.f32 0.0, %v1956
        %v1958 = vpop.f32.mrf.mxu0
        %1959 = vmatprep.mubr.f32.mxu0 0.0
        %1960 = vmatmul.mubr.f32.gmra.mxu0 %v1866
        %v1961 = vpop.f32.mrf.mxu0
        %v1962 = vadd.f32 0.0, %v1961
        %v1963 = vpop.f32.mrf.mxu0
        %1964 = vmatprep.mubr.f32.mxu0 0.0
        %1965 = vmatmul.mubr.f32.gmra.mxu0 %v1867
        %v1966 = vpop.f32.mrf.mxu0
        %v1967 = vadd.f32 0.0, %v1966
        %v1968 = vpop.f32.mrf.mxu0
        %1969 = vmatprep.mubr.f32.mxu0 0.0
        %1970 = vmatmul.mubr.f32.gmra.mxu0 %v1868
        %v1971 = vpop.f32.mrf.mxu0
        %v1972 = vadd.f32 0.0, %v1971
        %v1973 = vpop.f32.mrf.mxu0
        %1974 = vmatprep.mubr.f32.mxu0 0.0
        %1975 = vmatmul.mubr.f32.gmra.mxu0 %v1869
        %v1976 = vpop.f32.mrf.mxu0
        %v1977 = vadd.f32 0.0, %v1976
        %v1978 = vpop.f32.mrf.mxu0
        %1979 = vmatprep.mubr.f32.mxu0 0.0
        %1980 = vmatmul.mubr.f32.gmra.mxu0 %v1870
        %v1981 = vpop.f32.mrf.mxu0
        %v1982 = vadd.f32 0.0, %v1981
        %v1983 = vpop.f32.mrf.mxu0
        %1984 = vmatprep.mubr.f32.mxu0 0.0
        %1985 = vmatmul.mubr.f32.gmra.mxu0 %v1871
        %v1986 = vpop.f32.mrf.mxu0
        %v1987 = vadd.f32 0.0, %v1986
        %v1988 = vpop.f32.mrf.mxu0
        %1989 = vmatprep.mubr.f32.mxu0 0.0
        %1990 = vmatmul.mubr.f32.gmra.mxu0 %v1872
        %v1991 = vpop.f32.mrf.mxu0
        %v1992 = vadd.f32 0.0, %v1991
        %v1993 = vpop.f32.mrf.mxu0
        %1994 = vdwg.mxu0
        %v1995 = vadd.f32 %v1825, %v1957
        %v1996 = vadd.f32 %v1826, %v1962
        %v1997 = vadd.f32 %v1827, %v1967
        %v1998 = vadd.f32 %v1828, %v1972
        %v1999 = vadd.f32 %v1829, %v1977
        %v2000 = vadd.f32 %v1830, %v1982
        %v2001 = vadd.f32 %v1831, %v1987
        %v2002 = vadd.f32 %v1832, %v1992
        %v2003 = vld [vmem:[%s446] sm:$0x1]
        %v2005 = vlaneseq
        %v2006 = vshrl.u32 %v2005, 7
        %v2007 = vsub.s32 0, %v2006
        %v2008 = vrot.slane %v2003, %v2007
        %v2010 = vmul.f32 %v1995, %v2008
        %v2011 = vmul.f32 %v1996, %v2008
        %v2012 = vmul.f32 %v1997, %v2008
        %v2013 = vmul.f32 %v1998, %v2008
        %v2014 = vmul.f32 %v1999, %v2008
        %v2015 = vmul.f32 %v2000, %v2008
        %v2016 = vmul.f32 %v2001, %v2008
        %v2017 = vmul.f32 %v2002, %v2008
        %v2018 = vld [vmem:[%s449] sm:$0x1]
        %v2020 = vlaneseq
        %v2021 = vshrl.u32 %v2020, 7
        %v2022 = vsub.s32 0, %v2021
        %v2023 = vrot.slane %v2018, %v2022
        %v2025 = vadd.f32 %v2010, %v2023
        %v2026 = vadd.f32 %v2011, %v2023
        %v2027 = vadd.f32 %v2012, %v2023
        %v2028 = vadd.f32 %v2013, %v2023
        %v2029 = vadd.f32 %v2014, %v2023
        %v2030 = vadd.f32 %v2015, %v2023
        %v2031 = vadd.f32 %v2016, %v2023
        %v2032 = vadd.f32 %v2017, %v2023
        %v2033 = vmax.f32 %v2025, 0.0
        %v2034 = vmax.f32 %v2026, 0.0
        %v2035 = vmax.f32 %v2027, 0.0
        %v2036 = vmax.f32 %v2028, 0.0
        %v2037 = vmax.f32 %v2029, 0.0
        %v2038 = vmax.f32 %v2030, 0.0
        %v2039 = vmax.f32 %v2031, 0.0
        %v2040 = vmax.f32 %v2032, 0.0
        %2041 = vst [vmem:[%s419] sm:$0xff] %v2033
        %2042 = vst [vmem:[%s419 + $0x8] sm:$0xff] %v2034
        %2043 = vst [vmem:[%s419 + $0x10] sm:$0xff] %v2035
        %2044 = vst [vmem:[%s419 + $0x18] sm:$0xff] %v2036
        %2045 = vst [vmem:[%s419 + $0x20] sm:$0xff] %v2037
        %2046 = vst [vmem:[%s419 + $0x28] sm:$0xff] %v2038
        %2047 = vst [vmem:[%s419 + $0x30] sm:$0xff] %v2039
        %2048 = vst [vmem:[%s419 + $0x38] sm:$0xff] %v2040
        %s2049 = sand.u32 %s269, 1
        %s2050 = scalar_lea.sflag [#allocation3], %s2049
        %s2051 = sand.u32 %s269, 1
        %s2052 = smul.addr %s2051, 64
        %s2053 = scalar_lea.vmem [#allocation2], %s2052
        // Predicated region
        $region57: #{tpu_custom_call.1} parent=55 // pred_check
          %p2054 = pneg %p279
        $region58: #{tpu_custom_call.1} parent=55 // pred_check_branch
          %2056 = sbr.rel (%p2054) target = $region60
        $region59: #{tpu_custom_call.1} parent=55 // pred_region
          %s2057 = smul.u32 8, %s27
          %s2059 = ssub.s32 1024, 1024
          %2060 = vsyncadd %s2050, %s2059
          %s2061 = sadd.s32 %s28, %s2057
          %s2062 = smul.addr %s2061, 128
          %s2063 = scalar_lea.hbm %s9, %s2062
          %s2064 = sshll.u32 %s2053, 4
          %s2065 = int_to_ptr.vmem [resolvable:$true] %s2064
          %2070 = dma.vmem_to_hbm [thread:$0]  %s2065, 1024, %s2063, %s2050, 128, 128, 8
        $region60: #{tpu_custom_call.1} parent=55 // pred_fallthru
          _
      $region56: #{tpu_custom_call.1} parent=5 // pred_fallthru
        _
      %p2071 = scmp.le.s32.totalorder 2, %s18
      // Predicated region
      $region61: #{tpu_custom_call.1} parent=5 // pred_check
        %p2072 = pneg %p2071
      $region62: #{tpu_custom_call.1} parent=5 // pred_check_branch
        %2074 = sbr.rel (%p2072) target = $region64
      $region63: #{tpu_custom_call.1} parent=5 // pred_region
        %s2075 = ssub.s32 %s18, 2
        // Predicated region
        $region65: #{tpu_custom_call.1} parent=63 // pred_check
          %p2076 = pneg %p285
        $region66: #{tpu_custom_call.1} parent=63 // pred_check_branch
          %2078 = sbr.rel (%p2076) target = $region68
        $region67: #{tpu_custom_call.1} parent=63 // pred_region
          %s2079 = sand.u32 %s270, 1
          %s2080 = scalar_lea.sflag [#allocation3], %s2079
          %s2081 = sand.u32 %s270, 1
          %s2082 = smul.addr %s2081, 64
          %s2083 = scalar_lea.vmem [#allocation2], %s2082
          %2084 = dma.done %s2080, 1024
        $region68: #{tpu_custom_call.1} parent=63 // pred_fallthru
          _
      $region64: #{tpu_custom_call.1} parent=5 // pred_fallthru
        _
    $region6: #{tpu_custom_call.1} parent=1 // loop_footer
      %s22 = sadd.s32 1, %s18
    $region7: #{tpu_custom_call.1} parent=1 // loop_footer_branch
      %17 = sbr.rel target = $region3
    $region8: #{tpu_custom_call.1} parent=1 // loop_exit
      _
    %2085 = vsyncpa [#allocation3], 1
    %s2086 = scalar_lea.sflag [#allocation3], 1
    %2087 = vsyncpa %s2086, 1

</llo_original>
